<compile_context>
chip_gen: v6e
topology: v6e:2x2x1
jax: 0.10.0
libtpu: 0.0.40
codegen_flags: <defaults>
</compile_context>

<pallas_src>
import functools

import jax
import jax.numpy as jnp
from jax.experimental import pallas as pl
from jax.experimental.pallas import tpu as pltpu


# ----------------------------------------------------------------------------
# Fused kernel: conv0 -> feature conv (+ReLU) -> global sum pool -> lin1 -> lin2
# One grid step per batch element; the feature map never leaves VMEM.
#
#   x_ref  : (1, H, W, Cin)  f32   input tile (NHWC, channels on lanes)
#   w0_ref : (9*Cin, C0P)    bf16  conv0 im2col weights (out-ch padded 3->C0P)
#   b0_ref : (1, C0P)        f32
#   wf_ref : (9*C0P, F)      bf16  backbone stand-in conv weights (im2col)
#   bf_ref : (1, F)          f32
#   w1_ref : (F, HDIM)       f32   LinearBlock1 (bias + BN folded)
#   b1_ref : (1, HDIM)       f32
#   w2_ref : (HDIM, OUTP)    f32   LinearBlock2 (bias + BN folded, cols padded)
#   b2_ref : (1, OUTP)       f32
#   o_ref  : (1, 1, OUTP)    f32   lane-dense (128-wide) output slab
# ----------------------------------------------------------------------------
def _fused_kernel(x_ref, w0_ref, b0_ref, wf_ref, bf_ref,
                  w1_ref, b1_ref, w2_ref, b2_ref, o_ref, *, H, W):

    def pad_hw(a):
        # zero SAME-padding built in VMEM (no wrapper-side jnp.pad HBM copy)
        h, w, c = a.shape
        zc = jnp.zeros((h, 1, c), a.dtype)
        a = jnp.concatenate([zc, a, zc], axis=1)              # (h, w+2, c)
        zr = jnp.zeros((1, w + 2, c), a.dtype)
        return jnp.concatenate([zr, a, zr], axis=0)           # (h+2, w+2, c)

    def im2col(ap, c):
        # (H+2, W+2, c) -> (H*W, 9*c) patch matrix: one MXU push per conv
        cols = [jax.lax.slice(ap, (dy, dx, 0), (dy + H, dx + W, c)).reshape(H * W, c)
                for dy in range(3) for dx in range(3)]
        return jnp.concatenate(cols, axis=-1)

    cin = x_ref.shape[-1]
    c0 = b0_ref.shape[-1]

    # --- conv0 (Cin -> 3, SAME, bias): single im2col matmul, bf16 MXU inputs
    x = x_ref[0]                                              # (H, W, Cin) f32
    p0 = im2col(pad_hw(x), cin).astype(jnp.bfloat16)          # (H*W, 9*Cin)
    h0 = jnp.dot(p0, w0_ref[...],
                 preferred_element_type=jnp.float32) + b0_ref[...]

    # --- backbone stand-in (base_model.features): 3x3 conv (3 -> F) + ReLU
    p1 = im2col(pad_hw(h0.reshape(H, W, c0)), c0).astype(jnp.bfloat16)
    h1 = jnp.dot(p1, wf_ref[...],
                 preferred_element_type=jnp.float32) + bf_ref[...]
    h1 = jnp.maximum(h1, 0.0)

    # --- global sum pooling: torch.sum(h, dim=(-1, -2)) -> (1, F)
    pooled = jnp.sum(h1, axis=0, keepdims=True)

    # --- LinearBlock 1 (Linear + BatchNorm1d folded) + leaky_relu (slope 0.01)
    z1 = jnp.dot(pooled, w1_ref[...],
                 preferred_element_type=jnp.float32) + b1_ref[...]
    z1 = jnp.where(z1 > 0, z1, 0.01 * z1)

    # --- LinearBlock 2 (Linear + BatchNorm1d folded), no activation
    z2 = jnp.dot(z1, w2_ref[...],
                 preferred_element_type=jnp.float32) + b2_ref[...]
    o_ref[...] = z2.reshape(1, 1, -1)


# ----------------------------------------------------------------------------
# Parameter preparation: im2col-reshape conv weights, pad channels for layout,
# fold bias + eval-mode BatchNorm1d into the linear weights, cast MXU weights
# of the big conv matmuls to bf16.
# ----------------------------------------------------------------------------
def _fold_bn(gamma, beta, mean, var, eps=1e-5):
    s = gamma * jax.lax.rsqrt(var + eps)
    return s, beta - mean * s


def prepare_params(raw, *, c0_pad=8, out_pad=128):
    cin = raw["w0"].shape[2]
    f_feat = raw["wf"].shape[3]
    hdim = raw["w1"].shape[1]
    out = raw["w2"].shape[1]

    # conv0: HWIO (3,3,Cin,3) -> im2col (9*Cin, 3); zero-pad out-channels to c0_pad
    w0m = jnp.pad(raw["w0"].reshape(9 * cin, 3), ((0, 0), (0, c0_pad - 3)))
    b0p = jnp.pad(raw["b0"], (0, c0_pad - 3)).reshape(1, c0_pad)

    # feature conv: zero-pad input-channel axis to c0_pad, then (9*c0_pad, F)
    wfp = jnp.pad(raw["wf"], ((0, 0), (0, 0), (0, c0_pad - 3), (0, 0)))
    wfm = wfp.reshape(9 * c0_pad, f_feat)
    bfp = raw["bf"].reshape(1, f_feat)

    # LinearBlock 1: fold bias + BN into weight/bias
    s1, t1 = _fold_bn(raw["g1"], raw["beta1"], raw["m1"], raw["v1"])
    w1m = raw["w1"] * s1[None, :]
    b1p = (raw["b1"] * s1 + t1).reshape(1, hdim)

    # LinearBlock 2: fold, then zero-pad OUT -> out_pad lanes (lane-dense store)
    s2, t2 = _fold_bn(raw["g2"], raw["beta2"], raw["m2"], raw["v2"])
    w2m = jnp.pad(raw["w2"] * s2[None, :], ((0, 0), (0, out_pad - out)))
    b2p = jnp.pad(raw["b2"] * s2 + t2, (0, out_pad - out)).reshape(1, out_pad)

    return dict(
        w0m=w0m.astype(jnp.bfloat16), b0p=b0p.astype(jnp.float32),
        wfm=wfm.astype(jnp.bfloat16), bfp=bfp.astype(jnp.float32),
        w1m=w1m.astype(jnp.float32), b1p=b1p.astype(jnp.float32),
        w2m=w2m.astype(jnp.float32), b2p=b2p.astype(jnp.float32),
    )


# ----------------------------------------------------------------------------
# Full forward (single pallas_call, grid over batch)
# ----------------------------------------------------------------------------
def pretrained_cnn_forward(x_nchw, kp, *, out_dim):
    B, CIN, H, W = x_nchw.shape
    x = jnp.transpose(x_nchw, (0, 2, 3, 1))                   # NCHW -> NHWC
    OUTP = kp["b2p"].shape[-1]

    weights = [kp[k] for k in ("w0m", "b0p", "wfm", "bfp",
                               "w1m", "b1p", "w2m", "b2p")]

    def full_spec(a):
        nd = a.ndim
        return pl.BlockSpec(a.shape, lambda b, _n=nd: (0,) * _n)

    out = pl.pallas_call(
        functools.partial(_fused_kernel, H=H, W=W),
        out_shape=jax.ShapeDtypeStruct((B, 1, OUTP), jnp.float32),
        grid=(B,),
        in_specs=[pl.BlockSpec((1, H, W, CIN), lambda b: (b, 0, 0, 0))]
                 + [full_spec(a) for a in weights],
        out_specs=pl.BlockSpec((1, 1, OUTP), lambda b: (b, 0, 0)),
        compiler_params=pltpu.CompilerParams(
            dimension_semantics=("parallel",),
            vmem_limit_bytes=32 * 1024 * 1024),
    )(x, *weights)
    return out[:, 0, :out_dim]                                 # trim padded lanes


# ----------------------------------------------------------------------------
# Pure-JAX fp32 reference of the same (synthetic-backbone) network
# ----------------------------------------------------------------------------
def ref_forward(x_nchw, raw):
    x = jnp.transpose(x_nchw, (0, 2, 3, 1))
    dn = ("NHWC", "HWIO", "NHWC")
    h = jax.lax.conv_general_dilated(x, raw["w0"], (1, 1), "SAME",
                                     dimension_numbers=dn) + raw["b0"]
    h = jax.lax.conv_general_dilated(h, raw["wf"], (1, 1), "SAME",
                                     dimension_numbers=dn) + raw["bf"]
    h = jnp.maximum(h, 0.0)
    pooled = jnp.sum(h, axis=(1, 2))
    s1, t1 = _fold_bn(raw["g1"], raw["beta1"], raw["m1"], raw["v1"])
    s2, t2 = _fold_bn(raw["g2"], raw["beta2"], raw["m2"], raw["v2"])
    h1 = pooled @ raw["w1"] + raw["b1"]
    h1 = h1 * s1 + t1
    h1 = jnp.where(h1 > 0, h1, 0.01 * h1)
    h2 = h1 @ raw["w2"] + raw["b2"]
    return h2 * s2 + t2


if __name__ == "__main__":
    B, CIN, H, W = 2, 1, 16, 16          # PretrainedCNN default in_channels=1
    F_FEAT, HDIM, OUT = 128, 128, 10     # scaled-down backbone width / hdim / out_dim

    key = jax.random.PRNGKey(0)
    k = jax.random.split(key, 8)
    x_nchw = jax.random.normal(k[0], (B, CIN, H, W), jnp.float32)

    raw = {
        # conv0 (HWIO) + bias
        "w0": 0.1 * jax.random.normal(k[1], (3, 3, CIN, 3), jnp.float32),
        "b0": 0.1 * jax.random.normal(k[2], (3,), jnp.float32),
        # TODO(synk): se_resnext101_32x4d backbone (base_model.features) has no clean
        # Pallas translation; a synthetic 3x3 conv (3 -> F_FEAT) + ReLU stands in.
        "wf": 0.05 * jax.random.normal(k[3], (3, 3, 3, F_FEAT), jnp.float32),
        "bf": 0.05 * jax.random.normal(k[4], (F_FEAT,), jnp.float32),
        # lin1 / lin2 (stored as (in, out))
        "w1": 0.05 * jax.random.normal(k[5], (F_FEAT, HDIM), jnp.float32),
        "b1": 0.01 * jax.random.normal(k[6], (HDIM,), jnp.float32),
        "w2": 0.05 * jax.random.normal(k[7], (HDIM, OUT), jnp.float32),
        "b2": jnp.zeros((OUT,), jnp.float32),
        # BatchNorm1d eval-mode stats / affine (PyTorch defaults)
        "g1": jnp.ones((HDIM,), jnp.float32), "beta1": jnp.zeros((HDIM,), jnp.float32),
        "m1": jnp.zeros((HDIM,), jnp.float32), "v1": jnp.ones((HDIM,), jnp.float32),
        "g2": jnp.ones((OUT,), jnp.float32), "beta2": jnp.zeros((OUT,), jnp.float32),
        "m2": jnp.zeros((OUT,), jnp.float32), "v2": jnp.ones((OUT,), jnp.float32),
    }

    kp = prepare_params(raw)
    fwd = jax.jit(lambda xx: pretrained_cnn_forward(xx, kp, out_dim=OUT))
    out = jax.block_until_ready(fwd(x_nchw))
    assert out.shape == (B, OUT), out.shape

    ref = ref_forward(x_nchw, raw)
    assert jnp.allclose(out, ref, rtol=5e-2, atol=5e-2), (out, ref)

    print("KERNEL_OK")
</pallas_src>

<mosaic_0001>
module attributes {stable_mosaic.version = 11 : i64} {
  func.func @_fused_kernel(%arg0: i32, %arg1: memref<1x16x16x1xf32, #tpu.memory_space<vmem>>, %arg2: memref<9x8xbf16, #tpu.memory_space<vmem>>, %arg3: memref<1x8xf32, #tpu.memory_space<vmem>>, %arg4: memref<72x128xbf16, #tpu.memory_space<vmem>>, %arg5: memref<1x128xf32, #tpu.memory_space<vmem>>, %arg6: memref<128x128xf32, #tpu.memory_space<vmem>>, %arg7: memref<1x128xf32, #tpu.memory_space<vmem>>, %arg8: memref<128x128xf32, #tpu.memory_space<vmem>>, %arg9: memref<1x128xf32, #tpu.memory_space<vmem>>, %arg10: memref<1x1x128xf32, #tpu.memory_space<vmem>>) attributes {dimension_semantics = [#tpu.dimension_semantics<parallel>], iteration_bounds = array<i64: 2>, scalar_prefetch = 0 : i64, scratch_operands = 0 : i64, tpu.core_type = #tpu.core_type<tc>, window_params = [{transform_indices = @transform_0, window_bounds = array<i64: 1, 16, 16, 1>}, {pipeline_mode = #tpu.pipeline_mode<synchronous>, transform_indices = @transform_1, window_bounds = array<i64: 9, 8>}, {pipeline_mode = #tpu.pipeline_mode<synchronous>, transform_indices = @transform_2, window_bounds = array<i64: 1, 8>}, {pipeline_mode = #tpu.pipeline_mode<synchronous>, transform_indices = @transform_3, window_bounds = array<i64: 72, 128>}, {pipeline_mode = #tpu.pipeline_mode<synchronous>, transform_indices = @transform_4, window_bounds = array<i64: 1, 128>}, {pipeline_mode = #tpu.pipeline_mode<synchronous>, transform_indices = @transform_5, window_bounds = array<i64: 128, 128>}, {pipeline_mode = #tpu.pipeline_mode<synchronous>, transform_indices = @transform_6, window_bounds = array<i64: 1, 128>}, {pipeline_mode = #tpu.pipeline_mode<synchronous>, transform_indices = @transform_7, window_bounds = array<i64: 128, 128>}, {pipeline_mode = #tpu.pipeline_mode<synchronous>, transform_indices = @transform_8, window_bounds = array<i64: 1, 128>}, {transform_indices = @transform_9, window_bounds = array<i64: 1, 1, 128>}]} {
    %c0 = arith.constant 0 : index
    %c0_0 = arith.constant 0 : index
    %c0_1 = arith.constant 0 : index
    %c0_2 = arith.constant 0 : index
    %0 = vector.load %arg1[%c0, %c0_0, %c0_1, %c0_2] : memref<1x16x16x1xf32, #tpu.memory_space<vmem>>, vector<1x16x16x1xf32>
    %1 = vector.shape_cast %0 : vector<1x16x16x1xf32> to vector<16x16x1xf32>
    %cst = arith.constant 0.000000e+00 : f32
    %2 = vector.broadcast %cst : f32 to vector<16x1x1xf32>
    %3 = tpu.concatenate %2, %1, %2 in 1 : vector<16x1x1xf32>, vector<16x16x1xf32>, vector<16x1x1xf32> -> vector<16x18x1xf32>
    %cst_3 = arith.constant 0.000000e+00 : f32
    %4 = vector.broadcast %cst_3 : f32 to vector<1x18x1xf32>
    %5 = tpu.concatenate %4, %3, %4 in 0 : vector<1x18x1xf32>, vector<16x18x1xf32>, vector<1x18x1xf32> -> vector<18x18x1xf32>
    %6 = vector.extract_strided_slice %5 {offsets = [0, 0, 0], sizes = [16, 16, 1], strides = [1, 1, 1]} : vector<18x18x1xf32> to vector<16x16x1xf32>
    %7 = vector.shape_cast %6 : vector<16x16x1xf32> to vector<256x1xf32>
    %8 = vector.extract_strided_slice %5 {offsets = [0, 1, 0], sizes = [16, 16, 1], strides = [1, 1, 1]} : vector<18x18x1xf32> to vector<16x16x1xf32>
    %9 = vector.shape_cast %8 : vector<16x16x1xf32> to vector<256x1xf32>
    %10 = vector.extract_strided_slice %5 {offsets = [0, 2, 0], sizes = [16, 16, 1], strides = [1, 1, 1]} : vector<18x18x1xf32> to vector<16x16x1xf32>
    %11 = vector.shape_cast %10 : vector<16x16x1xf32> to vector<256x1xf32>
    %12 = vector.extract_strided_slice %5 {offsets = [1, 0, 0], sizes = [16, 16, 1], strides = [1, 1, 1]} : vector<18x18x1xf32> to vector<16x16x1xf32>
    %13 = vector.shape_cast %12 : vector<16x16x1xf32> to vector<256x1xf32>
    %14 = vector.extract_strided_slice %5 {offsets = [1, 1, 0], sizes = [16, 16, 1], strides = [1, 1, 1]} : vector<18x18x1xf32> to vector<16x16x1xf32>
    %15 = vector.shape_cast %14 : vector<16x16x1xf32> to vector<256x1xf32>
    %16 = vector.extract_strided_slice %5 {offsets = [1, 2, 0], sizes = [16, 16, 1], strides = [1, 1, 1]} : vector<18x18x1xf32> to vector<16x16x1xf32>
    %17 = vector.shape_cast %16 : vector<16x16x1xf32> to vector<256x1xf32>
    %18 = vector.extract_strided_slice %5 {offsets = [2, 0, 0], sizes = [16, 16, 1], strides = [1, 1, 1]} : vector<18x18x1xf32> to vector<16x16x1xf32>
    %19 = vector.shape_cast %18 : vector<16x16x1xf32> to vector<256x1xf32>
    %20 = vector.extract_strided_slice %5 {offsets = [2, 1, 0], sizes = [16, 16, 1], strides = [1, 1, 1]} : vector<18x18x1xf32> to vector<16x16x1xf32>
    %21 = vector.shape_cast %20 : vector<16x16x1xf32> to vector<256x1xf32>
    %22 = vector.extract_strided_slice %5 {offsets = [2, 2, 0], sizes = [16, 16, 1], strides = [1, 1, 1]} : vector<18x18x1xf32> to vector<16x16x1xf32>
    %23 = vector.shape_cast %22 : vector<16x16x1xf32> to vector<256x1xf32>
    %24 = tpu.concatenate %7, %9, %11, %13, %15, %17, %19, %21, %23 in 1 : vector<256x1xf32>, vector<256x1xf32>, vector<256x1xf32>, vector<256x1xf32>, vector<256x1xf32>, vector<256x1xf32>, vector<256x1xf32>, vector<256x1xf32>, vector<256x1xf32> -> vector<256x9xf32>
    %25 = arith.truncf %24 : vector<256x9xf32> to vector<256x9xbf16>
    %c0_4 = arith.constant 0 : index
    %c0_5 = arith.constant 0 : index
    %26 = vector.load %arg2[%c0_4, %c0_5] : memref<9x8xbf16, #tpu.memory_space<vmem>>, vector<9x8xbf16>
    %cst_6 = arith.constant dense<0.000000e+00> : vector<256x8xf32>
    %27 = tpu.matmul %25, %26, %cst_6 {dimension_numbers = #tpu.dot_dimension_numbers<[1], [0], [0], [1], [0, 0, 1, 1], [], []>} : vector<256x9xbf16>, vector<9x8xbf16>, vector<256x8xf32> -> vector<256x8xf32>
    %c0_7 = arith.constant 0 : index
    %c0_8 = arith.constant 0 : index
    %28 = vector.load %arg3[%c0_7, %c0_8] : memref<1x8xf32, #tpu.memory_space<vmem>>, vector<1x8xf32>
    %29 = vector.broadcast %28 : vector<1x8xf32> to vector<256x8xf32>
    %30 = arith.addf %27, %29 : vector<256x8xf32>
    %31 = vector.shape_cast %30 : vector<256x8xf32> to vector<16x16x8xf32>
    %cst_9 = arith.constant 0.000000e+00 : f32
    %32 = vector.broadcast %cst_9 : f32 to vector<16x1x8xf32>
    %33 = tpu.concatenate %32, %31, %32 in 1 : vector<16x1x8xf32>, vector<16x16x8xf32>, vector<16x1x8xf32> -> vector<16x18x8xf32>
    %cst_10 = arith.constant 0.000000e+00 : f32
    %34 = vector.broadcast %cst_10 : f32 to vector<1x18x8xf32>
    %35 = tpu.concatenate %34, %33, %34 in 0 : vector<1x18x8xf32>, vector<16x18x8xf32>, vector<1x18x8xf32> -> vector<18x18x8xf32>
    %36 = vector.extract_strided_slice %35 {offsets = [0, 0, 0], sizes = [16, 16, 8], strides = [1, 1, 1]} : vector<18x18x8xf32> to vector<16x16x8xf32>
    %37 = vector.shape_cast %36 : vector<16x16x8xf32> to vector<256x8xf32>
    %38 = vector.extract_strided_slice %35 {offsets = [0, 1, 0], sizes = [16, 16, 8], strides = [1, 1, 1]} : vector<18x18x8xf32> to vector<16x16x8xf32>
    %39 = vector.shape_cast %38 : vector<16x16x8xf32> to vector<256x8xf32>
    %40 = vector.extract_strided_slice %35 {offsets = [0, 2, 0], sizes = [16, 16, 8], strides = [1, 1, 1]} : vector<18x18x8xf32> to vector<16x16x8xf32>
    %41 = vector.shape_cast %40 : vector<16x16x8xf32> to vector<256x8xf32>
    %42 = vector.extract_strided_slice %35 {offsets = [1, 0, 0], sizes = [16, 16, 8], strides = [1, 1, 1]} : vector<18x18x8xf32> to vector<16x16x8xf32>
    %43 = vector.shape_cast %42 : vector<16x16x8xf32> to vector<256x8xf32>
    %44 = vector.extract_strided_slice %35 {offsets = [1, 1, 0], sizes = [16, 16, 8], strides = [1, 1, 1]} : vector<18x18x8xf32> to vector<16x16x8xf32>
    %45 = vector.shape_cast %44 : vector<16x16x8xf32> to vector<256x8xf32>
    %46 = vector.extract_strided_slice %35 {offsets = [1, 2, 0], sizes = [16, 16, 8], strides = [1, 1, 1]} : vector<18x18x8xf32> to vector<16x16x8xf32>
    %47 = vector.shape_cast %46 : vector<16x16x8xf32> to vector<256x8xf32>
    %48 = vector.extract_strided_slice %35 {offsets = [2, 0, 0], sizes = [16, 16, 8], strides = [1, 1, 1]} : vector<18x18x8xf32> to vector<16x16x8xf32>
    %49 = vector.shape_cast %48 : vector<16x16x8xf32> to vector<256x8xf32>
    %50 = vector.extract_strided_slice %35 {offsets = [2, 1, 0], sizes = [16, 16, 8], strides = [1, 1, 1]} : vector<18x18x8xf32> to vector<16x16x8xf32>
    %51 = vector.shape_cast %50 : vector<16x16x8xf32> to vector<256x8xf32>
    %52 = vector.extract_strided_slice %35 {offsets = [2, 2, 0], sizes = [16, 16, 8], strides = [1, 1, 1]} : vector<18x18x8xf32> to vector<16x16x8xf32>
    %53 = vector.shape_cast %52 : vector<16x16x8xf32> to vector<256x8xf32>
    %54 = tpu.concatenate %37, %39, %41, %43, %45, %47, %49, %51, %53 in 1 : vector<256x8xf32>, vector<256x8xf32>, vector<256x8xf32>, vector<256x8xf32>, vector<256x8xf32>, vector<256x8xf32>, vector<256x8xf32>, vector<256x8xf32>, vector<256x8xf32> -> vector<256x72xf32>
    %55 = arith.truncf %54 : vector<256x72xf32> to vector<256x72xbf16>
    %c0_11 = arith.constant 0 : index
    %c0_12 = arith.constant 0 : index
    %56 = vector.load %arg4[%c0_11, %c0_12] : memref<72x128xbf16, #tpu.memory_space<vmem>>, vector<72x128xbf16>
    %cst_13 = arith.constant dense<0.000000e+00> : vector<256x128xf32>
    %57 = tpu.matmul %55, %56, %cst_13 {dimension_numbers = #tpu.dot_dimension_numbers<[1], [0], [0], [1], [0, 0, 1, 1], [], []>} : vector<256x72xbf16>, vector<72x128xbf16>, vector<256x128xf32> -> vector<256x128xf32>
    %c0_14 = arith.constant 0 : index
    %c0_15 = arith.constant 0 : index
    %58 = vector.load %arg5[%c0_14, %c0_15] : memref<1x128xf32, #tpu.memory_space<vmem>>, vector<1x128xf32>
    %59 = vector.broadcast %58 : vector<1x128xf32> to vector<256x128xf32>
    %60 = arith.addf %57, %59 : vector<256x128xf32>
    %cst_16 = arith.constant 0.000000e+00 : f32
    %61 = vector.broadcast %cst_16 : f32 to vector<256x128xf32>
    %62 = arith.maximumf %60, %61 : vector<256x128xf32>
    %cst_17 = arith.constant dense<0.000000e+00> : vector<128xf32>
    %63 = vector.multi_reduction <add>, %62, %cst_17 [0] : vector<256x128xf32> to vector<128xf32>
    %64 = vector.shape_cast %63 : vector<128xf32> to vector<1x128xf32>
    %c0_18 = arith.constant 0 : index
    %c0_19 = arith.constant 0 : index
    %65 = vector.load %arg6[%c0_18, %c0_19] : memref<128x128xf32, #tpu.memory_space<vmem>>, vector<128x128xf32>
    %cst_20 = arith.constant dense<0.000000e+00> : vector<1x128xf32>
    %66 = tpu.matmul %64, %65, %cst_20 {dimension_numbers = #tpu.dot_dimension_numbers<[1], [0], [0], [1], [0, 0, 1, 1], [], []>} : vector<1x128xf32>, vector<128x128xf32>, vector<1x128xf32> -> vector<1x128xf32>
    %c0_21 = arith.constant 0 : index
    %c0_22 = arith.constant 0 : index
    %67 = vector.load %arg7[%c0_21, %c0_22] : memref<1x128xf32, #tpu.memory_space<vmem>>, vector<1x128xf32>
    %68 = arith.addf %66, %67 : vector<1x128xf32>
    %cst_23 = arith.constant 0.000000e+00 : f32
    %69 = vector.broadcast %cst_23 : f32 to vector<1x128xf32>
    %70 = arith.cmpf ogt, %68, %69 : vector<1x128xf32>
    %cst_24 = arith.constant 0.00999999977 : f32
    %71 = vector.broadcast %cst_24 : f32 to vector<1x128xf32>
    %72 = arith.mulf %71, %68 : vector<1x128xf32>
    %73 = arith.select %70, %68, %72 : vector<1x128xi1>, vector<1x128xf32>
    %c0_25 = arith.constant 0 : index
    %c0_26 = arith.constant 0 : index
    %74 = vector.load %arg8[%c0_25, %c0_26] : memref<128x128xf32, #tpu.memory_space<vmem>>, vector<128x128xf32>
    %cst_27 = arith.constant dense<0.000000e+00> : vector<1x128xf32>
    %75 = tpu.matmul %73, %74, %cst_27 {dimension_numbers = #tpu.dot_dimension_numbers<[1], [0], [0], [1], [0, 0, 1, 1], [], []>} : vector<1x128xf32>, vector<128x128xf32>, vector<1x128xf32> -> vector<1x128xf32>
    %c0_28 = arith.constant 0 : index
    %c0_29 = arith.constant 0 : index
    %76 = vector.load %arg9[%c0_28, %c0_29] : memref<1x128xf32, #tpu.memory_space<vmem>>, vector<1x128xf32>
    %77 = arith.addf %75, %76 : vector<1x128xf32>
    %78 = vector.shape_cast %77 : vector<1x128xf32> to vector<1x1x128xf32>
    %c0_30 = arith.constant 0 : index
    %c0_31 = arith.constant 0 : index
    %c0_32 = arith.constant 0 : index
    %79 = vector.load %arg10[%c0_30, %c0_31, %c0_32] : memref<1x1x128xf32, #tpu.memory_space<vmem>>, vector<1x1x128xf32>
    tpu.vector_store %arg10[%c0_30, %c0_31, %c0_32], %78 {strides = array<i32>} : memref<1x1x128xf32, #tpu.memory_space<vmem>>, vector<1x1x128xf32>,
    return
  }
  func.func @transform_0(%arg0: i32) -> (i32, i32, i32, i32) {
    %c0_i32 = arith.constant 0 : i32
    %c0_i32_0 = arith.constant 0 : i32
    %c0_i32_1 = arith.constant 0 : i32
    %c0_i32_2 = arith.constant 0 : i32
    return %arg0, %c0_i32, %c0_i32_0, %c0_i32_1 : i32, i32, i32, i32
  }
  func.func @transform_1(%arg0: i32) -> (i32, i32) {
    %c0_i32 = arith.constant 0 : i32
    %c0_i32_0 = arith.constant 0 : i32
    %c0_i32_1 = arith.constant 0 : i32
    return %c0_i32, %c0_i32_0 : i32, i32
  }
  func.func @transform_2(%arg0: i32) -> (i32, i32) {
    %c0_i32 = arith.constant 0 : i32
    %c0_i32_0 = arith.constant 0 : i32
    %c0_i32_1 = arith.constant 0 : i32
    return %c0_i32, %c0_i32_0 : i32, i32
  }
  func.func @transform_3(%arg0: i32) -> (i32, i32) {
    %c0_i32 = arith.constant 0 : i32
    %c0_i32_0 = arith.constant 0 : i32
    %c0_i32_1 = arith.constant 0 : i32
    return %c0_i32, %c0_i32_0 : i32, i32
  }
  func.func @transform_4(%arg0: i32) -> (i32, i32) {
    %c0_i32 = arith.constant 0 : i32
    %c0_i32_0 = arith.constant 0 : i32
    %c0_i32_1 = arith.constant 0 : i32
    return %c0_i32, %c0_i32_0 : i32, i32
  }
  func.func @transform_5(%arg0: i32) -> (i32, i32) {
    %c0_i32 = arith.constant 0 : i32
    %c0_i32_0 = arith.constant 0 : i32
    %c0_i32_1 = arith.constant 0 : i32
    return %c0_i32, %c0_i32_0 : i32, i32
  }
  func.func @transform_6(%arg0: i32) -> (i32, i32) {
    %c0_i32 = arith.constant 0 : i32
    %c0_i32_0 = arith.constant 0 : i32
    %c0_i32_1 = arith.constant 0 : i32
    return %c0_i32, %c0_i32_0 : i32, i32
  }
  func.func @transform_7(%arg0: i32) -> (i32, i32) {
    %c0_i32 = arith.constant 0 : i32
    %c0_i32_0 = arith.constant 0 : i32
    %c0_i32_1 = arith.constant 0 : i32
    return %c0_i32, %c0_i32_0 : i32, i32
  }
  func.func @transform_8(%arg0: i32) -> (i32, i32) {
    %c0_i32 = arith.constant 0 : i32
    %c0_i32_0 = arith.constant 0 : i32
    %c0_i32_1 = arith.constant 0 : i32
    return %c0_i32, %c0_i32_0 : i32, i32
  }
  func.func @transform_9(%arg0: i32) -> (i32, i32, i32) {
    %c0_i32 = arith.constant 0 : i32
    %c0_i32_0 = arith.constant 0 : i32
    %c0_i32_1 = arith.constant 0 : i32
    return %arg0, %c0_i32, %c0_i32_0 : i32, i32, i32
  }
}

</mosaic_0001>

<llo_original>
// kernel: _lambda_.1
$region0: #{_lambda_.1}
  #allocation0 [shape = 'u32[]', space=smem, size = 0x4, offset = 0x4, fixed_abs, tag = 'smem constant byte address 0x4 - core index']
  #allocation1 [shape = 'u32[144,128]{1,0:T(1,128)}', space=vmem, size = 0x12000, scoped, tag = 'internal scratch']
  %s0 = inlined_call_operand.vmem [shape: f32[2,16,16,1], index: 0, kind: input, shape index: {}]
  %s1 = inlined_call_operand.vmem [shape: bf16[9,8], index: 1, kind: input, shape index: {}]
  %s2 = inlined_call_operand.vmem [shape: f32[1,8], index: 2, kind: input, shape index: {}]
  %s3 = inlined_call_operand.vmem [shape: bf16[72,128], index: 3, kind: input, shape index: {}]
  %s4 = inlined_call_operand.vmem [shape: f32[1,128], index: 4, kind: input, shape index: {}]
  %s5 = inlined_call_operand.vmem [shape: f32[128,128], index: 5, kind: input, shape index: {}]
  %s6 = inlined_call_operand.vmem [shape: f32[1,128], index: 6, kind: input, shape index: {}]
  %s7 = inlined_call_operand.vmem [shape: f32[128,128], index: 7, kind: input, shape index: {}]
  %s8 = inlined_call_operand.vmem [shape: f32[1,128], index: 8, kind: input, shape index: {}]
  %s9 = inlined_call_operand.hbm [shape: f32[2,1,128], index: 9, kind: output, shape index: {}]
  %s10 = sld [smem:[#allocation0]]
  $region69: #{_lambda_.1} parent=0
    _
  %s12 = ssub.s32 1, %s10
  %s13 = scalar_select 0, %s12, %s10
  $region1: #{_lambda_.1} parent=0
    #allocation2 [shape = 'u8[1024]{0}', space=vmem, size = 0x400, scoped, tag = 'output window, operand 0']
    #allocation3 [shape = 's32[2]{0}', space=sflag, size = 0x8, scoped, tag = 'scoped memory for _lambda_.1']
    %14 = vsyncpa [#allocation3], 0
    %s15 = scalar_lea.sflag [#allocation3], 1
    %16 = vsyncpa %s15, 0
    loop: start=0, step=1, limit=4
    $region2: #{_lambda_.1} parent=1 // loop_pre_header
      _
    $region3: #{_lambda_.1} parent=1 // loop_header
      %s18 = sphi 0, %s22
      %p19 = scmp.ge.s32.totalorder %s18, 4
      %s28 = sphi 0, %s30
      %s31 = sphi 0, %s28
      %s32 = sphi 0, %s31
      %s48 = sphi 0, %s32
      %s52 = sphi 0, %s52
      %s54 = sphi 0, %s52
      %s55 = sphi 0, %s54
      %s69 = sphi 0, %s55
      %s73 = sphi 0, %s73
      %s75 = sphi 0, %s73
      %s76 = sphi 0, %s75
      %s90 = sphi 0, %s76
      %s94 = sphi 0, %s94
      %s96 = sphi 0, %s94
      %s97 = sphi 0, %s96
      %s111 = sphi 0, %s97
      %s115 = sphi 0, %s115
      %s117 = sphi 0, %s115
      %s118 = sphi 0, %s117
      %s132 = sphi 0, %s118
      %s136 = sphi 0, %s136
      %s138 = sphi 0, %s136
      %s139 = sphi 0, %s138
      %s153 = sphi 0, %s139
      %s157 = sphi 0, %s157
      %s159 = sphi 0, %s157
      %s160 = sphi 0, %s159
      %s174 = sphi 0, %s160
      %s178 = sphi 0, %s178
      %s180 = sphi 0, %s178
      %s181 = sphi 0, %s180
      %s195 = sphi 0, %s181
      %s199 = sphi 0, %s199
      %s201 = sphi 0, %s199
      %s202 = sphi 0, %s201
      %s216 = sphi 0, %s202
      %s222 = sphi 0, %s224
      %s225 = sphi 0, %s222
      %s226 = sphi 0, %s225
      %s242 = sphi 0, %s226
    $region4: #{_lambda_.1} parent=1 // loop_header_branch
      %21 = sbr.rel (%p19) target = $region8
    $region5: #{_lambda_.1} parent=1 // loop_body
      %s23 = ssub.s32 %s18, 1
      %s24 = ssub.s32 %s18, 2
      %s25 = sadd.s32 %s18, 1
      %s26 = ssub.s32 %s18, %s25
      %p27 = scmp.eq.s32.totalorder %s26, 0
      %s29 = sadd.s32 %s28, 1
      %s30 = scalar_select %p27, %s28, %s29
      %p33 = pneg %p27
      %p34 = scmp.eq.s32.totalorder %s18, 1
      %p35 = por %p33, %p34
      %p36 = scmp.ne.s32.totalorder %s28, %s31
      %p37 = scmp.eq.s32.totalorder %s18, 0
      %p38 = por %p36, %p37
      %p39 = scmp.ne.s32.totalorder %s28, %s31
      %p40 = scmp.eq.s32.totalorder %s23, 1
      %p41 = por %p39, %p40
      %p42 = scmp.ne.s32.totalorder %s31, %s32
      %p43 = scmp.eq.s32.totalorder %s23, 0
      %p44 = por %p42, %p43
      %p45 = scmp.ne.s32.totalorder %s31, %s32
      %p46 = scmp.eq.s32.totalorder %s24, 1
      %p47 = por %p45, %p46
      %p49 = scmp.ne.s32.totalorder %s32, %s48
      %p50 = scmp.eq.s32.totalorder %s24, 0
      %p51 = por %p49, %p50
      %s53 = sadd.s32 %s52, 1
      %p56 = scmp.eq.s32.totalorder %s18, 1
      %p57 = scmp.ne.s32.totalorder %s52, %s54
      %p58 = scmp.eq.s32.totalorder %s18, 0
      %p59 = por %p57, %p58
      %p60 = scmp.ne.s32.totalorder %s52, %s54
      %p61 = scmp.eq.s32.totalorder %s23, 1
      %p62 = por %p60, %p61
      %p63 = scmp.ne.s32.totalorder %s54, %s55
      %p64 = scmp.eq.s32.totalorder %s23, 0
      %p65 = por %p63, %p64
      %p66 = scmp.ne.s32.totalorder %s54, %s55
      %p67 = scmp.eq.s32.totalorder %s24, 1
      %p68 = por %p66, %p67
      %p70 = scmp.ne.s32.totalorder %s55, %s69
      %p71 = scmp.eq.s32.totalorder %s24, 0
      %p72 = por %p70, %p71
      %s74 = sadd.s32 %s73, 1
      %p77 = scmp.eq.s32.totalorder %s18, 1
      %p78 = scmp.ne.s32.totalorder %s73, %s75
      %p79 = scmp.eq.s32.totalorder %s18, 0
      %p80 = por %p78, %p79
      %p81 = scmp.ne.s32.totalorder %s73, %s75
      %p82 = scmp.eq.s32.totalorder %s23, 1
      %p83 = por %p81, %p82
      %p84 = scmp.ne.s32.totalorder %s75, %s76
      %p85 = scmp.eq.s32.totalorder %s23, 0
      %p86 = por %p84, %p85
      %p87 = scmp.ne.s32.totalorder %s75, %s76
      %p88 = scmp.eq.s32.totalorder %s24, 1
      %p89 = por %p87, %p88
      %p91 = scmp.ne.s32.totalorder %s76, %s90
      %p92 = scmp.eq.s32.totalorder %s24, 0
      %p93 = por %p91, %p92
      %s95 = sadd.s32 %s94, 1
      %p98 = scmp.eq.s32.totalorder %s18, 1
      %p99 = scmp.ne.s32.totalorder %s94, %s96
      %p100 = scmp.eq.s32.totalorder %s18, 0
      %p101 = por %p99, %p100
      %p102 = scmp.ne.s32.totalorder %s94, %s96
      %p103 = scmp.eq.s32.totalorder %s23, 1
      %p104 = por %p102, %p103
      %p105 = scmp.ne.s32.totalorder %s96, %s97
      %p106 = scmp.eq.s32.totalorder %s23, 0
      %p107 = por %p105, %p106
      %p108 = scmp.ne.s32.totalorder %s96, %s97
      %p109 = scmp.eq.s32.totalorder %s24, 1
      %p110 = por %p108, %p109
      %p112 = scmp.ne.s32.totalorder %s97, %s111
      %p113 = scmp.eq.s32.totalorder %s24, 0
      %p114 = por %p112, %p113
      %s116 = sadd.s32 %s115, 1
      %p119 = scmp.eq.s32.totalorder %s18, 1
      %p120 = scmp.ne.s32.totalorder %s115, %s117
      %p121 = scmp.eq.s32.totalorder %s18, 0
      %p122 = por %p120, %p121
      %p123 = scmp.ne.s32.totalorder %s115, %s117
      %p124 = scmp.eq.s32.totalorder %s23, 1
      %p125 = por %p123, %p124
      %p126 = scmp.ne.s32.totalorder %s117, %s118
      %p127 = scmp.eq.s32.totalorder %s23, 0
      %p128 = por %p126, %p127
      %p129 = scmp.ne.s32.totalorder %s117, %s118
      %p130 = scmp.eq.s32.totalorder %s24, 1
      %p131 = por %p129, %p130
      %p133 = scmp.ne.s32.totalorder %s118, %s132
      %p134 = scmp.eq.s32.totalorder %s24, 0
      %p135 = por %p133, %p134
      %s137 = sadd.s32 %s136, 1
      %p140 = scmp.eq.s32.totalorder %s18, 1
      %p141 = scmp.ne.s32.totalorder %s136, %s138
      %p142 = scmp.eq.s32.totalorder %s18, 0
      %p143 = por %p141, %p142
      %p144 = scmp.ne.s32.totalorder %s136, %s138
      %p145 = scmp.eq.s32.totalorder %s23, 1
      %p146 = por %p144, %p145
      %p147 = scmp.ne.s32.totalorder %s138, %s139
      %p148 = scmp.eq.s32.totalorder %s23, 0
      %p149 = por %p147, %p148
      %p150 = scmp.ne.s32.totalorder %s138, %s139
      %p151 = scmp.eq.s32.totalorder %s24, 1
      %p152 = por %p150, %p151
      %p154 = scmp.ne.s32.totalorder %s139, %s153
      %p155 = scmp.eq.s32.totalorder %s24, 0
      %p156 = por %p154, %p155
      %s158 = sadd.s32 %s157, 1
      %p161 = scmp.eq.s32.totalorder %s18, 1
      %p162 = scmp.ne.s32.totalorder %s157, %s159
      %p163 = scmp.eq.s32.totalorder %s18, 0
      %p164 = por %p162, %p163
      %p165 = scmp.ne.s32.totalorder %s157, %s159
      %p166 = scmp.eq.s32.totalorder %s23, 1
      %p167 = por %p165, %p166
      %p168 = scmp.ne.s32.totalorder %s159, %s160
      %p169 = scmp.eq.s32.totalorder %s23, 0
      %p170 = por %p168, %p169
      %p171 = scmp.ne.s32.totalorder %s159, %s160
      %p172 = scmp.eq.s32.totalorder %s24, 1
      %p173 = por %p171, %p172
      %p175 = scmp.ne.s32.totalorder %s160, %s174
      %p176 = scmp.eq.s32.totalorder %s24, 0
      %p177 = por %p175, %p176
      %s179 = sadd.s32 %s178, 1
      %p182 = scmp.eq.s32.totalorder %s18, 1
      %p183 = scmp.ne.s32.totalorder %s178, %s180
      %p184 = scmp.eq.s32.totalorder %s18, 0
      %p185 = por %p183, %p184
      %p186 = scmp.ne.s32.totalorder %s178, %s180
      %p187 = scmp.eq.s32.totalorder %s23, 1
      %p188 = por %p186, %p187
      %p189 = scmp.ne.s32.totalorder %s180, %s181
      %p190 = scmp.eq.s32.totalorder %s23, 0
      %p191 = por %p189, %p190
      %p192 = scmp.ne.s32.totalorder %s180, %s181
      %p193 = scmp.eq.s32.totalorder %s24, 1
      %p194 = por %p192, %p193
      %p196 = scmp.ne.s32.totalorder %s181, %s195
      %p197 = scmp.eq.s32.totalorder %s24, 0
      %p198 = por %p196, %p197
      %s200 = sadd.s32 %s199, 1
      %p203 = scmp.eq.s32.totalorder %s18, 1
      %p204 = scmp.ne.s32.totalorder %s199, %s201
      %p205 = scmp.eq.s32.totalorder %s18, 0
      %p206 = por %p204, %p205
      %p207 = scmp.ne.s32.totalorder %s199, %s201
      %p208 = scmp.eq.s32.totalorder %s23, 1
      %p209 = por %p207, %p208
      %p210 = scmp.ne.s32.totalorder %s201, %s202
      %p211 = scmp.eq.s32.totalorder %s23, 0
      %p212 = por %p210, %p211
      %p213 = scmp.ne.s32.totalorder %s201, %s202
      %p214 = scmp.eq.s32.totalorder %s24, 1
      %p215 = por %p213, %p214
      %p217 = scmp.ne.s32.totalorder %s202, %s216
      %p218 = scmp.eq.s32.totalorder %s24, 0
      %p219 = por %p217, %p218
      %s220 = ssub.s32 %s18, %s25
      %p221 = scmp.eq.s32.totalorder %s220, 0
      %s223 = sadd.s32 %s222, 1
      %s224 = scalar_select %p221, %s222, %s223
      %p227 = pneg %p221
      %p228 = scmp.eq.s32.totalorder %s18, 1
      %p229 = por %p227, %p228
      %p230 = scmp.ne.s32.totalorder %s222, %s225
      %p231 = scmp.eq.s32.totalorder %s18, 0
      %p232 = por %p230, %p231
      %p233 = scmp.ne.s32.totalorder %s222, %s225
      %p234 = scmp.eq.s32.totalorder %s23, 1
      %p235 = por %p233, %p234
      %p236 = scmp.ne.s32.totalorder %s225, %s226
      %p237 = scmp.eq.s32.totalorder %s23, 0
      %p238 = por %p236, %p237
      %p239 = scmp.ne.s32.totalorder %s225, %s226
      %p240 = scmp.eq.s32.totalorder %s24, 1
      %p241 = por %p239, %p240
      %p243 = scmp.ne.s32.totalorder %s226, %s242
      %p244 = scmp.eq.s32.totalorder %s24, 0
      %p245 = por %p243, %p244
      %p246 = scmp.le.s32.totalorder 1, %s18
      %p247 = scmp.lt.s32.totalorder %s18, 3
      %p248 = pnand %p246, %p247
      %p249 = pneg %p248
      // Predicated region
      $region9: #{_lambda_.1} parent=5 // pred_check
        _
      $region10: #{_lambda_.1} parent=5 // pred_check_branch
        %251 = sbr.rel (%p248) target = $region12
      $region11: #{_lambda_.1} parent=5 // pred_region
        %s252 = ssub.s32 %s18, 1
        // Predicated region
        $region13: #{_lambda_.1} parent=11 // pred_check
          %p253 = pneg %p65
        $region14: #{_lambda_.1} parent=11 // pred_check_branch
          %255 = sbr.rel (%p253) target = $region16
        $region15: #{_lambda_.1} parent=11 // pred_region
          _
        $region16: #{_lambda_.1} parent=11 // pred_fallthru
          _
        // Predicated region
        $region17: #{_lambda_.1} parent=11 // pred_check
          %p256 = pneg %p86
        $region18: #{_lambda_.1} parent=11 // pred_check_branch
          %258 = sbr.rel (%p256) target = $region20
        $region19: #{_lambda_.1} parent=11 // pred_region
          _
        $region20: #{_lambda_.1} parent=11 // pred_fallthru
          _
        // Predicated region
        $region21: #{_lambda_.1} parent=11 // pred_check
          %p259 = pneg %p107
        $region22: #{_lambda_.1} parent=11 // pred_check_branch
          %261 = sbr.rel (%p259) target = $region24
        $region23: #{_lambda_.1} parent=11 // pred_region
          _
        $region24: #{_lambda_.1} parent=11 // pred_fallthru
          _
        // Predicated region
        $region25: #{_lambda_.1} parent=11 // pred_check
          %p262 = pneg %p128
        $region26: #{_lambda_.1} parent=11 // pred_check_branch
          %264 = sbr.rel (%p262) target = $region28
        $region27: #{_lambda_.1} parent=11 // pred_region
          _
        $region28: #{_lambda_.1} parent=11 // pred_fallthru
          _
        // Predicated region
        $region29: #{_lambda_.1} parent=11 // pred_check
          %p265 = pneg %p149
        $region30: #{_lambda_.1} parent=11 // pred_check_branch
          %267 = sbr.rel (%p265) target = $region32
        $region31: #{_lambda_.1} parent=11 // pred_region
          _
        $region32: #{_lambda_.1} parent=11 // pred_fallthru
          _
        // Predicated region
        $region33: #{_lambda_.1} parent=11 // pred_check
          %p268 = pneg %p170
        $region34: #{_lambda_.1} parent=11 // pred_check_branch
          %270 = sbr.rel (%p268) target = $region36
        $region35: #{_lambda_.1} parent=11 // pred_region
          _
        $region36: #{_lambda_.1} parent=11 // pred_fallthru
          _
        // Predicated region
        $region37: #{_lambda_.1} parent=11 // pred_check
          %p271 = pneg %p191
        $region38: #{_lambda_.1} parent=11 // pred_check_branch
          %273 = sbr.rel (%p271) target = $region40
        $region39: #{_lambda_.1} parent=11 // pred_region
          _
        $region40: #{_lambda_.1} parent=11 // pred_fallthru
          _
        // Predicated region
        $region41: #{_lambda_.1} parent=11 // pred_check
          %p274 = pneg %p212
        $region42: #{_lambda_.1} parent=11 // pred_check_branch
          %276 = sbr.rel (%p274) target = $region44
        $region43: #{_lambda_.1} parent=11 // pred_region
          _
        $region44: #{_lambda_.1} parent=11 // pred_fallthru
          _
      $region12: #{_lambda_.1} parent=5 // pred_fallthru
        _
      %p277 = scmp.lt.s32.totalorder %s18, 2
      // Predicated region
      $region45: #{_lambda_.1} parent=5 // pred_check
        %p278 = pneg %p277
      $region46: #{_lambda_.1} parent=5 // pred_check_branch
        %280 = sbr.rel (%p278) target = $region48
      $region47: #{_lambda_.1} parent=5 // pred_region
        // Predicated region
        $region49: #{_lambda_.1} parent=47 // pred_check
          %p281 = pneg %p38
        $region50: #{_lambda_.1} parent=47 // pred_check_branch
          %283 = sbr.rel (%p281) target = $region52
        $region51: #{_lambda_.1} parent=47 // pred_region
          %p284 = scmp.lt.s32.totalorder %s18, 1
          %s285 = scalar_select %p284, %s18, 1
          %s286 = smul.addr %s285, 32
          %s287 = smul.addr %s286, 8
          %s288 = scalar_lea.vmem %s0, %s287
        $region52: #{_lambda_.1} parent=47 // pred_fallthru
          _
      $region48: #{_lambda_.1} parent=5 // pred_fallthru
        _
      %p289 = scmp.le.s32.totalorder 1, %s18
      %p290 = scmp.lt.s32.totalorder %s18, 3
      %p291 = pnand %p289, %p290
      %p292 = pneg %p291
      // Predicated region
      $region53: #{_lambda_.1} parent=5 // pred_check
        _
      $region54: #{_lambda_.1} parent=5 // pred_check_branch
        %294 = sbr.rel (%p291) target = $region56
      $region55: #{_lambda_.1} parent=5 // pred_region
        %s295 = ssub.s32 %s18, 1
        %p296 = scmp.lt.s32.totalorder %s23, 1
        %s297 = scalar_select %p296, %s23, 1
        %s298 = smul.addr %s297, 32
        %s299 = smul.addr %s298, 8
        %s300 = scalar_lea.vmem %s0, %s299
        %p301 = pneg %p44
        %p302 = pneg %p41
        %p303 = pneg %p65
        %p304 = pneg %p62
        %p305 = pneg %p86
        %p306 = pneg %p83
        %p307 = pneg %p107
        %p308 = pneg %p104
        %p309 = pneg %p128
        %p310 = pneg %p125
        %p311 = pneg %p149
        %p312 = pneg %p146
        %p313 = pneg %p170
        %p314 = pneg %p167
        %p315 = pneg %p191
        %p316 = pneg %p188
        %p317 = pneg %p212
        %p318 = pneg %p209
        %p319 = pneg %p238
        %p320 = pneg %p235
        %s321 = sand.u32 %s225, 1
        %s322 = scalar_lea.sflag [#allocation3], %s321
        %s323 = sand.u32 %s225, 1
        %s324 = scalar_lea.vmem [#allocation2], %s323
        %p325 = scmp.lt.s32.totalorder %s23, 1
        %s326 = scalar_select %p325, %s23, 1
        %s327 = smul.addr %s326, 32
        %s328 = smul.addr %s327, 8
        %s329 = scalar_lea.vmem %s0, %s328
        %v331 = vld [vmem:[%s329] sm:$0xff]
        %v332 = vld [vmem:[%s329 + $0x8] sm:$0xff]
        %v333 = vld [vmem:[%s329 + $0x10] sm:$0xff]
        %v334 = vld [vmem:[%s329 + $0x18] sm:$0xff]
        %v335 = vld [vmem:[%s329 + $0x20] sm:$0xff]
        %v336 = vld [vmem:[%s329 + $0x28] sm:$0xff]
        %v337 = vld [vmem:[%s329 + $0x30] sm:$0xff]
        %v338 = vld [vmem:[%s329 + $0x38] sm:$0xff]
        %v339 = vld [vmem:[%s329 + $0x40] sm:$0xff]
        %v340 = vld [vmem:[%s329 + $0x48] sm:$0xff]
        %v341 = vld [vmem:[%s329 + $0x50] sm:$0xff]
        %v342 = vld [vmem:[%s329 + $0x58] sm:$0xff]
        %v343 = vld [vmem:[%s329 + $0x60] sm:$0xff]
        %v344 = vld [vmem:[%s329 + $0x68] sm:$0xff]
        %v345 = vld [vmem:[%s329 + $0x70] sm:$0xff]
        %v346 = vld [vmem:[%s329 + $0x78] sm:$0xff]
        %v347 = vld [vmem:[%s329 + $0x80] sm:$0xff]
        %v348 = vld [vmem:[%s329 + $0x88] sm:$0xff]
        %v349 = vld [vmem:[%s329 + $0x90] sm:$0xff]
        %v350 = vld [vmem:[%s329 + $0x98] sm:$0xff]
        %v351 = vld [vmem:[%s329 + $0xa0] sm:$0xff]
        %v352 = vld [vmem:[%s329 + $0xa8] sm:$0xff]
        %v353 = vld [vmem:[%s329 + $0xb0] sm:$0xff]
        %v354 = vld [vmem:[%s329 + $0xb8] sm:$0xff]
        %v355 = vld [vmem:[%s329 + $0xc0] sm:$0xff]
        %v356 = vld [vmem:[%s329 + $0xc8] sm:$0xff]
        %v357 = vld [vmem:[%s329 + $0xd0] sm:$0xff]
        %v358 = vld [vmem:[%s329 + $0xd8] sm:$0xff]
        %v359 = vld [vmem:[%s329 + $0xe0] sm:$0xff]
        %v360 = vld [vmem:[%s329 + $0xe8] sm:$0xff]
        %v361 = vld [vmem:[%s329 + $0xf0] sm:$0xff]
        %v362 = vld [vmem:[%s329 + $0xf8] sm:$0xff]
        %vm395 = vcmask 1040384
        %v396 = vrot.slane %v331, 7
        %v397 = vrot.slane %v332, 7
        %v398 = vsel %vm395, %v396, %v397
        %v399 = vrot.slane %v333, 7
        %v400 = vrot.slane %v334, 7
        %v401 = vsel %vm395, %v399, %v400
        %v402 = vrot.slane %v335, 7
        %v403 = vrot.slane %v336, 7
        %v404 = vsel %vm395, %v402, %v403
        %v405 = vrot.slane %v337, 7
        %v406 = vrot.slane %v338, 7
        %v407 = vsel %vm395, %v405, %v406
        %v408 = vrot.slane %v339, 7
        %v409 = vrot.slane %v340, 7
        %v410 = vsel %vm395, %v408, %v409
        %v411 = vrot.slane %v341, 7
        %v412 = vrot.slane %v342, 7
        %v413 = vsel %vm395, %v411, %v412
        %v414 = vrot.slane %v343, 7
        %v415 = vrot.slane %v344, 7
        %v416 = vsel %vm395, %v414, %v415
        %v417 = vrot.slane %v345, 7
        %v418 = vrot.slane %v346, 7
        %v419 = vsel %vm395, %v417, %v418
        %v420 = vrot.slane %v347, 7
        %v421 = vrot.slane %v348, 7
        %v422 = vsel %vm395, %v420, %v421
        %v423 = vrot.slane %v349, 7
        %v424 = vrot.slane %v350, 7
        %v425 = vsel %vm395, %v423, %v424
        %v426 = vrot.slane %v351, 7
        %v427 = vrot.slane %v352, 7
        %v428 = vsel %vm395, %v426, %v427
        %v429 = vrot.slane %v353, 7
        %v430 = vrot.slane %v354, 7
        %v431 = vsel %vm395, %v429, %v430
        %v432 = vrot.slane %v355, 7
        %v433 = vrot.slane %v356, 7
        %v434 = vsel %vm395, %v432, %v433
        %v435 = vrot.slane %v357, 7
        %v436 = vrot.slane %v358, 7
        %v437 = vsel %vm395, %v435, %v436
        %v438 = vrot.slane %v359, 7
        %v439 = vrot.slane %v360, 7
        %v440 = vsel %vm395, %v438, %v439
        %v441 = vrot.slane %v361, 7
        %v442 = vrot.slane %v362, 7
        %v443 = vsel %vm395, %v441, %v442
        %v491 = vsel %vm395, 0.0, %v396
        %v492 = vsel %vm395, 0.0, %v399
        %v493 = vsel %vm395, 0.0, %v402
        %v494 = vsel %vm395, 0.0, %v405
        %v495 = vsel %vm395, 0.0, %v408
        %v496 = vsel %vm395, 0.0, %v411
        %v497 = vsel %vm395, 0.0, %v414
        %v498 = vsel %vm395, 0.0, %v417
        %v499 = vsel %vm395, 0.0, %v420
        %v500 = vsel %vm395, 0.0, %v423
        %v501 = vsel %vm395, 0.0, %v426
        %v502 = vsel %vm395, 0.0, %v429
        %v503 = vsel %vm395, 0.0, %v432
        %v504 = vsel %vm395, 0.0, %v435
        %v505 = vsel %vm395, 0.0, %v438
        %v506 = vsel %vm395, 0.0, %v441
        %v507 = vsel %vm395, %v397, 0.0
        %v508 = vsel %vm395, %v400, 0.0
        %v509 = vsel %vm395, %v403, 0.0
        %v510 = vsel %vm395, %v406, 0.0
        %v511 = vsel %vm395, %v409, 0.0
        %v512 = vsel %vm395, %v412, 0.0
        %v513 = vsel %vm395, %v415, 0.0
        %v514 = vsel %vm395, %v418, 0.0
        %v515 = vsel %vm395, %v421, 0.0
        %v516 = vsel %vm395, %v424, 0.0
        %v517 = vsel %vm395, %v427, 0.0
        %v518 = vsel %vm395, %v430, 0.0
        %v519 = vsel %vm395, %v433, 0.0
        %v520 = vsel %vm395, %v436, 0.0
        %v521 = vsel %vm395, %v439, 0.0
        %v522 = vsel %vm395, %v442, 0.0
        %vm554 = vcmask 1046528
        %v555 = vrot.slane 0.0, 1
        %v556 = vsel %vm554, %v555, %v555
        %v557 = vrot.slane %v491, 1
        %v558 = vrot.slane %v398, 1
        %v559 = vsel %vm554, %v557, %v558
        %v560 = vrot.slane %v507, 1
        %v561 = vsel %vm554, %v558, %v560
        %v562 = vrot.slane %v492, 1
        %v563 = vrot.slane %v401, 1
        %v564 = vsel %vm554, %v562, %v563
        %v565 = vrot.slane %v508, 1
        %v566 = vsel %vm554, %v563, %v565
        %v567 = vrot.slane %v493, 1
        %v568 = vrot.slane %v404, 1
        %v569 = vsel %vm554, %v567, %v568
        %v570 = vrot.slane %v509, 1
        %v571 = vsel %vm554, %v568, %v570
        %v572 = vrot.slane %v494, 1
        %v573 = vrot.slane %v407, 1
        %v574 = vsel %vm554, %v572, %v573
        %v575 = vrot.slane %v510, 1
        %v576 = vsel %vm554, %v573, %v575
        %v577 = vrot.slane %v495, 1
        %v578 = vrot.slane %v410, 1
        %v579 = vsel %vm554, %v577, %v578
        %v580 = vrot.slane %v511, 1
        %v581 = vsel %vm554, %v578, %v580
        %v582 = vrot.slane %v496, 1
        %v583 = vrot.slane %v413, 1
        %v584 = vsel %vm554, %v582, %v583
        %v585 = vrot.slane %v512, 1
        %v586 = vsel %vm554, %v583, %v585
        %v587 = vrot.slane %v497, 1
        %v588 = vrot.slane %v416, 1
        %v589 = vsel %vm554, %v587, %v588
        %v590 = vrot.slane %v513, 1
        %v591 = vsel %vm554, %v588, %v590
        %v592 = vrot.slane %v498, 1
        %v593 = vrot.slane %v419, 1
        %v594 = vsel %vm554, %v592, %v593
        %v595 = vrot.slane %v514, 1
        %v596 = vsel %vm554, %v593, %v595
        %v597 = vrot.slane %v499, 1
        %v598 = vrot.slane %v422, 1
        %v599 = vsel %vm554, %v597, %v598
        %v600 = vrot.slane %v515, 1
        %v601 = vsel %vm554, %v598, %v600
        %v602 = vrot.slane %v500, 1
        %v603 = vrot.slane %v425, 1
        %v604 = vsel %vm554, %v602, %v603
        %v605 = vrot.slane %v516, 1
        %v606 = vsel %vm554, %v603, %v605
        %v607 = vrot.slane %v501, 1
        %v608 = vrot.slane %v428, 1
        %v609 = vsel %vm554, %v607, %v608
        %v610 = vrot.slane %v517, 1
        %v611 = vsel %vm554, %v608, %v610
        %v612 = vrot.slane %v502, 1
        %v613 = vrot.slane %v431, 1
        %v614 = vsel %vm554, %v612, %v613
        %v615 = vrot.slane %v518, 1
        %v616 = vsel %vm554, %v613, %v615
        %v617 = vrot.slane %v503, 1
        %v618 = vrot.slane %v434, 1
        %v619 = vsel %vm554, %v617, %v618
        %v620 = vrot.slane %v519, 1
        %v621 = vsel %vm554, %v618, %v620
        %v622 = vrot.slane %v504, 1
        %v623 = vrot.slane %v437, 1
        %v624 = vsel %vm554, %v622, %v623
        %v625 = vrot.slane %v520, 1
        %v626 = vsel %vm554, %v623, %v625
        %v627 = vrot.slane %v505, 1
        %v628 = vrot.slane %v440, 1
        %v629 = vsel %vm554, %v627, %v628
        %v630 = vrot.slane %v521, 1
        %v631 = vsel %vm554, %v628, %v630
        %vm632 = vcmask 1045504
        %v633 = vrot.slane 0.0, 2
        %v634 = vsel %vm632, %v633, %v633
        %v635 = vrot.slane %v491, 2
        %v636 = vrot.slane %v398, 2
        %v637 = vsel %vm632, %v635, %v636
        %v638 = vrot.slane %v507, 2
        %v639 = vsel %vm632, %v636, %v638
        %v640 = vrot.slane %v492, 2
        %v641 = vrot.slane %v401, 2
        %v642 = vsel %vm632, %v640, %v641
        %v643 = vrot.slane %v508, 2
        %v644 = vsel %vm632, %v641, %v643
        %v645 = vrot.slane %v493, 2
        %v646 = vrot.slane %v404, 2
        %v647 = vsel %vm632, %v645, %v646
        %v648 = vrot.slane %v509, 2
        %v649 = vsel %vm632, %v646, %v648
        %v650 = vrot.slane %v494, 2
        %v651 = vrot.slane %v407, 2
        %v652 = vsel %vm632, %v650, %v651
        %v653 = vrot.slane %v510, 2
        %v654 = vsel %vm632, %v651, %v653
        %v655 = vrot.slane %v495, 2
        %v656 = vrot.slane %v410, 2
        %v657 = vsel %vm632, %v655, %v656
        %v658 = vrot.slane %v511, 2
        %v659 = vsel %vm632, %v656, %v658
        %v660 = vrot.slane %v496, 2
        %v661 = vrot.slane %v413, 2
        %v662 = vsel %vm632, %v660, %v661
        %v663 = vrot.slane %v512, 2
        %v664 = vsel %vm632, %v661, %v663
        %v665 = vrot.slane %v497, 2
        %v666 = vrot.slane %v416, 2
        %v667 = vsel %vm632, %v665, %v666
        %v668 = vrot.slane %v513, 2
        %v669 = vsel %vm632, %v666, %v668
        %v670 = vrot.slane %v498, 2
        %v671 = vrot.slane %v419, 2
        %v672 = vsel %vm632, %v670, %v671
        %v673 = vrot.slane %v514, 2
        %v674 = vsel %vm632, %v671, %v673
        %v675 = vrot.slane %v499, 2
        %v676 = vrot.slane %v422, 2
        %v677 = vsel %vm632, %v675, %v676
        %v678 = vrot.slane %v515, 2
        %v679 = vsel %vm632, %v676, %v678
        %v680 = vrot.slane %v500, 2
        %v681 = vrot.slane %v425, 2
        %v682 = vsel %vm632, %v680, %v681
        %v683 = vrot.slane %v516, 2
        %v684 = vsel %vm632, %v681, %v683
        %v685 = vrot.slane %v501, 2
        %v686 = vrot.slane %v428, 2
        %v687 = vsel %vm632, %v685, %v686
        %v688 = vrot.slane %v517, 2
        %v689 = vsel %vm632, %v686, %v688
        %v690 = vrot.slane %v502, 2
        %v691 = vrot.slane %v431, 2
        %v692 = vsel %vm632, %v690, %v691
        %v693 = vrot.slane %v518, 2
        %v694 = vsel %vm632, %v691, %v693
        %v695 = vrot.slane %v503, 2
        %v696 = vrot.slane %v434, 2
        %v697 = vsel %vm632, %v695, %v696
        %v698 = vrot.slane %v519, 2
        %v699 = vsel %vm632, %v696, %v698
        %v700 = vrot.slane %v504, 2
        %v701 = vrot.slane %v437, 2
        %v702 = vsel %vm632, %v700, %v701
        %v703 = vrot.slane %v520, 2
        %v704 = vsel %vm632, %v701, %v703
        %v705 = vrot.slane %v505, 2
        %v706 = vrot.slane %v440, 2
        %v707 = vsel %vm632, %v705, %v706
        %v708 = vrot.slane %v521, 2
        %v709 = vsel %vm632, %v706, %v708
        %v712 = vrot.slane %v506, 1
        %v713 = vrot.slane %v443, 1
        %v714 = vsel %vm554, %v712, %v713
        %v715 = vrot.slane %v522, 1
        %v716 = vsel %vm554, %v713, %v715
        %v717 = vrot.slane %v506, 2
        %v718 = vrot.slane %v443, 2
        %v719 = vsel %vm632, %v717, %v718
        %v720 = vrot.slane %v522, 2
        %v721 = vsel %vm632, %v718, %v720
        %722 = vrot.lane.b32.xlu0 %v556, 1
        %v723 = vpop.permute.xlu0 %722
        %724 = vrot.lane.b32.xlu0 %v559, 1
        %v725 = vpop.permute.xlu0 %724
        %726 = vrot.lane.b32.xlu0 %v561, 1
        %v727 = vpop.permute.xlu0 %726
        %728 = vrot.lane.b32.xlu0 %v564, 1
        %v729 = vpop.permute.xlu0 %728
        %730 = vrot.lane.b32.xlu0 %v566, 1
        %v731 = vpop.permute.xlu0 %730
        %732 = vrot.lane.b32.xlu0 %v569, 1
        %v733 = vpop.permute.xlu0 %732
        %734 = vrot.lane.b32.xlu0 %v571, 1
        %v735 = vpop.permute.xlu0 %734
        %736 = vrot.lane.b32.xlu0 %v574, 1
        %v737 = vpop.permute.xlu0 %736
        %738 = vrot.lane.b32.xlu0 %v576, 1
        %v739 = vpop.permute.xlu0 %738
        %740 = vrot.lane.b32.xlu0 %v579, 1
        %v741 = vpop.permute.xlu0 %740
        %742 = vrot.lane.b32.xlu0 %v581, 1
        %v743 = vpop.permute.xlu0 %742
        %744 = vrot.lane.b32.xlu0 %v584, 1
        %v745 = vpop.permute.xlu0 %744
        %746 = vrot.lane.b32.xlu0 %v586, 1
        %v747 = vpop.permute.xlu0 %746
        %748 = vrot.lane.b32.xlu0 %v589, 1
        %v749 = vpop.permute.xlu0 %748
        %750 = vrot.lane.b32.xlu0 %v591, 1
        %v751 = vpop.permute.xlu0 %750
        %752 = vrot.lane.b32.xlu0 %v594, 1
        %v753 = vpop.permute.xlu0 %752
        %754 = vrot.lane.b32.xlu0 %v596, 1
        %v755 = vpop.permute.xlu0 %754
        %756 = vrot.lane.b32.xlu0 %v599, 1
        %v757 = vpop.permute.xlu0 %756
        %758 = vrot.lane.b32.xlu0 %v601, 1
        %v759 = vpop.permute.xlu0 %758
        %760 = vrot.lane.b32.xlu0 %v604, 1
        %v761 = vpop.permute.xlu0 %760
        %762 = vrot.lane.b32.xlu0 %v606, 1
        %v763 = vpop.permute.xlu0 %762
        %764 = vrot.lane.b32.xlu0 %v609, 1
        %v765 = vpop.permute.xlu0 %764
        %766 = vrot.lane.b32.xlu0 %v611, 1
        %v767 = vpop.permute.xlu0 %766
        %768 = vrot.lane.b32.xlu0 %v614, 1
        %v769 = vpop.permute.xlu0 %768
        %770 = vrot.lane.b32.xlu0 %v616, 1
        %v771 = vpop.permute.xlu0 %770
        %772 = vrot.lane.b32.xlu0 %v619, 1
        %v773 = vpop.permute.xlu0 %772
        %774 = vrot.lane.b32.xlu0 %v621, 1
        %v775 = vpop.permute.xlu0 %774
        %776 = vrot.lane.b32.xlu0 %v624, 1
        %v777 = vpop.permute.xlu0 %776
        %778 = vrot.lane.b32.xlu0 %v626, 1
        %v779 = vpop.permute.xlu0 %778
        %780 = vrot.lane.b32.xlu0 %v629, 1
        %v781 = vpop.permute.xlu0 %780
        %782 = vrot.lane.b32.xlu0 %v631, 1
        %v783 = vpop.permute.xlu0 %782
        %815 = vrot.lane.b32.xlu0 %v634, 2
        %v816 = vpop.permute.xlu0 %815
        %817 = vrot.lane.b32.xlu0 %v637, 2
        %v818 = vpop.permute.xlu0 %817
        %819 = vrot.lane.b32.xlu0 %v639, 2
        %v820 = vpop.permute.xlu0 %819
        %821 = vrot.lane.b32.xlu0 %v642, 2
        %v822 = vpop.permute.xlu0 %821
        %823 = vrot.lane.b32.xlu0 %v644, 2
        %v824 = vpop.permute.xlu0 %823
        %825 = vrot.lane.b32.xlu0 %v647, 2
        %v826 = vpop.permute.xlu0 %825
        %827 = vrot.lane.b32.xlu0 %v649, 2
        %v828 = vpop.permute.xlu0 %827
        %829 = vrot.lane.b32.xlu0 %v652, 2
        %v830 = vpop.permute.xlu0 %829
        %831 = vrot.lane.b32.xlu0 %v654, 2
        %v832 = vpop.permute.xlu0 %831
        %833 = vrot.lane.b32.xlu0 %v657, 2
        %v834 = vpop.permute.xlu0 %833
        %835 = vrot.lane.b32.xlu0 %v659, 2
        %v836 = vpop.permute.xlu0 %835
        %837 = vrot.lane.b32.xlu0 %v662, 2
        %v838 = vpop.permute.xlu0 %837
        %839 = vrot.lane.b32.xlu0 %v664, 2
        %v840 = vpop.permute.xlu0 %839
        %841 = vrot.lane.b32.xlu0 %v667, 2
        %v842 = vpop.permute.xlu0 %841
        %843 = vrot.lane.b32.xlu0 %v669, 2
        %v844 = vpop.permute.xlu0 %843
        %845 = vrot.lane.b32.xlu0 %v672, 2
        %v846 = vpop.permute.xlu0 %845
        %847 = vrot.lane.b32.xlu0 %v674, 2
        %v848 = vpop.permute.xlu0 %847
        %849 = vrot.lane.b32.xlu0 %v677, 2
        %v850 = vpop.permute.xlu0 %849
        %851 = vrot.lane.b32.xlu0 %v679, 2
        %v852 = vpop.permute.xlu0 %851
        %853 = vrot.lane.b32.xlu0 %v682, 2
        %v854 = vpop.permute.xlu0 %853
        %855 = vrot.lane.b32.xlu0 %v684, 2
        %v856 = vpop.permute.xlu0 %855
        %857 = vrot.lane.b32.xlu0 %v687, 2
        %v858 = vpop.permute.xlu0 %857
        %859 = vrot.lane.b32.xlu0 %v689, 2
        %v860 = vpop.permute.xlu0 %859
        %861 = vrot.lane.b32.xlu0 %v692, 2
        %v862 = vpop.permute.xlu0 %861
        %863 = vrot.lane.b32.xlu0 %v694, 2
        %v864 = vpop.permute.xlu0 %863
        %865 = vrot.lane.b32.xlu0 %v697, 2
        %v866 = vpop.permute.xlu0 %865
        %867 = vrot.lane.b32.xlu0 %v699, 2
        %v868 = vpop.permute.xlu0 %867
        %869 = vrot.lane.b32.xlu0 %v702, 2
        %v870 = vpop.permute.xlu0 %869
        %871 = vrot.lane.b32.xlu0 %v704, 2
        %v872 = vpop.permute.xlu0 %871
        %873 = vrot.lane.b32.xlu0 %v707, 2
        %v874 = vpop.permute.xlu0 %873
        %875 = vrot.lane.b32.xlu0 %v709, 2
        %v876 = vpop.permute.xlu0 %875
        %908 = vrot.lane.b32.xlu0 %v491, 3
        %v909 = vpop.permute.xlu0 %908
        %910 = vrot.lane.b32.xlu0 %v398, 3
        %v911 = vpop.permute.xlu0 %910
        %912 = vrot.lane.b32.xlu0 %v492, 3
        %v913 = vpop.permute.xlu0 %912
        %914 = vrot.lane.b32.xlu0 %v401, 3
        %v915 = vpop.permute.xlu0 %914
        %916 = vrot.lane.b32.xlu0 %v493, 3
        %v917 = vpop.permute.xlu0 %916
        %918 = vrot.lane.b32.xlu0 %v404, 3
        %v919 = vpop.permute.xlu0 %918
        %920 = vrot.lane.b32.xlu0 %v494, 3
        %v921 = vpop.permute.xlu0 %920
        %922 = vrot.lane.b32.xlu0 %v407, 3
        %v923 = vpop.permute.xlu0 %922
        %924 = vrot.lane.b32.xlu0 %v495, 3
        %v925 = vpop.permute.xlu0 %924
        %926 = vrot.lane.b32.xlu0 %v410, 3
        %v927 = vpop.permute.xlu0 %926
        %928 = vrot.lane.b32.xlu0 %v496, 3
        %v929 = vpop.permute.xlu0 %928
        %930 = vrot.lane.b32.xlu0 %v413, 3
        %v931 = vpop.permute.xlu0 %930
        %932 = vrot.lane.b32.xlu0 %v497, 3
        %v933 = vpop.permute.xlu0 %932
        %934 = vrot.lane.b32.xlu0 %v416, 3
        %v935 = vpop.permute.xlu0 %934
        %936 = vrot.lane.b32.xlu0 %v498, 3
        %v937 = vpop.permute.xlu0 %936
        %938 = vrot.lane.b32.xlu0 %v419, 3
        %v939 = vpop.permute.xlu0 %938
        %940 = vrot.lane.b32.xlu0 %v499, 3
        %v941 = vpop.permute.xlu0 %940
        %942 = vrot.lane.b32.xlu0 %v422, 3
        %v943 = vpop.permute.xlu0 %942
        %944 = vrot.lane.b32.xlu0 %v500, 3
        %v945 = vpop.permute.xlu0 %944
        %946 = vrot.lane.b32.xlu0 %v425, 3
        %v947 = vpop.permute.xlu0 %946
        %948 = vrot.lane.b32.xlu0 %v501, 3
        %v949 = vpop.permute.xlu0 %948
        %950 = vrot.lane.b32.xlu0 %v428, 3
        %v951 = vpop.permute.xlu0 %950
        %952 = vrot.lane.b32.xlu0 %v502, 3
        %v953 = vpop.permute.xlu0 %952
        %954 = vrot.lane.b32.xlu0 %v431, 3
        %v955 = vpop.permute.xlu0 %954
        %956 = vrot.lane.b32.xlu0 %v503, 3
        %v957 = vpop.permute.xlu0 %956
        %958 = vrot.lane.b32.xlu0 %v434, 3
        %v959 = vpop.permute.xlu0 %958
        %960 = vrot.lane.b32.xlu0 %v504, 3
        %v961 = vpop.permute.xlu0 %960
        %962 = vrot.lane.b32.xlu0 %v437, 3
        %v963 = vpop.permute.xlu0 %962
        %964 = vrot.lane.b32.xlu0 %v505, 3
        %v965 = vpop.permute.xlu0 %964
        %966 = vrot.lane.b32.xlu0 %v440, 3
        %v967 = vpop.permute.xlu0 %966
        %968 = vrot.lane.b32.xlu0 %v506, 3
        %v969 = vpop.permute.xlu0 %968
        %970 = vrot.lane.b32.xlu0 %v443, 3
        %v971 = vpop.permute.xlu0 %970
        %1004 = vrot.lane.b32.xlu0 %v559, 4
        %v1005 = vpop.permute.xlu0 %1004
        %1006 = vrot.lane.b32.xlu0 %v561, 4
        %v1007 = vpop.permute.xlu0 %1006
        %1008 = vrot.lane.b32.xlu0 %v564, 4
        %v1009 = vpop.permute.xlu0 %1008
        %1010 = vrot.lane.b32.xlu0 %v566, 4
        %v1011 = vpop.permute.xlu0 %1010
        %1012 = vrot.lane.b32.xlu0 %v569, 4
        %v1013 = vpop.permute.xlu0 %1012
        %1014 = vrot.lane.b32.xlu0 %v571, 4
        %v1015 = vpop.permute.xlu0 %1014
        %1016 = vrot.lane.b32.xlu0 %v574, 4
        %v1017 = vpop.permute.xlu0 %1016
        %1018 = vrot.lane.b32.xlu0 %v576, 4
        %v1019 = vpop.permute.xlu0 %1018
        %1020 = vrot.lane.b32.xlu0 %v579, 4
        %v1021 = vpop.permute.xlu0 %1020
        %1022 = vrot.lane.b32.xlu0 %v581, 4
        %v1023 = vpop.permute.xlu0 %1022
        %1024 = vrot.lane.b32.xlu0 %v584, 4
        %v1025 = vpop.permute.xlu0 %1024
        %1026 = vrot.lane.b32.xlu0 %v586, 4
        %v1027 = vpop.permute.xlu0 %1026
        %1028 = vrot.lane.b32.xlu0 %v589, 4
        %v1029 = vpop.permute.xlu0 %1028
        %1030 = vrot.lane.b32.xlu0 %v591, 4
        %v1031 = vpop.permute.xlu0 %1030
        %1032 = vrot.lane.b32.xlu0 %v594, 4
        %v1033 = vpop.permute.xlu0 %1032
        %1034 = vrot.lane.b32.xlu0 %v596, 4
        %v1035 = vpop.permute.xlu0 %1034
        %1036 = vrot.lane.b32.xlu0 %v599, 4
        %v1037 = vpop.permute.xlu0 %1036
        %1038 = vrot.lane.b32.xlu0 %v601, 4
        %v1039 = vpop.permute.xlu0 %1038
        %1040 = vrot.lane.b32.xlu0 %v604, 4
        %v1041 = vpop.permute.xlu0 %1040
        %1042 = vrot.lane.b32.xlu0 %v606, 4
        %v1043 = vpop.permute.xlu0 %1042
        %1044 = vrot.lane.b32.xlu0 %v609, 4
        %v1045 = vpop.permute.xlu0 %1044
        %1046 = vrot.lane.b32.xlu0 %v611, 4
        %v1047 = vpop.permute.xlu0 %1046
        %1048 = vrot.lane.b32.xlu0 %v614, 4
        %v1049 = vpop.permute.xlu0 %1048
        %1050 = vrot.lane.b32.xlu0 %v616, 4
        %v1051 = vpop.permute.xlu0 %1050
        %1052 = vrot.lane.b32.xlu0 %v619, 4
        %v1053 = vpop.permute.xlu0 %1052
        %1054 = vrot.lane.b32.xlu0 %v621, 4
        %v1055 = vpop.permute.xlu0 %1054
        %1056 = vrot.lane.b32.xlu0 %v624, 4
        %v1057 = vpop.permute.xlu0 %1056
        %1058 = vrot.lane.b32.xlu0 %v626, 4
        %v1059 = vpop.permute.xlu0 %1058
        %1060 = vrot.lane.b32.xlu0 %v629, 4
        %v1061 = vpop.permute.xlu0 %1060
        %1062 = vrot.lane.b32.xlu0 %v631, 4
        %v1063 = vpop.permute.xlu0 %1062
        %1064 = vrot.lane.b32.xlu0 %v714, 4
        %v1065 = vpop.permute.xlu0 %1064
        %1066 = vrot.lane.b32.xlu0 %v716, 4
        %v1067 = vpop.permute.xlu0 %1066
        %1100 = vrot.lane.b32.xlu0 %v637, 5
        %v1101 = vpop.permute.xlu0 %1100
        %1102 = vrot.lane.b32.xlu0 %v639, 5
        %v1103 = vpop.permute.xlu0 %1102
        %1104 = vrot.lane.b32.xlu0 %v642, 5
        %v1105 = vpop.permute.xlu0 %1104
        %1106 = vrot.lane.b32.xlu0 %v644, 5
        %v1107 = vpop.permute.xlu0 %1106
        %1108 = vrot.lane.b32.xlu0 %v647, 5
        %v1109 = vpop.permute.xlu0 %1108
        %1110 = vrot.lane.b32.xlu0 %v649, 5
        %v1111 = vpop.permute.xlu0 %1110
        %1112 = vrot.lane.b32.xlu0 %v652, 5
        %v1113 = vpop.permute.xlu0 %1112
        %1114 = vrot.lane.b32.xlu0 %v654, 5
        %v1115 = vpop.permute.xlu0 %1114
        %1116 = vrot.lane.b32.xlu0 %v657, 5
        %v1117 = vpop.permute.xlu0 %1116
        %1118 = vrot.lane.b32.xlu0 %v659, 5
        %v1119 = vpop.permute.xlu0 %1118
        %1120 = vrot.lane.b32.xlu0 %v662, 5
        %v1121 = vpop.permute.xlu0 %1120
        %1122 = vrot.lane.b32.xlu0 %v664, 5
        %v1123 = vpop.permute.xlu0 %1122
        %1124 = vrot.lane.b32.xlu0 %v667, 5
        %v1125 = vpop.permute.xlu0 %1124
        %1126 = vrot.lane.b32.xlu0 %v669, 5
        %v1127 = vpop.permute.xlu0 %1126
        %1128 = vrot.lane.b32.xlu0 %v672, 5
        %v1129 = vpop.permute.xlu0 %1128
        %1130 = vrot.lane.b32.xlu0 %v674, 5
        %v1131 = vpop.permute.xlu0 %1130
        %1132 = vrot.lane.b32.xlu0 %v677, 5
        %v1133 = vpop.permute.xlu0 %1132
        %1134 = vrot.lane.b32.xlu0 %v679, 5
        %v1135 = vpop.permute.xlu0 %1134
        %1136 = vrot.lane.b32.xlu0 %v682, 5
        %v1137 = vpop.permute.xlu0 %1136
        %1138 = vrot.lane.b32.xlu0 %v684, 5
        %v1139 = vpop.permute.xlu0 %1138
        %1140 = vrot.lane.b32.xlu0 %v687, 5
        %v1141 = vpop.permute.xlu0 %1140
        %1142 = vrot.lane.b32.xlu0 %v689, 5
        %v1143 = vpop.permute.xlu0 %1142
        %1144 = vrot.lane.b32.xlu0 %v692, 5
        %v1145 = vpop.permute.xlu0 %1144
        %1146 = vrot.lane.b32.xlu0 %v694, 5
        %v1147 = vpop.permute.xlu0 %1146
        %1148 = vrot.lane.b32.xlu0 %v697, 5
        %v1149 = vpop.permute.xlu0 %1148
        %1150 = vrot.lane.b32.xlu0 %v699, 5
        %v1151 = vpop.permute.xlu0 %1150
        %1152 = vrot.lane.b32.xlu0 %v702, 5
        %v1153 = vpop.permute.xlu0 %1152
        %1154 = vrot.lane.b32.xlu0 %v704, 5
        %v1155 = vpop.permute.xlu0 %1154
        %1156 = vrot.lane.b32.xlu0 %v707, 5
        %v1157 = vpop.permute.xlu0 %1156
        %1158 = vrot.lane.b32.xlu0 %v709, 5
        %v1159 = vpop.permute.xlu0 %1158
        %1160 = vrot.lane.b32.xlu0 %v719, 5
        %v1161 = vpop.permute.xlu0 %1160
        %1162 = vrot.lane.b32.xlu0 %v721, 5
        %v1163 = vpop.permute.xlu0 %1162
        %1196 = vrot.lane.b32.xlu0 %v492, 6
        %v1197 = vpop.permute.xlu0 %1196
        %1198 = vrot.lane.b32.xlu0 %v401, 6
        %v1199 = vpop.permute.xlu0 %1198
        %1200 = vrot.lane.b32.xlu0 %v493, 6
        %v1201 = vpop.permute.xlu0 %1200
        %1202 = vrot.lane.b32.xlu0 %v404, 6
        %v1203 = vpop.permute.xlu0 %1202
        %1204 = vrot.lane.b32.xlu0 %v494, 6
        %v1205 = vpop.permute.xlu0 %1204
        %1206 = vrot.lane.b32.xlu0 %v407, 6
        %v1207 = vpop.permute.xlu0 %1206
        %1208 = vrot.lane.b32.xlu0 %v495, 6
        %v1209 = vpop.permute.xlu0 %1208
        %1210 = vrot.lane.b32.xlu0 %v410, 6
        %v1211 = vpop.permute.xlu0 %1210
        %1212 = vrot.lane.b32.xlu0 %v496, 6
        %v1213 = vpop.permute.xlu0 %1212
        %1214 = vrot.lane.b32.xlu0 %v413, 6
        %v1215 = vpop.permute.xlu0 %1214
        %1216 = vrot.lane.b32.xlu0 %v497, 6
        %v1217 = vpop.permute.xlu0 %1216
        %1218 = vrot.lane.b32.xlu0 %v416, 6
        %v1219 = vpop.permute.xlu0 %1218
        %1220 = vrot.lane.b32.xlu0 %v498, 6
        %v1221 = vpop.permute.xlu0 %1220
        %1222 = vrot.lane.b32.xlu0 %v419, 6
        %v1223 = vpop.permute.xlu0 %1222
        %1224 = vrot.lane.b32.xlu0 %v499, 6
        %v1225 = vpop.permute.xlu0 %1224
        %1226 = vrot.lane.b32.xlu0 %v422, 6
        %v1227 = vpop.permute.xlu0 %1226
        %1228 = vrot.lane.b32.xlu0 %v500, 6
        %v1229 = vpop.permute.xlu0 %1228
        %1230 = vrot.lane.b32.xlu0 %v425, 6
        %v1231 = vpop.permute.xlu0 %1230
        %1232 = vrot.lane.b32.xlu0 %v501, 6
        %v1233 = vpop.permute.xlu0 %1232
        %1234 = vrot.lane.b32.xlu0 %v428, 6
        %v1235 = vpop.permute.xlu0 %1234
        %1236 = vrot.lane.b32.xlu0 %v502, 6
        %v1237 = vpop.permute.xlu0 %1236
        %1238 = vrot.lane.b32.xlu0 %v431, 6
        %v1239 = vpop.permute.xlu0 %1238
        %1240 = vrot.lane.b32.xlu0 %v503, 6
        %v1241 = vpop.permute.xlu0 %1240
        %1242 = vrot.lane.b32.xlu0 %v434, 6
        %v1243 = vpop.permute.xlu0 %1242
        %1244 = vrot.lane.b32.xlu0 %v504, 6
        %v1245 = vpop.permute.xlu0 %1244
        %1246 = vrot.lane.b32.xlu0 %v437, 6
        %v1247 = vpop.permute.xlu0 %1246
        %1248 = vrot.lane.b32.xlu0 %v505, 6
        %v1249 = vpop.permute.xlu0 %1248
        %1250 = vrot.lane.b32.xlu0 %v440, 6
        %v1251 = vpop.permute.xlu0 %1250
        %1252 = vrot.lane.b32.xlu0 %v506, 6
        %v1253 = vpop.permute.xlu0 %1252
        %1254 = vrot.lane.b32.xlu0 %v443, 6
        %v1255 = vpop.permute.xlu0 %1254
        %1256 = vrot.lane.b32.xlu0 0.0, 6
        %v1257 = vpop.permute.xlu0 %1256
        %1289 = vrot.lane.b32.xlu0 %v564, 7
        %v1290 = vpop.permute.xlu0 %1289
        %1291 = vrot.lane.b32.xlu0 %v566, 7
        %v1292 = vpop.permute.xlu0 %1291
        %1293 = vrot.lane.b32.xlu0 %v569, 7
        %v1294 = vpop.permute.xlu0 %1293
        %1295 = vrot.lane.b32.xlu0 %v571, 7
        %v1296 = vpop.permute.xlu0 %1295
        %1297 = vrot.lane.b32.xlu0 %v574, 7
        %v1298 = vpop.permute.xlu0 %1297
        %1299 = vrot.lane.b32.xlu0 %v576, 7
        %v1300 = vpop.permute.xlu0 %1299
        %1301 = vrot.lane.b32.xlu0 %v579, 7
        %v1302 = vpop.permute.xlu0 %1301
        %1303 = vrot.lane.b32.xlu0 %v581, 7
        %v1304 = vpop.permute.xlu0 %1303
        %1305 = vrot.lane.b32.xlu0 %v584, 7
        %v1306 = vpop.permute.xlu0 %1305
        %1307 = vrot.lane.b32.xlu0 %v586, 7
        %v1308 = vpop.permute.xlu0 %1307
        %1309 = vrot.lane.b32.xlu0 %v589, 7
        %v1310 = vpop.permute.xlu0 %1309
        %1311 = vrot.lane.b32.xlu0 %v591, 7
        %v1312 = vpop.permute.xlu0 %1311
        %1313 = vrot.lane.b32.xlu0 %v594, 7
        %v1314 = vpop.permute.xlu0 %1313
        %1315 = vrot.lane.b32.xlu0 %v596, 7
        %v1316 = vpop.permute.xlu0 %1315
        %1317 = vrot.lane.b32.xlu0 %v599, 7
        %v1318 = vpop.permute.xlu0 %1317
        %1319 = vrot.lane.b32.xlu0 %v601, 7
        %v1320 = vpop.permute.xlu0 %1319
        %1321 = vrot.lane.b32.xlu0 %v604, 7
        %v1322 = vpop.permute.xlu0 %1321
        %1323 = vrot.lane.b32.xlu0 %v606, 7
        %v1324 = vpop.permute.xlu0 %1323
        %1325 = vrot.lane.b32.xlu0 %v609, 7
        %v1326 = vpop.permute.xlu0 %1325
        %1327 = vrot.lane.b32.xlu0 %v611, 7
        %v1328 = vpop.permute.xlu0 %1327
        %1329 = vrot.lane.b32.xlu0 %v614, 7
        %v1330 = vpop.permute.xlu0 %1329
        %1331 = vrot.lane.b32.xlu0 %v616, 7
        %v1332 = vpop.permute.xlu0 %1331
        %1333 = vrot.lane.b32.xlu0 %v619, 7
        %v1334 = vpop.permute.xlu0 %1333
        %1335 = vrot.lane.b32.xlu0 %v621, 7
        %v1336 = vpop.permute.xlu0 %1335
        %1337 = vrot.lane.b32.xlu0 %v624, 7
        %v1338 = vpop.permute.xlu0 %1337
        %1339 = vrot.lane.b32.xlu0 %v626, 7
        %v1340 = vpop.permute.xlu0 %1339
        %1341 = vrot.lane.b32.xlu0 %v629, 7
        %v1342 = vpop.permute.xlu0 %1341
        %1343 = vrot.lane.b32.xlu0 %v631, 7
        %v1344 = vpop.permute.xlu0 %1343
        %1345 = vrot.lane.b32.xlu0 %v714, 7
        %v1346 = vpop.permute.xlu0 %1345
        %1347 = vrot.lane.b32.xlu0 %v716, 7
        %v1348 = vpop.permute.xlu0 %1347
        %1349 = vrot.lane.b32.xlu0 %v556, 7
        %v1350 = vpop.permute.xlu0 %1349
        %1382 = vrot.lane.b32.xlu0 %v642, 8
        %v1383 = vpop.permute.xlu0 %1382
        %1384 = vrot.lane.b32.xlu0 %v644, 8
        %v1385 = vpop.permute.xlu0 %1384
        %1386 = vrot.lane.b32.xlu0 %v647, 8
        %v1387 = vpop.permute.xlu0 %1386
        %1388 = vrot.lane.b32.xlu0 %v649, 8
        %v1389 = vpop.permute.xlu0 %1388
        %1390 = vrot.lane.b32.xlu0 %v652, 8
        %v1391 = vpop.permute.xlu0 %1390
        %1392 = vrot.lane.b32.xlu0 %v654, 8
        %v1393 = vpop.permute.xlu0 %1392
        %1394 = vrot.lane.b32.xlu0 %v657, 8
        %v1395 = vpop.permute.xlu0 %1394
        %1396 = vrot.lane.b32.xlu0 %v659, 8
        %v1397 = vpop.permute.xlu0 %1396
        %1398 = vrot.lane.b32.xlu0 %v662, 8
        %v1399 = vpop.permute.xlu0 %1398
        %1400 = vrot.lane.b32.xlu0 %v664, 8
        %v1401 = vpop.permute.xlu0 %1400
        %1402 = vrot.lane.b32.xlu0 %v667, 8
        %v1403 = vpop.permute.xlu0 %1402
        %1404 = vrot.lane.b32.xlu0 %v669, 8
        %v1405 = vpop.permute.xlu0 %1404
        %1406 = vrot.lane.b32.xlu0 %v672, 8
        %v1407 = vpop.permute.xlu0 %1406
        %1408 = vrot.lane.b32.xlu0 %v674, 8
        %v1409 = vpop.permute.xlu0 %1408
        %1410 = vrot.lane.b32.xlu0 %v677, 8
        %v1411 = vpop.permute.xlu0 %1410
        %1412 = vrot.lane.b32.xlu0 %v679, 8
        %v1413 = vpop.permute.xlu0 %1412
        %1414 = vrot.lane.b32.xlu0 %v682, 8
        %v1415 = vpop.permute.xlu0 %1414
        %1416 = vrot.lane.b32.xlu0 %v684, 8
        %v1417 = vpop.permute.xlu0 %1416
        %1418 = vrot.lane.b32.xlu0 %v687, 8
        %v1419 = vpop.permute.xlu0 %1418
        %1420 = vrot.lane.b32.xlu0 %v689, 8
        %v1421 = vpop.permute.xlu0 %1420
        %1422 = vrot.lane.b32.xlu0 %v692, 8
        %v1423 = vpop.permute.xlu0 %1422
        %1424 = vrot.lane.b32.xlu0 %v694, 8
        %v1425 = vpop.permute.xlu0 %1424
        %1426 = vrot.lane.b32.xlu0 %v697, 8
        %v1427 = vpop.permute.xlu0 %1426
        %1428 = vrot.lane.b32.xlu0 %v699, 8
        %v1429 = vpop.permute.xlu0 %1428
        %1430 = vrot.lane.b32.xlu0 %v702, 8
        %v1431 = vpop.permute.xlu0 %1430
        %1432 = vrot.lane.b32.xlu0 %v704, 8
        %v1433 = vpop.permute.xlu0 %1432
        %1434 = vrot.lane.b32.xlu0 %v707, 8
        %v1435 = vpop.permute.xlu0 %1434
        %1436 = vrot.lane.b32.xlu0 %v709, 8
        %v1437 = vpop.permute.xlu0 %1436
        %1438 = vrot.lane.b32.xlu0 %v719, 8
        %v1439 = vpop.permute.xlu0 %1438
        %1440 = vrot.lane.b32.xlu0 %v721, 8
        %v1441 = vpop.permute.xlu0 %1440
        %1442 = vrot.lane.b32.xlu0 %v634, 8
        %v1443 = vpop.permute.xlu0 %1442
        %vm1475 = vcmask 7168
        %v1476 = vsel %vm1475, 0.0, %v723
        %v1477 = vsel %vm1475, %v491, %v725
        %v1478 = vsel %vm1475, %v398, %v727
        %v1479 = vsel %vm1475, %v492, %v729
        %v1480 = vsel %vm1475, %v401, %v731
        %v1481 = vsel %vm1475, %v493, %v733
        %v1482 = vsel %vm1475, %v404, %v735
        %v1483 = vsel %vm1475, %v494, %v737
        %v1484 = vsel %vm1475, %v407, %v739
        %v1485 = vsel %vm1475, %v495, %v741
        %v1486 = vsel %vm1475, %v410, %v743
        %v1487 = vsel %vm1475, %v496, %v745
        %v1488 = vsel %vm1475, %v413, %v747
        %v1489 = vsel %vm1475, %v497, %v749
        %v1490 = vsel %vm1475, %v416, %v751
        %v1491 = vsel %vm1475, %v498, %v753
        %v1492 = vsel %vm1475, %v419, %v755
        %v1493 = vsel %vm1475, %v499, %v757
        %v1494 = vsel %vm1475, %v422, %v759
        %v1495 = vsel %vm1475, %v500, %v761
        %v1496 = vsel %vm1475, %v425, %v763
        %v1497 = vsel %vm1475, %v501, %v765
        %v1498 = vsel %vm1475, %v428, %v767
        %v1499 = vsel %vm1475, %v502, %v769
        %v1500 = vsel %vm1475, %v431, %v771
        %v1501 = vsel %vm1475, %v503, %v773
        %v1502 = vsel %vm1475, %v434, %v775
        %v1503 = vsel %vm1475, %v504, %v777
        %v1504 = vsel %vm1475, %v437, %v779
        %v1505 = vsel %vm1475, %v505, %v781
        %v1506 = vsel %vm1475, %v440, %v783
        %vm1507 = vcmask 15360
        %v1508 = vsel %vm1507, %v1476, %v816
        %v1509 = vsel %vm1507, %v1477, %v818
        %v1510 = vsel %vm1507, %v1478, %v820
        %v1511 = vsel %vm1507, %v1479, %v822
        %v1512 = vsel %vm1507, %v1480, %v824
        %v1513 = vsel %vm1507, %v1481, %v826
        %v1514 = vsel %vm1507, %v1482, %v828
        %v1515 = vsel %vm1507, %v1483, %v830
        %v1516 = vsel %vm1507, %v1484, %v832
        %v1517 = vsel %vm1507, %v1485, %v834
        %v1518 = vsel %vm1507, %v1486, %v836
        %v1519 = vsel %vm1507, %v1487, %v838
        %v1520 = vsel %vm1507, %v1488, %v840
        %v1521 = vsel %vm1507, %v1489, %v842
        %v1522 = vsel %vm1507, %v1490, %v844
        %v1523 = vsel %vm1507, %v1491, %v846
        %v1524 = vsel %vm1507, %v1492, %v848
        %v1525 = vsel %vm1507, %v1493, %v850
        %v1526 = vsel %vm1507, %v1494, %v852
        %v1527 = vsel %vm1507, %v1495, %v854
        %v1528 = vsel %vm1507, %v1496, %v856
        %v1529 = vsel %vm1507, %v1497, %v858
        %v1530 = vsel %vm1507, %v1498, %v860
        %v1531 = vsel %vm1507, %v1499, %v862
        %v1532 = vsel %vm1507, %v1500, %v864
        %v1533 = vsel %vm1507, %v1501, %v866
        %v1534 = vsel %vm1507, %v1502, %v868
        %v1535 = vsel %vm1507, %v1503, %v870
        %v1536 = vsel %vm1507, %v1504, %v872
        %v1537 = vsel %vm1507, %v1505, %v874
        %v1538 = vsel %vm1507, %v1506, %v876
        %vm1539 = vcmask 23552
        %v1540 = vsel %vm1539, %v1508, %v909
        %v1541 = vsel %vm1539, %v1508, %v911
        %v1542 = vsel %vm1539, %v1509, %v913
        %v1543 = vsel %vm1539, %v1510, %v915
        %v1544 = vsel %vm1539, %v1511, %v917
        %v1545 = vsel %vm1539, %v1512, %v919
        %v1546 = vsel %vm1539, %v1513, %v921
        %v1547 = vsel %vm1539, %v1514, %v923
        %v1548 = vsel %vm1539, %v1515, %v925
        %v1549 = vsel %vm1539, %v1516, %v927
        %v1550 = vsel %vm1539, %v1517, %v929
        %v1551 = vsel %vm1539, %v1518, %v931
        %v1552 = vsel %vm1539, %v1519, %v933
        %v1553 = vsel %vm1539, %v1520, %v935
        %v1554 = vsel %vm1539, %v1521, %v937
        %v1555 = vsel %vm1539, %v1522, %v939
        %v1556 = vsel %vm1539, %v1523, %v941
        %v1557 = vsel %vm1539, %v1524, %v943
        %v1558 = vsel %vm1539, %v1525, %v945
        %v1559 = vsel %vm1539, %v1526, %v947
        %v1560 = vsel %vm1539, %v1527, %v949
        %v1561 = vsel %vm1539, %v1528, %v951
        %v1562 = vsel %vm1539, %v1529, %v953
        %v1563 = vsel %vm1539, %v1530, %v955
        %v1564 = vsel %vm1539, %v1531, %v957
        %v1565 = vsel %vm1539, %v1532, %v959
        %v1566 = vsel %vm1539, %v1533, %v961
        %v1567 = vsel %vm1539, %v1534, %v963
        %v1568 = vsel %vm1539, %v1535, %v965
        %v1569 = vsel %vm1539, %v1536, %v967
        %v1570 = vsel %vm1539, %v1537, %v969
        %v1571 = vsel %vm1539, %v1538, %v971
        %vm1572 = vcmask 31744
        %v1573 = vsel %vm1572, %v1540, %v1005
        %v1574 = vsel %vm1572, %v1541, %v1007
        %v1575 = vsel %vm1572, %v1542, %v1009
        %v1576 = vsel %vm1572, %v1543, %v1011
        %v1577 = vsel %vm1572, %v1544, %v1013
        %v1578 = vsel %vm1572, %v1545, %v1015
        %v1579 = vsel %vm1572, %v1546, %v1017
        %v1580 = vsel %vm1572, %v1547, %v1019
        %v1581 = vsel %vm1572, %v1548, %v1021
        %v1582 = vsel %vm1572, %v1549, %v1023
        %v1583 = vsel %vm1572, %v1550, %v1025
        %v1584 = vsel %vm1572, %v1551, %v1027
        %v1585 = vsel %vm1572, %v1552, %v1029
        %v1586 = vsel %vm1572, %v1553, %v1031
        %v1587 = vsel %vm1572, %v1554, %v1033
        %v1588 = vsel %vm1572, %v1555, %v1035
        %v1589 = vsel %vm1572, %v1556, %v1037
        %v1590 = vsel %vm1572, %v1557, %v1039
        %v1591 = vsel %vm1572, %v1558, %v1041
        %v1592 = vsel %vm1572, %v1559, %v1043
        %v1593 = vsel %vm1572, %v1560, %v1045
        %v1594 = vsel %vm1572, %v1561, %v1047
        %v1595 = vsel %vm1572, %v1562, %v1049
        %v1596 = vsel %vm1572, %v1563, %v1051
        %v1597 = vsel %vm1572, %v1564, %v1053
        %v1598 = vsel %vm1572, %v1565, %v1055
        %v1599 = vsel %vm1572, %v1566, %v1057
        %v1600 = vsel %vm1572, %v1567, %v1059
        %v1601 = vsel %vm1572, %v1568, %v1061
        %v1602 = vsel %vm1572, %v1569, %v1063
        %v1603 = vsel %vm1572, %v1570, %v1065
        %v1604 = vsel %vm1572, %v1571, %v1067
        %vm1605 = vcmask 39936
        %v1606 = vsel %vm1605, %v1573, %v1101
        %v1607 = vsel %vm1605, %v1574, %v1103
        %v1608 = vsel %vm1605, %v1575, %v1105
        %v1609 = vsel %vm1605, %v1576, %v1107
        %v1610 = vsel %vm1605, %v1577, %v1109
        %v1611 = vsel %vm1605, %v1578, %v1111
        %v1612 = vsel %vm1605, %v1579, %v1113
        %v1613 = vsel %vm1605, %v1580, %v1115
        %v1614 = vsel %vm1605, %v1581, %v1117
        %v1615 = vsel %vm1605, %v1582, %v1119
        %v1616 = vsel %vm1605, %v1583, %v1121
        %v1617 = vsel %vm1605, %v1584, %v1123
        %v1618 = vsel %vm1605, %v1585, %v1125
        %v1619 = vsel %vm1605, %v1586, %v1127
        %v1620 = vsel %vm1605, %v1587, %v1129
        %v1621 = vsel %vm1605, %v1588, %v1131
        %v1622 = vsel %vm1605, %v1589, %v1133
        %v1623 = vsel %vm1605, %v1590, %v1135
        %v1624 = vsel %vm1605, %v1591, %v1137
        %v1625 = vsel %vm1605, %v1592, %v1139
        %v1626 = vsel %vm1605, %v1593, %v1141
        %v1627 = vsel %vm1605, %v1594, %v1143
        %v1628 = vsel %vm1605, %v1595, %v1145
        %v1629 = vsel %vm1605, %v1596, %v1147
        %v1630 = vsel %vm1605, %v1597, %v1149
        %v1631 = vsel %vm1605, %v1598, %v1151
        %v1632 = vsel %vm1605, %v1599, %v1153
        %v1633 = vsel %vm1605, %v1600, %v1155
        %v1634 = vsel %vm1605, %v1601, %v1157
        %v1635 = vsel %vm1605, %v1602, %v1159
        %v1636 = vsel %vm1605, %v1603, %v1161
        %v1637 = vsel %vm1605, %v1604, %v1163
        %vm1638 = vcmask 48128
        %v1639 = vsel %vm1638, %v1606, %v1197
        %v1640 = vsel %vm1638, %v1607, %v1199
        %v1641 = vsel %vm1638, %v1608, %v1201
        %v1642 = vsel %vm1638, %v1609, %v1203
        %v1643 = vsel %vm1638, %v1610, %v1205
        %v1644 = vsel %vm1638, %v1611, %v1207
        %v1645 = vsel %vm1638, %v1612, %v1209
        %v1646 = vsel %vm1638, %v1613, %v1211
        %v1647 = vsel %vm1638, %v1614, %v1213
        %v1648 = vsel %vm1638, %v1615, %v1215
        %v1649 = vsel %vm1638, %v1616, %v1217
        %v1650 = vsel %vm1638, %v1617, %v1219
        %v1651 = vsel %vm1638, %v1618, %v1221
        %v1652 = vsel %vm1638, %v1619, %v1223
        %v1653 = vsel %vm1638, %v1620, %v1225
        %v1654 = vsel %vm1638, %v1621, %v1227
        %v1655 = vsel %vm1638, %v1622, %v1229
        %v1656 = vsel %vm1638, %v1623, %v1231
        %v1657 = vsel %vm1638, %v1624, %v1233
        %v1658 = vsel %vm1638, %v1625, %v1235
        %v1659 = vsel %vm1638, %v1626, %v1237
        %v1660 = vsel %vm1638, %v1627, %v1239
        %v1661 = vsel %vm1638, %v1628, %v1241
        %v1662 = vsel %vm1638, %v1629, %v1243
        %v1663 = vsel %vm1638, %v1630, %v1245
        %v1664 = vsel %vm1638, %v1631, %v1247
        %v1665 = vsel %vm1638, %v1632, %v1249
        %v1666 = vsel %vm1638, %v1633, %v1251
        %v1667 = vsel %vm1638, %v1634, %v1253
        %v1668 = vsel %vm1638, %v1635, %v1255
        %v1669 = vsel %vm1638, %v1636, %v1257
        %v1670 = vsel %vm1638, %v1637, %v1257
        %vm1671 = vcmask 56320
        %v1672 = vsel %vm1671, %v1639, %v1290
        %v1673 = vsel %vm1671, %v1640, %v1292
        %v1674 = vsel %vm1671, %v1641, %v1294
        %v1675 = vsel %vm1671, %v1642, %v1296
        %v1676 = vsel %vm1671, %v1643, %v1298
        %v1677 = vsel %vm1671, %v1644, %v1300
        %v1678 = vsel %vm1671, %v1645, %v1302
        %v1679 = vsel %vm1671, %v1646, %v1304
        %v1680 = vsel %vm1671, %v1647, %v1306
        %v1681 = vsel %vm1671, %v1648, %v1308
        %v1682 = vsel %vm1671, %v1649, %v1310
        %v1683 = vsel %vm1671, %v1650, %v1312
        %v1684 = vsel %vm1671, %v1651, %v1314
        %v1685 = vsel %vm1671, %v1652, %v1316
        %v1686 = vsel %vm1671, %v1653, %v1318
        %v1687 = vsel %vm1671, %v1654, %v1320
        %v1688 = vsel %vm1671, %v1655, %v1322
        %v1689 = vsel %vm1671, %v1656, %v1324
        %v1690 = vsel %vm1671, %v1657, %v1326
        %v1691 = vsel %vm1671, %v1658, %v1328
        %v1692 = vsel %vm1671, %v1659, %v1330
        %v1693 = vsel %vm1671, %v1660, %v1332
        %v1694 = vsel %vm1671, %v1661, %v1334
        %v1695 = vsel %vm1671, %v1662, %v1336
        %v1696 = vsel %vm1671, %v1663, %v1338
        %v1697 = vsel %vm1671, %v1664, %v1340
        %v1698 = vsel %vm1671, %v1665, %v1342
        %v1699 = vsel %vm1671, %v1666, %v1344
        %v1700 = vsel %vm1671, %v1667, %v1346
        %v1701 = vsel %vm1671, %v1668, %v1348
        %v1702 = vsel %vm1671, %v1669, %v1350
        %v1703 = vsel %vm1671, %v1670, %v1350
        %vm1704 = vcmask 64512
        %v1705 = vsel %vm1704, %v1672, %v1383
        %v1706 = vsel %vm1704, %v1673, %v1385
        %v1707 = vsel %vm1704, %v1674, %v1387
        %v1708 = vsel %vm1704, %v1675, %v1389
        %v1709 = vsel %vm1704, %v1676, %v1391
        %v1710 = vsel %vm1704, %v1677, %v1393
        %v1711 = vsel %vm1704, %v1678, %v1395
        %v1712 = vsel %vm1704, %v1679, %v1397
        %v1713 = vsel %vm1704, %v1680, %v1399
        %v1714 = vsel %vm1704, %v1681, %v1401
        %v1715 = vsel %vm1704, %v1682, %v1403
        %v1716 = vsel %vm1704, %v1683, %v1405
        %v1717 = vsel %vm1704, %v1684, %v1407
        %v1718 = vsel %vm1704, %v1685, %v1409
        %v1719 = vsel %vm1704, %v1686, %v1411
        %v1720 = vsel %vm1704, %v1687, %v1413
        %v1721 = vsel %vm1704, %v1688, %v1415
        %v1722 = vsel %vm1704, %v1689, %v1417
        %v1723 = vsel %vm1704, %v1690, %v1419
        %v1724 = vsel %vm1704, %v1691, %v1421
        %v1725 = vsel %vm1704, %v1692, %v1423
        %v1726 = vsel %vm1704, %v1693, %v1425
        %v1727 = vsel %vm1704, %v1694, %v1427
        %v1728 = vsel %vm1704, %v1695, %v1429
        %v1729 = vsel %vm1704, %v1696, %v1431
        %v1730 = vsel %vm1704, %v1697, %v1433
        %v1731 = vsel %vm1704, %v1698, %v1435
        %v1732 = vsel %vm1704, %v1699, %v1437
        %v1733 = vsel %vm1704, %v1700, %v1439
        %v1734 = vsel %vm1704, %v1701, %v1441
        %v1735 = vsel %vm1704, %v1702, %v1443
        %v1736 = vsel %vm1704, %v1703, %v1443
        %v1737 = vpack.c.bf16 %v1706, %v1705
        %v1738 = vpack.c.bf16 %v1708, %v1707
        %v1739 = vpack.c.bf16 %v1710, %v1709
        %v1740 = vpack.c.bf16 %v1712, %v1711
        %v1741 = vpack.c.bf16 %v1714, %v1713
        %v1742 = vpack.c.bf16 %v1716, %v1715
        %v1743 = vpack.c.bf16 %v1718, %v1717
        %v1744 = vpack.c.bf16 %v1720, %v1719
        %v1745 = vpack.c.bf16 %v1722, %v1721
        %v1746 = vpack.c.bf16 %v1724, %v1723
        %v1747 = vpack.c.bf16 %v1726, %v1725
        %v1748 = vpack.c.bf16 %v1728, %v1727
        %v1749 = vpack.c.bf16 %v1730, %v1729
        %v1750 = vpack.c.bf16 %v1732, %v1731
        %v1751 = vpack.c.bf16 %v1734, %v1733
        %v1752 = vpack.c.bf16 %v1736, %v1735
        %v1753 = vld [vmem:[%s1] sm:$0xf]
        %v1754 = vld [vmem:[%s1 + $0x4] sm:$0x1]
        %v1755 = vld [vmem:[%s2] sm:$0x1]
        %v1757 = vlaneseq
        %v1758 = vshrl.u32 %v1757, 7
        %v1759 = vsub.s32 0, %v1758
        %v1760 = vrot.slane %v1755, %v1759
        %v1764 = vunpack.c.l.b16 %v1753
        %v1765 = vunpack.c.l.b16 %v1754
        %v1766 = vpack.c.b16 %v1765, %v1764
        %vm1767 = vcmask 72704
        %v1769 = vsel %vm1767, %v1737, 0
        %v1772 = vsel %vm1767, %v1738, 0
        %v1775 = vsel %vm1767, %v1739, 0
        %v1778 = vsel %vm1767, %v1740, 0
        %v1781 = vsel %vm1767, %v1741, 0
        %v1784 = vsel %vm1767, %v1742, 0
        %v1787 = vsel %vm1767, %v1743, 0
        %v1790 = vsel %vm1767, %v1744, 0
        %v1793 = vsel %vm1767, %v1745, 0
        %v1796 = vsel %vm1767, %v1746, 0
        %v1799 = vsel %vm1767, %v1747, 0
        %v1802 = vsel %vm1767, %v1748, 0
        %v1805 = vsel %vm1767, %v1749, 0
        %v1808 = vsel %vm1767, %v1750, 0
        %v1811 = vsel %vm1767, %v1751, 0
        %v1814 = vsel %vm1767, %v1752, 0
        %vm1816 = vcmask 1043456
        %vm1817 = vcmask 1044480
        %v1818 = vsel %vm1816, 4294967295, 65535
        %v1819 = vsel %vm1817, %v1818, 0
        %v1821 = vand.u32 %v1766, %v1819
        %1823 = vmatprep.subr.bf16.mxu0 0
        %1824 = vmatpush1.bf16.msra.mxu0 0
        %1825 = vmatprep.subr.bf16.mxu0 0
        %1826 = vmatpush1.bf16.msra.mxu0 0
        %1827 = vmatprep.subr.bf16.mxu0 0
        %1828 = vmatpush1.bf16.msra.mxu0 0
        %1829 = vmatprep.subr.bf16.mxu0 0
        %1830 = vmatpush1.bf16.msra.mxu0 0
        %1831 = vmatprep.subr.bf16.mxu0 0
        %1832 = vmatpush1.bf16.msra.mxu0 0
        %1833 = vmatprep.subr.bf16.mxu0 0
        %1834 = vmatpush1.bf16.msra.mxu0 0
        %1835 = vmatprep.subr.bf16.mxu0 0
        %1836 = vmatpush1.bf16.msra.mxu0 0
        %1837 = vmatprep.subr.bf16.mxu0 0
        %1838 = vmatpush1.bf16.msra.mxu0 %v1821
        %1839 = vmatprep.subr.bf16.mxu0 0
        %1840 = vmatpush2.bf16.msra.mxu0 0
        %1841 = vmatprep.subr.bf16.mxu0 0
        %1842 = vmatpush2.bf16.msra.mxu0 0
        %1843 = vmatprep.subr.bf16.mxu0 0
        %1844 = vmatpush2.bf16.msra.mxu0 0
        %1845 = vmatprep.subr.bf16.mxu0 0
        %1846 = vmatpush2.bf16.msra.mxu0 0
        %1847 = vmatprep.subr.bf16.mxu0 0
        %1848 = vmatpush2.bf16.msra.mxu0 0
        %1849 = vmatprep.subr.bf16.mxu0 0
        %1850 = vmatpush2.bf16.msra.mxu0 0
        %1851 = vmatprep.subr.bf16.mxu0 0
        %1852 = vmatpush2.bf16.msra.mxu0 0
        %1853 = vmatprep.subr.bf16.mxu0 0
        %1854 = vmatpush2.bf16.msra.mxu0 0
        %1855 = vmatprep.mubr.bf16.mxu0 0
        %1856 = vmatmul.mubr.bf16.gmra.mxu0 %v1769
        %v1857 = vpop.f32.mrf.mxu0
        %v1858 = vadd.f32 %v1760, %v1857
        %v1859 = vpop.f32.mrf.mxu0
        %v1860 = vpop.f32.mrf.mxu0
        %v1861 = vadd.f32 %v1760, %v1860
        %v1862 = vpop.f32.mrf.mxu0
        %1863 = vmatprep.mubr.bf16.mxu0 0
        %1864 = vmatmul.mubr.bf16.gmra.mxu0 %v1772
        %v1865 = vpop.f32.mrf.mxu0
        %v1866 = vadd.f32 %v1760, %v1865
        %v1867 = vpop.f32.mrf.mxu0
        %v1868 = vpop.f32.mrf.mxu0
        %v1869 = vadd.f32 %v1760, %v1868
        %v1870 = vpop.f32.mrf.mxu0
        %1871 = vmatprep.mubr.bf16.mxu0 0
        %1872 = vmatmul.mubr.bf16.gmra.mxu0 %v1775
        %v1873 = vpop.f32.mrf.mxu0
        %v1874 = vadd.f32 %v1760, %v1873
        %v1875 = vpop.f32.mrf.mxu0
        %v1876 = vpop.f32.mrf.mxu0
        %v1877 = vadd.f32 %v1760, %v1876
        %v1878 = vpop.f32.mrf.mxu0
        %1879 = vmatprep.mubr.bf16.mxu0 0
        %1880 = vmatmul.mubr.bf16.gmra.mxu0 %v1778
        %v1881 = vpop.f32.mrf.mxu0
        %v1882 = vadd.f32 %v1760, %v1881
        %v1883 = vpop.f32.mrf.mxu0
        %v1884 = vpop.f32.mrf.mxu0
        %v1885 = vadd.f32 %v1760, %v1884
        %v1886 = vpop.f32.mrf.mxu0
        %1887 = vmatprep.mubr.bf16.mxu0 0
        %1888 = vmatmul.mubr.bf16.gmra.mxu0 %v1781
        %v1889 = vpop.f32.mrf.mxu0
        %v1890 = vadd.f32 %v1760, %v1889
        %v1891 = vpop.f32.mrf.mxu0
        %v1892 = vpop.f32.mrf.mxu0
        %v1893 = vadd.f32 %v1760, %v1892
        %v1894 = vpop.f32.mrf.mxu0
        %1895 = vmatprep.mubr.bf16.mxu0 0
        %1896 = vmatmul.mubr.bf16.gmra.mxu0 %v1784
        %v1897 = vpop.f32.mrf.mxu0
        %v1898 = vadd.f32 %v1760, %v1897
        %v1899 = vpop.f32.mrf.mxu0
        %v1900 = vpop.f32.mrf.mxu0
        %v1901 = vadd.f32 %v1760, %v1900
        %v1902 = vpop.f32.mrf.mxu0
        %1903 = vmatprep.mubr.bf16.mxu0 0
        %1904 = vmatmul.mubr.bf16.gmra.mxu0 %v1787
        %v1905 = vpop.f32.mrf.mxu0
        %v1906 = vadd.f32 %v1760, %v1905
        %v1907 = vpop.f32.mrf.mxu0
        %v1908 = vpop.f32.mrf.mxu0
        %v1909 = vadd.f32 %v1760, %v1908
        %v1910 = vpop.f32.mrf.mxu0
        %1911 = vmatprep.mubr.bf16.mxu0 0
        %1912 = vmatmul.mubr.bf16.gmra.mxu0 %v1790
        %v1913 = vpop.f32.mrf.mxu0
        %v1914 = vadd.f32 %v1760, %v1913
        %v1915 = vpop.f32.mrf.mxu0
        %v1916 = vpop.f32.mrf.mxu0
        %v1917 = vadd.f32 %v1760, %v1916
        %v1918 = vpop.f32.mrf.mxu0
        %1919 = vmatprep.mubr.bf16.mxu0 0
        %1920 = vmatmul.mubr.bf16.gmra.mxu0 %v1793
        %v1921 = vpop.f32.mrf.mxu0
        %v1922 = vadd.f32 %v1760, %v1921
        %v1923 = vpop.f32.mrf.mxu0
        %v1924 = vpop.f32.mrf.mxu0
        %v1925 = vadd.f32 %v1760, %v1924
        %v1926 = vpop.f32.mrf.mxu0
        %1927 = vmatprep.mubr.bf16.mxu0 0
        %1928 = vmatmul.mubr.bf16.gmra.mxu0 %v1796
        %v1929 = vpop.f32.mrf.mxu0
        %v1930 = vadd.f32 %v1760, %v1929
        %v1931 = vpop.f32.mrf.mxu0
        %v1932 = vpop.f32.mrf.mxu0
        %v1933 = vadd.f32 %v1760, %v1932
        %v1934 = vpop.f32.mrf.mxu0
        %1935 = vmatprep.mubr.bf16.mxu0 0
        %1936 = vmatmul.mubr.bf16.gmra.mxu0 %v1799
        %v1937 = vpop.f32.mrf.mxu0
        %v1938 = vadd.f32 %v1760, %v1937
        %v1939 = vpop.f32.mrf.mxu0
        %v1940 = vpop.f32.mrf.mxu0
        %v1941 = vadd.f32 %v1760, %v1940
        %v1942 = vpop.f32.mrf.mxu0
        %1943 = vmatprep.mubr.bf16.mxu0 0
        %1944 = vmatmul.mubr.bf16.gmra.mxu0 %v1802
        %v1945 = vpop.f32.mrf.mxu0
        %v1946 = vadd.f32 %v1760, %v1945
        %v1947 = vpop.f32.mrf.mxu0
        %v1948 = vpop.f32.mrf.mxu0
        %v1949 = vadd.f32 %v1760, %v1948
        %v1950 = vpop.f32.mrf.mxu0
        %1951 = vmatprep.mubr.bf16.mxu0 0
        %1952 = vmatmul.mubr.bf16.gmra.mxu0 %v1805
        %v1953 = vpop.f32.mrf.mxu0
        %v1954 = vadd.f32 %v1760, %v1953
        %v1955 = vpop.f32.mrf.mxu0
        %v1956 = vpop.f32.mrf.mxu0
        %v1957 = vadd.f32 %v1760, %v1956
        %v1958 = vpop.f32.mrf.mxu0
        %1959 = vmatprep.mubr.bf16.mxu0 0
        %1960 = vmatmul.mubr.bf16.gmra.mxu0 %v1808
        %v1961 = vpop.f32.mrf.mxu0
        %v1962 = vadd.f32 %v1760, %v1961
        %v1963 = vpop.f32.mrf.mxu0
        %v1964 = vpop.f32.mrf.mxu0
        %v1965 = vadd.f32 %v1760, %v1964
        %v1966 = vpop.f32.mrf.mxu0
        %1967 = vmatprep.mubr.bf16.mxu0 0
        %1968 = vmatmul.mubr.bf16.gmra.mxu0 %v1811
        %v1969 = vpop.f32.mrf.mxu0
        %v1970 = vadd.f32 %v1760, %v1969
        %v1971 = vpop.f32.mrf.mxu0
        %v1972 = vpop.f32.mrf.mxu0
        %v1973 = vadd.f32 %v1760, %v1972
        %v1974 = vpop.f32.mrf.mxu0
        %1975 = vmatprep.mubr.bf16.mxu0 0
        %1976 = vmatmul.mubr.bf16.gmra.mxu0 %v1814
        %v1977 = vpop.f32.mrf.mxu0
        %v1978 = vadd.f32 %v1760, %v1977
        %v1979 = vpop.f32.mrf.mxu0
        %v1980 = vpop.f32.mrf.mxu0
        %v1981 = vadd.f32 %v1760, %v1980
        %v1982 = vpop.f32.mrf.mxu0
        %1983 = vdwg.mxu0
        %v2016 = vrot.slane %v1858, 7
        %v2017 = vrot.slane %v1861, 7
        %v2018 = vsel %vm395, %v2016, %v2017
        %v2019 = vrot.slane %v1866, 7
        %v2020 = vrot.slane %v1869, 7
        %v2021 = vsel %vm395, %v2019, %v2020
        %v2022 = vrot.slane %v1874, 7
        %v2023 = vrot.slane %v1877, 7
        %v2024 = vsel %vm395, %v2022, %v2023
        %v2025 = vrot.slane %v1882, 7
        %v2026 = vrot.slane %v1885, 7
        %v2027 = vsel %vm395, %v2025, %v2026
        %v2028 = vrot.slane %v1890, 7
        %v2029 = vrot.slane %v1893, 7
        %v2030 = vsel %vm395, %v2028, %v2029
        %v2031 = vrot.slane %v1898, 7
        %v2032 = vrot.slane %v1901, 7
        %v2033 = vsel %vm395, %v2031, %v2032
        %v2034 = vrot.slane %v1906, 7
        %v2035 = vrot.slane %v1909, 7
        %v2036 = vsel %vm395, %v2034, %v2035
        %v2037 = vrot.slane %v1914, 7
        %v2038 = vrot.slane %v1917, 7
        %v2039 = vsel %vm395, %v2037, %v2038
        %v2040 = vrot.slane %v1922, 7
        %v2041 = vrot.slane %v1925, 7
        %v2042 = vsel %vm395, %v2040, %v2041
        %v2043 = vrot.slane %v1930, 7
        %v2044 = vrot.slane %v1933, 7
        %v2045 = vsel %vm395, %v2043, %v2044
        %v2046 = vrot.slane %v1938, 7
        %v2047 = vrot.slane %v1941, 7
        %v2048 = vsel %vm395, %v2046, %v2047
        %v2049 = vrot.slane %v1946, 7
        %v2050 = vrot.slane %v1949, 7
        %v2051 = vsel %vm395, %v2049, %v2050
        %v2052 = vrot.slane %v1954, 7
        %v2053 = vrot.slane %v1957, 7
        %v2054 = vsel %vm395, %v2052, %v2053
        %v2055 = vrot.slane %v1962, 7
        %v2056 = vrot.slane %v1965, 7
        %v2057 = vsel %vm395, %v2055, %v2056
        %v2058 = vrot.slane %v1970, 7
        %v2059 = vrot.slane %v1973, 7
        %v2060 = vsel %vm395, %v2058, %v2059
        %v2061 = vrot.slane %v1978, 7
        %v2062 = vrot.slane %v1981, 7
        %v2063 = vsel %vm395, %v2061, %v2062
        %v2111 = vsel %vm395, 0.0, %v2016
        %v2112 = vsel %vm395, 0.0, %v2019
        %v2113 = vsel %vm395, 0.0, %v2022
        %v2114 = vsel %vm395, 0.0, %v2025
        %v2115 = vsel %vm395, 0.0, %v2028
        %v2116 = vsel %vm395, 0.0, %v2031
        %v2117 = vsel %vm395, 0.0, %v2034
        %v2118 = vsel %vm395, 0.0, %v2037
        %v2119 = vsel %vm395, 0.0, %v2040
        %v2120 = vsel %vm395, 0.0, %v2043
        %v2121 = vsel %vm395, 0.0, %v2046
        %v2122 = vsel %vm395, 0.0, %v2049
        %v2123 = vsel %vm395, 0.0, %v2052
        %v2124 = vsel %vm395, 0.0, %v2055
        %v2125 = vsel %vm395, 0.0, %v2058
        %v2126 = vsel %vm395, 0.0, %v2061
        %v2127 = vsel %vm395, %v2017, 0.0
        %v2128 = vsel %vm395, %v2020, 0.0
        %v2129 = vsel %vm395, %v2023, 0.0
        %v2130 = vsel %vm395, %v2026, 0.0
        %v2131 = vsel %vm395, %v2029, 0.0
        %v2132 = vsel %vm395, %v2032, 0.0
        %v2133 = vsel %vm395, %v2035, 0.0
        %v2134 = vsel %vm395, %v2038, 0.0
        %v2135 = vsel %vm395, %v2041, 0.0
        %v2136 = vsel %vm395, %v2044, 0.0
        %v2137 = vsel %vm395, %v2047, 0.0
        %v2138 = vsel %vm395, %v2050, 0.0
        %v2139 = vsel %vm395, %v2053, 0.0
        %v2140 = vsel %vm395, %v2056, 0.0
        %v2141 = vsel %vm395, %v2059, 0.0
        %v2142 = vsel %vm395, %v2062, 0.0
        %v2173 = vrot.slane %v2111, 1
        %v2174 = vrot.slane %v2018, 1
        %v2175 = vsel %vm554, %v2173, %v2174
        %v2176 = vrot.slane %v2127, 1
        %v2177 = vsel %vm554, %v2174, %v2176
        %v2178 = vrot.slane %v2112, 1
        %v2179 = vrot.slane %v2021, 1
        %v2180 = vsel %vm554, %v2178, %v2179
        %v2181 = vrot.slane %v2128, 1
        %v2182 = vsel %vm554, %v2179, %v2181
        %v2183 = vrot.slane %v2113, 1
        %v2184 = vrot.slane %v2024, 1
        %v2185 = vsel %vm554, %v2183, %v2184
        %v2186 = vrot.slane %v2129, 1
        %v2187 = vsel %vm554, %v2184, %v2186
        %v2188 = vrot.slane %v2114, 1
        %v2189 = vrot.slane %v2027, 1
        %v2190 = vsel %vm554, %v2188, %v2189
        %v2191 = vrot.slane %v2130, 1
        %v2192 = vsel %vm554, %v2189, %v2191
        %v2193 = vrot.slane %v2115, 1
        %v2194 = vrot.slane %v2030, 1
        %v2195 = vsel %vm554, %v2193, %v2194
        %v2196 = vrot.slane %v2131, 1
        %v2197 = vsel %vm554, %v2194, %v2196
        %v2198 = vrot.slane %v2116, 1
        %v2199 = vrot.slane %v2033, 1
        %v2200 = vsel %vm554, %v2198, %v2199
        %v2201 = vrot.slane %v2132, 1
        %v2202 = vsel %vm554, %v2199, %v2201
        %v2203 = vrot.slane %v2117, 1
        %v2204 = vrot.slane %v2036, 1
        %v2205 = vsel %vm554, %v2203, %v2204
        %v2206 = vrot.slane %v2133, 1
        %v2207 = vsel %vm554, %v2204, %v2206
        %v2208 = vrot.slane %v2118, 1
        %v2209 = vrot.slane %v2039, 1
        %v2210 = vsel %vm554, %v2208, %v2209
        %v2211 = vrot.slane %v2134, 1
        %v2212 = vsel %vm554, %v2209, %v2211
        %v2213 = vrot.slane %v2119, 1
        %v2214 = vrot.slane %v2042, 1
        %v2215 = vsel %vm554, %v2213, %v2214
        %v2216 = vrot.slane %v2135, 1
        %v2217 = vsel %vm554, %v2214, %v2216
        %v2218 = vrot.slane %v2120, 1
        %v2219 = vrot.slane %v2045, 1
        %v2220 = vsel %vm554, %v2218, %v2219
        %v2221 = vrot.slane %v2136, 1
        %v2222 = vsel %vm554, %v2219, %v2221
        %v2223 = vrot.slane %v2121, 1
        %v2224 = vrot.slane %v2048, 1
        %v2225 = vsel %vm554, %v2223, %v2224
        %v2226 = vrot.slane %v2137, 1
        %v2227 = vsel %vm554, %v2224, %v2226
        %v2228 = vrot.slane %v2122, 1
        %v2229 = vrot.slane %v2051, 1
        %v2230 = vsel %vm554, %v2228, %v2229
        %v2231 = vrot.slane %v2138, 1
        %v2232 = vsel %vm554, %v2229, %v2231
        %v2233 = vrot.slane %v2123, 1
        %v2234 = vrot.slane %v2054, 1
        %v2235 = vsel %vm554, %v2233, %v2234
        %v2236 = vrot.slane %v2139, 1
        %v2237 = vsel %vm554, %v2234, %v2236
        %v2238 = vrot.slane %v2124, 1
        %v2239 = vrot.slane %v2057, 1
        %v2240 = vsel %vm554, %v2238, %v2239
        %v2241 = vrot.slane %v2140, 1
        %v2242 = vsel %vm554, %v2239, %v2241
        %v2243 = vrot.slane %v2125, 1
        %v2244 = vrot.slane %v2060, 1
        %v2245 = vsel %vm554, %v2243, %v2244
        %v2246 = vrot.slane %v2141, 1
        %v2247 = vsel %vm554, %v2244, %v2246
        %v2248 = vrot.slane %v2111, 2
        %v2249 = vrot.slane %v2018, 2
        %v2250 = vsel %vm632, %v2248, %v2249
        %v2251 = vrot.slane %v2127, 2
        %v2252 = vsel %vm632, %v2249, %v2251
        %v2253 = vrot.slane %v2112, 2
        %v2254 = vrot.slane %v2021, 2
        %v2255 = vsel %vm632, %v2253, %v2254
        %v2256 = vrot.slane %v2128, 2
        %v2257 = vsel %vm632, %v2254, %v2256
        %v2258 = vrot.slane %v2113, 2
        %v2259 = vrot.slane %v2024, 2
        %v2260 = vsel %vm632, %v2258, %v2259
        %v2261 = vrot.slane %v2129, 2
        %v2262 = vsel %vm632, %v2259, %v2261
        %v2263 = vrot.slane %v2114, 2
        %v2264 = vrot.slane %v2027, 2
        %v2265 = vsel %vm632, %v2263, %v2264
        %v2266 = vrot.slane %v2130, 2
        %v2267 = vsel %vm632, %v2264, %v2266
        %v2268 = vrot.slane %v2115, 2
        %v2269 = vrot.slane %v2030, 2
        %v2270 = vsel %vm632, %v2268, %v2269
        %v2271 = vrot.slane %v2131, 2
        %v2272 = vsel %vm632, %v2269, %v2271
        %v2273 = vrot.slane %v2116, 2
        %v2274 = vrot.slane %v2033, 2
        %v2275 = vsel %vm632, %v2273, %v2274
        %v2276 = vrot.slane %v2132, 2
        %v2277 = vsel %vm632, %v2274, %v2276
        %v2278 = vrot.slane %v2117, 2
        %v2279 = vrot.slane %v2036, 2
        %v2280 = vsel %vm632, %v2278, %v2279
        %v2281 = vrot.slane %v2133, 2
        %v2282 = vsel %vm632, %v2279, %v2281
        %v2283 = vrot.slane %v2118, 2
        %v2284 = vrot.slane %v2039, 2
        %v2285 = vsel %vm632, %v2283, %v2284
        %v2286 = vrot.slane %v2134, 2
        %v2287 = vsel %vm632, %v2284, %v2286
        %v2288 = vrot.slane %v2119, 2
        %v2289 = vrot.slane %v2042, 2
        %v2290 = vsel %vm632, %v2288, %v2289
        %v2291 = vrot.slane %v2135, 2
        %v2292 = vsel %vm632, %v2289, %v2291
        %v2293 = vrot.slane %v2120, 2
        %v2294 = vrot.slane %v2045, 2
        %v2295 = vsel %vm632, %v2293, %v2294
        %v2296 = vrot.slane %v2136, 2
        %v2297 = vsel %vm632, %v2294, %v2296
        %v2298 = vrot.slane %v2121, 2
        %v2299 = vrot.slane %v2048, 2
        %v2300 = vsel %vm632, %v2298, %v2299
        %v2301 = vrot.slane %v2137, 2
        %v2302 = vsel %vm632, %v2299, %v2301
        %v2303 = vrot.slane %v2122, 2
        %v2304 = vrot.slane %v2051, 2
        %v2305 = vsel %vm632, %v2303, %v2304
        %v2306 = vrot.slane %v2138, 2
        %v2307 = vsel %vm632, %v2304, %v2306
        %v2308 = vrot.slane %v2123, 2
        %v2309 = vrot.slane %v2054, 2
        %v2310 = vsel %vm632, %v2308, %v2309
        %v2311 = vrot.slane %v2139, 2
        %v2312 = vsel %vm632, %v2309, %v2311
        %v2313 = vrot.slane %v2124, 2
        %v2314 = vrot.slane %v2057, 2
        %v2315 = vsel %vm632, %v2313, %v2314
        %v2316 = vrot.slane %v2140, 2
        %v2317 = vsel %vm632, %v2314, %v2316
        %v2318 = vrot.slane %v2125, 2
        %v2319 = vrot.slane %v2060, 2
        %v2320 = vsel %vm632, %v2318, %v2319
        %v2321 = vrot.slane %v2141, 2
        %v2322 = vsel %vm632, %v2319, %v2321
        %v2325 = vrot.slane %v2126, 1
        %v2326 = vrot.slane %v2063, 1
        %v2327 = vsel %vm554, %v2325, %v2326
        %v2328 = vrot.slane %v2142, 1
        %v2329 = vsel %vm554, %v2326, %v2328
        %v2330 = vrot.slane %v2126, 2
        %v2331 = vrot.slane %v2063, 2
        %v2332 = vsel %vm632, %v2330, %v2331
        %v2333 = vrot.slane %v2142, 2
        %v2334 = vsel %vm632, %v2331, %v2333
        %2335 = vrot.lane.b32.xlu0 %v556, 8
        %v2336 = vpop.permute.xlu0 %2335
        %2337 = vrot.lane.b32.xlu0 %v2175, 8
        %v2338 = vpop.permute.xlu0 %2337
        %2339 = vrot.lane.b32.xlu0 %v2177, 8
        %v2340 = vpop.permute.xlu0 %2339
        %2341 = vrot.lane.b32.xlu0 %v2180, 8
        %v2342 = vpop.permute.xlu0 %2341
        %2343 = vrot.lane.b32.xlu0 %v2182, 8
        %v2344 = vpop.permute.xlu0 %2343
        %2345 = vrot.lane.b32.xlu0 %v2185, 8
        %v2346 = vpop.permute.xlu0 %2345
        %2347 = vrot.lane.b32.xlu0 %v2187, 8
        %v2348 = vpop.permute.xlu0 %2347
        %2349 = vrot.lane.b32.xlu0 %v2190, 8
        %v2350 = vpop.permute.xlu0 %2349
        %2351 = vrot.lane.b32.xlu0 %v2192, 8
        %v2352 = vpop.permute.xlu0 %2351
        %2353 = vrot.lane.b32.xlu0 %v2195, 8
        %v2354 = vpop.permute.xlu0 %2353
        %2355 = vrot.lane.b32.xlu0 %v2197, 8
        %v2356 = vpop.permute.xlu0 %2355
        %2357 = vrot.lane.b32.xlu0 %v2200, 8
        %v2358 = vpop.permute.xlu0 %2357
        %2359 = vrot.lane.b32.xlu0 %v2202, 8
        %v2360 = vpop.permute.xlu0 %2359
        %2361 = vrot.lane.b32.xlu0 %v2205, 8
        %v2362 = vpop.permute.xlu0 %2361
        %2363 = vrot.lane.b32.xlu0 %v2207, 8
        %v2364 = vpop.permute.xlu0 %2363
        %2365 = vrot.lane.b32.xlu0 %v2210, 8
        %v2366 = vpop.permute.xlu0 %2365
        %2367 = vrot.lane.b32.xlu0 %v2212, 8
        %v2368 = vpop.permute.xlu0 %2367
        %2369 = vrot.lane.b32.xlu0 %v2215, 8
        %v2370 = vpop.permute.xlu0 %2369
        %2371 = vrot.lane.b32.xlu0 %v2217, 8
        %v2372 = vpop.permute.xlu0 %2371
        %2373 = vrot.lane.b32.xlu0 %v2220, 8
        %v2374 = vpop.permute.xlu0 %2373
        %2375 = vrot.lane.b32.xlu0 %v2222, 8
        %v2376 = vpop.permute.xlu0 %2375
        %2377 = vrot.lane.b32.xlu0 %v2225, 8
        %v2378 = vpop.permute.xlu0 %2377
        %2379 = vrot.lane.b32.xlu0 %v2227, 8
        %v2380 = vpop.permute.xlu0 %2379
        %2381 = vrot.lane.b32.xlu0 %v2230, 8
        %v2382 = vpop.permute.xlu0 %2381
        %2383 = vrot.lane.b32.xlu0 %v2232, 8
        %v2384 = vpop.permute.xlu0 %2383
        %2385 = vrot.lane.b32.xlu0 %v2235, 8
        %v2386 = vpop.permute.xlu0 %2385
        %2387 = vrot.lane.b32.xlu0 %v2237, 8
        %v2388 = vpop.permute.xlu0 %2387
        %2389 = vrot.lane.b32.xlu0 %v2240, 8
        %v2390 = vpop.permute.xlu0 %2389
        %2391 = vrot.lane.b32.xlu0 %v2242, 8
        %v2392 = vpop.permute.xlu0 %2391
        %2393 = vrot.lane.b32.xlu0 %v2245, 8
        %v2394 = vpop.permute.xlu0 %2393
        %2395 = vrot.lane.b32.xlu0 %v2247, 8
        %v2396 = vpop.permute.xlu0 %2395
        %2428 = vrot.lane.b32.xlu0 %v634, 16
        %v2429 = vpop.permute.xlu0 %2428
        %2430 = vrot.lane.b32.xlu0 %v2250, 16
        %v2431 = vpop.permute.xlu0 %2430
        %2432 = vrot.lane.b32.xlu0 %v2252, 16
        %v2433 = vpop.permute.xlu0 %2432
        %2434 = vrot.lane.b32.xlu0 %v2255, 16
        %v2435 = vpop.permute.xlu0 %2434
        %2436 = vrot.lane.b32.xlu0 %v2257, 16
        %v2437 = vpop.permute.xlu0 %2436
        %2438 = vrot.lane.b32.xlu0 %v2260, 16
        %v2439 = vpop.permute.xlu0 %2438
        %2440 = vrot.lane.b32.xlu0 %v2262, 16
        %v2441 = vpop.permute.xlu0 %2440
        %2442 = vrot.lane.b32.xlu0 %v2265, 16
        %v2443 = vpop.permute.xlu0 %2442
        %2444 = vrot.lane.b32.xlu0 %v2267, 16
        %v2445 = vpop.permute.xlu0 %2444
        %2446 = vrot.lane.b32.xlu0 %v2270, 16
        %v2447 = vpop.permute.xlu0 %2446
        %2448 = vrot.lane.b32.xlu0 %v2272, 16
        %v2449 = vpop.permute.xlu0 %2448
        %2450 = vrot.lane.b32.xlu0 %v2275, 16
        %v2451 = vpop.permute.xlu0 %2450
        %2452 = vrot.lane.b32.xlu0 %v2277, 16
        %v2453 = vpop.permute.xlu0 %2452
        %2454 = vrot.lane.b32.xlu0 %v2280, 16
        %v2455 = vpop.permute.xlu0 %2454
        %2456 = vrot.lane.b32.xlu0 %v2282, 16
        %v2457 = vpop.permute.xlu0 %2456
        %2458 = vrot.lane.b32.xlu0 %v2285, 16
        %v2459 = vpop.permute.xlu0 %2458
        %2460 = vrot.lane.b32.xlu0 %v2287, 16
        %v2461 = vpop.permute.xlu0 %2460
        %2462 = vrot.lane.b32.xlu0 %v2290, 16
        %v2463 = vpop.permute.xlu0 %2462
        %2464 = vrot.lane.b32.xlu0 %v2292, 16
        %v2465 = vpop.permute.xlu0 %2464
        %2466 = vrot.lane.b32.xlu0 %v2295, 16
        %v2467 = vpop.permute.xlu0 %2466
        %2468 = vrot.lane.b32.xlu0 %v2297, 16
        %v2469 = vpop.permute.xlu0 %2468
        %2470 = vrot.lane.b32.xlu0 %v2300, 16
        %v2471 = vpop.permute.xlu0 %2470
        %2472 = vrot.lane.b32.xlu0 %v2302, 16
        %v2473 = vpop.permute.xlu0 %2472
        %2474 = vrot.lane.b32.xlu0 %v2305, 16
        %v2475 = vpop.permute.xlu0 %2474
        %2476 = vrot.lane.b32.xlu0 %v2307, 16
        %v2477 = vpop.permute.xlu0 %2476
        %2478 = vrot.lane.b32.xlu0 %v2310, 16
        %v2479 = vpop.permute.xlu0 %2478
        %2480 = vrot.lane.b32.xlu0 %v2312, 16
        %v2481 = vpop.permute.xlu0 %2480
        %2482 = vrot.lane.b32.xlu0 %v2315, 16
        %v2483 = vpop.permute.xlu0 %2482
        %2484 = vrot.lane.b32.xlu0 %v2317, 16
        %v2485 = vpop.permute.xlu0 %2484
        %2486 = vrot.lane.b32.xlu0 %v2320, 16
        %v2487 = vpop.permute.xlu0 %2486
        %2488 = vrot.lane.b32.xlu0 %v2322, 16
        %v2489 = vpop.permute.xlu0 %2488
        %2521 = vrot.lane.b32.xlu0 %v2111, 24
        %v2522 = vpop.permute.xlu0 %2521
        %2523 = vrot.lane.b32.xlu0 %v2018, 24
        %v2524 = vpop.permute.xlu0 %2523
        %2525 = vrot.lane.b32.xlu0 %v2112, 24
        %v2526 = vpop.permute.xlu0 %2525
        %2527 = vrot.lane.b32.xlu0 %v2021, 24
        %v2528 = vpop.permute.xlu0 %2527
        %2529 = vrot.lane.b32.xlu0 %v2113, 24
        %v2530 = vpop.permute.xlu0 %2529
        %2531 = vrot.lane.b32.xlu0 %v2024, 24
        %v2532 = vpop.permute.xlu0 %2531
        %2533 = vrot.lane.b32.xlu0 %v2114, 24
        %v2534 = vpop.permute.xlu0 %2533
        %2535 = vrot.lane.b32.xlu0 %v2027, 24
        %v2536 = vpop.permute.xlu0 %2535
        %2537 = vrot.lane.b32.xlu0 %v2115, 24
        %v2538 = vpop.permute.xlu0 %2537
        %2539 = vrot.lane.b32.xlu0 %v2030, 24
        %v2540 = vpop.permute.xlu0 %2539
        %2541 = vrot.lane.b32.xlu0 %v2116, 24
        %v2542 = vpop.permute.xlu0 %2541
        %2543 = vrot.lane.b32.xlu0 %v2033, 24
        %v2544 = vpop.permute.xlu0 %2543
        %2545 = vrot.lane.b32.xlu0 %v2117, 24
        %v2546 = vpop.permute.xlu0 %2545
        %2547 = vrot.lane.b32.xlu0 %v2036, 24
        %v2548 = vpop.permute.xlu0 %2547
        %2549 = vrot.lane.b32.xlu0 %v2118, 24
        %v2550 = vpop.permute.xlu0 %2549
        %2551 = vrot.lane.b32.xlu0 %v2039, 24
        %v2552 = vpop.permute.xlu0 %2551
        %2553 = vrot.lane.b32.xlu0 %v2119, 24
        %v2554 = vpop.permute.xlu0 %2553
        %2555 = vrot.lane.b32.xlu0 %v2042, 24
        %v2556 = vpop.permute.xlu0 %2555
        %2557 = vrot.lane.b32.xlu0 %v2120, 24
        %v2558 = vpop.permute.xlu0 %2557
        %2559 = vrot.lane.b32.xlu0 %v2045, 24
        %v2560 = vpop.permute.xlu0 %2559
        %2561 = vrot.lane.b32.xlu0 %v2121, 24
        %v2562 = vpop.permute.xlu0 %2561
        %2563 = vrot.lane.b32.xlu0 %v2048, 24
        %v2564 = vpop.permute.xlu0 %2563
        %2565 = vrot.lane.b32.xlu0 %v2122, 24
        %v2566 = vpop.permute.xlu0 %2565
        %2567 = vrot.lane.b32.xlu0 %v2051, 24
        %v2568 = vpop.permute.xlu0 %2567
        %2569 = vrot.lane.b32.xlu0 %v2123, 24
        %v2570 = vpop.permute.xlu0 %2569
        %2571 = vrot.lane.b32.xlu0 %v2054, 24
        %v2572 = vpop.permute.xlu0 %2571
        %2573 = vrot.lane.b32.xlu0 %v2124, 24
        %v2574 = vpop.permute.xlu0 %2573
        %2575 = vrot.lane.b32.xlu0 %v2057, 24
        %v2576 = vpop.permute.xlu0 %2575
        %2577 = vrot.lane.b32.xlu0 %v2125, 24
        %v2578 = vpop.permute.xlu0 %2577
        %2579 = vrot.lane.b32.xlu0 %v2060, 24
        %v2580 = vpop.permute.xlu0 %2579
        %2581 = vrot.lane.b32.xlu0 %v2126, 24
        %v2582 = vpop.permute.xlu0 %2581
        %2583 = vrot.lane.b32.xlu0 %v2063, 24
        %v2584 = vpop.permute.xlu0 %2583
        %2617 = vrot.lane.b32.xlu0 %v2175, 32
        %v2618 = vpop.permute.xlu0 %2617
        %2619 = vrot.lane.b32.xlu0 %v2177, 32
        %v2620 = vpop.permute.xlu0 %2619
        %2621 = vrot.lane.b32.xlu0 %v2180, 32
        %v2622 = vpop.permute.xlu0 %2621
        %2623 = vrot.lane.b32.xlu0 %v2182, 32
        %v2624 = vpop.permute.xlu0 %2623
        %2625 = vrot.lane.b32.xlu0 %v2185, 32
        %v2626 = vpop.permute.xlu0 %2625
        %2627 = vrot.lane.b32.xlu0 %v2187, 32
        %v2628 = vpop.permute.xlu0 %2627
        %2629 = vrot.lane.b32.xlu0 %v2190, 32
        %v2630 = vpop.permute.xlu0 %2629
        %2631 = vrot.lane.b32.xlu0 %v2192, 32
        %v2632 = vpop.permute.xlu0 %2631
        %2633 = vrot.lane.b32.xlu0 %v2195, 32
        %v2634 = vpop.permute.xlu0 %2633
        %2635 = vrot.lane.b32.xlu0 %v2197, 32
        %v2636 = vpop.permute.xlu0 %2635
        %2637 = vrot.lane.b32.xlu0 %v2200, 32
        %v2638 = vpop.permute.xlu0 %2637
        %2639 = vrot.lane.b32.xlu0 %v2202, 32
        %v2640 = vpop.permute.xlu0 %2639
        %2641 = vrot.lane.b32.xlu0 %v2205, 32
        %v2642 = vpop.permute.xlu0 %2641
        %2643 = vrot.lane.b32.xlu0 %v2207, 32
        %v2644 = vpop.permute.xlu0 %2643
        %2645 = vrot.lane.b32.xlu0 %v2210, 32
        %v2646 = vpop.permute.xlu0 %2645
        %2647 = vrot.lane.b32.xlu0 %v2212, 32
        %v2648 = vpop.permute.xlu0 %2647
        %2649 = vrot.lane.b32.xlu0 %v2215, 32
        %v2650 = vpop.permute.xlu0 %2649
        %2651 = vrot.lane.b32.xlu0 %v2217, 32
        %v2652 = vpop.permute.xlu0 %2651
        %2653 = vrot.lane.b32.xlu0 %v2220, 32
        %v2654 = vpop.permute.xlu0 %2653
        %2655 = vrot.lane.b32.xlu0 %v2222, 32
        %v2656 = vpop.permute.xlu0 %2655
        %2657 = vrot.lane.b32.xlu0 %v2225, 32
        %v2658 = vpop.permute.xlu0 %2657
        %2659 = vrot.lane.b32.xlu0 %v2227, 32
        %v2660 = vpop.permute.xlu0 %2659
        %2661 = vrot.lane.b32.xlu0 %v2230, 32
        %v2662 = vpop.permute.xlu0 %2661
        %2663 = vrot.lane.b32.xlu0 %v2232, 32
        %v2664 = vpop.permute.xlu0 %2663
        %2665 = vrot.lane.b32.xlu0 %v2235, 32
        %v2666 = vpop.permute.xlu0 %2665
        %2667 = vrot.lane.b32.xlu0 %v2237, 32
        %v2668 = vpop.permute.xlu0 %2667
        %2669 = vrot.lane.b32.xlu0 %v2240, 32
        %v2670 = vpop.permute.xlu0 %2669
        %2671 = vrot.lane.b32.xlu0 %v2242, 32
        %v2672 = vpop.permute.xlu0 %2671
        %2673 = vrot.lane.b32.xlu0 %v2245, 32
        %v2674 = vpop.permute.xlu0 %2673
        %2675 = vrot.lane.b32.xlu0 %v2247, 32
        %v2676 = vpop.permute.xlu0 %2675
        %2677 = vrot.lane.b32.xlu0 %v2327, 32
        %v2678 = vpop.permute.xlu0 %2677
        %2679 = vrot.lane.b32.xlu0 %v2329, 32
        %v2680 = vpop.permute.xlu0 %2679
        %2713 = vrot.lane.b32.xlu0 %v2250, 40
        %v2714 = vpop.permute.xlu0 %2713
        %2715 = vrot.lane.b32.xlu0 %v2252, 40
        %v2716 = vpop.permute.xlu0 %2715
        %2717 = vrot.lane.b32.xlu0 %v2255, 40
        %v2718 = vpop.permute.xlu0 %2717
        %2719 = vrot.lane.b32.xlu0 %v2257, 40
        %v2720 = vpop.permute.xlu0 %2719
        %2721 = vrot.lane.b32.xlu0 %v2260, 40
        %v2722 = vpop.permute.xlu0 %2721
        %2723 = vrot.lane.b32.xlu0 %v2262, 40
        %v2724 = vpop.permute.xlu0 %2723
        %2725 = vrot.lane.b32.xlu0 %v2265, 40
        %v2726 = vpop.permute.xlu0 %2725
        %2727 = vrot.lane.b32.xlu0 %v2267, 40
        %v2728 = vpop.permute.xlu0 %2727
        %2729 = vrot.lane.b32.xlu0 %v2270, 40
        %v2730 = vpop.permute.xlu0 %2729
        %2731 = vrot.lane.b32.xlu0 %v2272, 40
        %v2732 = vpop.permute.xlu0 %2731
        %2733 = vrot.lane.b32.xlu0 %v2275, 40
        %v2734 = vpop.permute.xlu0 %2733
        %2735 = vrot.lane.b32.xlu0 %v2277, 40
        %v2736 = vpop.permute.xlu0 %2735
        %2737 = vrot.lane.b32.xlu0 %v2280, 40
        %v2738 = vpop.permute.xlu0 %2737
        %2739 = vrot.lane.b32.xlu0 %v2282, 40
        %v2740 = vpop.permute.xlu0 %2739
        %2741 = vrot.lane.b32.xlu0 %v2285, 40
        %v2742 = vpop.permute.xlu0 %2741
        %2743 = vrot.lane.b32.xlu0 %v2287, 40
        %v2744 = vpop.permute.xlu0 %2743
        %2745 = vrot.lane.b32.xlu0 %v2290, 40
        %v2746 = vpop.permute.xlu0 %2745
        %2747 = vrot.lane.b32.xlu0 %v2292, 40
        %v2748 = vpop.permute.xlu0 %2747
        %2749 = vrot.lane.b32.xlu0 %v2295, 40
        %v2750 = vpop.permute.xlu0 %2749
        %2751 = vrot.lane.b32.xlu0 %v2297, 40
        %v2752 = vpop.permute.xlu0 %2751
        %2753 = vrot.lane.b32.xlu0 %v2300, 40
        %v2754 = vpop.permute.xlu0 %2753
        %2755 = vrot.lane.b32.xlu0 %v2302, 40
        %v2756 = vpop.permute.xlu0 %2755
        %2757 = vrot.lane.b32.xlu0 %v2305, 40
        %v2758 = vpop.permute.xlu0 %2757
        %2759 = vrot.lane.b32.xlu0 %v2307, 40
        %v2760 = vpop.permute.xlu0 %2759
        %2761 = vrot.lane.b32.xlu0 %v2310, 40
        %v2762 = vpop.permute.xlu0 %2761
        %2763 = vrot.lane.b32.xlu0 %v2312, 40
        %v2764 = vpop.permute.xlu0 %2763
        %2765 = vrot.lane.b32.xlu0 %v2315, 40
        %v2766 = vpop.permute.xlu0 %2765
        %2767 = vrot.lane.b32.xlu0 %v2317, 40
        %v2768 = vpop.permute.xlu0 %2767
        %2769 = vrot.lane.b32.xlu0 %v2320, 40
        %v2770 = vpop.permute.xlu0 %2769
        %2771 = vrot.lane.b32.xlu0 %v2322, 40
        %v2772 = vpop.permute.xlu0 %2771
        %2773 = vrot.lane.b32.xlu0 %v2332, 40
        %v2774 = vpop.permute.xlu0 %2773
        %2775 = vrot.lane.b32.xlu0 %v2334, 40
        %v2776 = vpop.permute.xlu0 %2775
        %2809 = vrot.lane.b32.xlu0 %v2112, 48
        %v2810 = vpop.permute.xlu0 %2809
        %2811 = vrot.lane.b32.xlu0 %v2021, 48
        %v2812 = vpop.permute.xlu0 %2811
        %2813 = vrot.lane.b32.xlu0 %v2113, 48
        %v2814 = vpop.permute.xlu0 %2813
        %2815 = vrot.lane.b32.xlu0 %v2024, 48
        %v2816 = vpop.permute.xlu0 %2815
        %2817 = vrot.lane.b32.xlu0 %v2114, 48
        %v2818 = vpop.permute.xlu0 %2817
        %2819 = vrot.lane.b32.xlu0 %v2027, 48
        %v2820 = vpop.permute.xlu0 %2819
        %2821 = vrot.lane.b32.xlu0 %v2115, 48
        %v2822 = vpop.permute.xlu0 %2821
        %2823 = vrot.lane.b32.xlu0 %v2030, 48
        %v2824 = vpop.permute.xlu0 %2823
        %2825 = vrot.lane.b32.xlu0 %v2116, 48
        %v2826 = vpop.permute.xlu0 %2825
        %2827 = vrot.lane.b32.xlu0 %v2033, 48
        %v2828 = vpop.permute.xlu0 %2827
        %2829 = vrot.lane.b32.xlu0 %v2117, 48
        %v2830 = vpop.permute.xlu0 %2829
        %2831 = vrot.lane.b32.xlu0 %v2036, 48
        %v2832 = vpop.permute.xlu0 %2831
        %2833 = vrot.lane.b32.xlu0 %v2118, 48
        %v2834 = vpop.permute.xlu0 %2833
        %2835 = vrot.lane.b32.xlu0 %v2039, 48
        %v2836 = vpop.permute.xlu0 %2835
        %2837 = vrot.lane.b32.xlu0 %v2119, 48
        %v2838 = vpop.permute.xlu0 %2837
        %2839 = vrot.lane.b32.xlu0 %v2042, 48
        %v2840 = vpop.permute.xlu0 %2839
        %2841 = vrot.lane.b32.xlu0 %v2120, 48
        %v2842 = vpop.permute.xlu0 %2841
        %2843 = vrot.lane.b32.xlu0 %v2045, 48
        %v2844 = vpop.permute.xlu0 %2843
        %2845 = vrot.lane.b32.xlu0 %v2121, 48
        %v2846 = vpop.permute.xlu0 %2845
        %2847 = vrot.lane.b32.xlu0 %v2048, 48
        %v2848 = vpop.permute.xlu0 %2847
        %2849 = vrot.lane.b32.xlu0 %v2122, 48
        %v2850 = vpop.permute.xlu0 %2849
        %2851 = vrot.lane.b32.xlu0 %v2051, 48
        %v2852 = vpop.permute.xlu0 %2851
        %2853 = vrot.lane.b32.xlu0 %v2123, 48
        %v2854 = vpop.permute.xlu0 %2853
        %2855 = vrot.lane.b32.xlu0 %v2054, 48
        %v2856 = vpop.permute.xlu0 %2855
        %2857 = vrot.lane.b32.xlu0 %v2124, 48
        %v2858 = vpop.permute.xlu0 %2857
        %2859 = vrot.lane.b32.xlu0 %v2057, 48
        %v2860 = vpop.permute.xlu0 %2859
        %2861 = vrot.lane.b32.xlu0 %v2125, 48
        %v2862 = vpop.permute.xlu0 %2861
        %2863 = vrot.lane.b32.xlu0 %v2060, 48
        %v2864 = vpop.permute.xlu0 %2863
        %2865 = vrot.lane.b32.xlu0 %v2126, 48
        %v2866 = vpop.permute.xlu0 %2865
        %2867 = vrot.lane.b32.xlu0 %v2063, 48
        %v2868 = vpop.permute.xlu0 %2867
        %2869 = vrot.lane.b32.xlu0 0.0, 48
        %v2870 = vpop.permute.xlu0 %2869
        %2902 = vrot.lane.b32.xlu0 %v2180, 56
        %v2903 = vpop.permute.xlu0 %2902
        %2904 = vrot.lane.b32.xlu0 %v2182, 56
        %v2905 = vpop.permute.xlu0 %2904
        %2906 = vrot.lane.b32.xlu0 %v2185, 56
        %v2907 = vpop.permute.xlu0 %2906
        %2908 = vrot.lane.b32.xlu0 %v2187, 56
        %v2909 = vpop.permute.xlu0 %2908
        %2910 = vrot.lane.b32.xlu0 %v2190, 56
        %v2911 = vpop.permute.xlu0 %2910
        %2912 = vrot.lane.b32.xlu0 %v2192, 56
        %v2913 = vpop.permute.xlu0 %2912
        %2914 = vrot.lane.b32.xlu0 %v2195, 56
        %v2915 = vpop.permute.xlu0 %2914
        %2916 = vrot.lane.b32.xlu0 %v2197, 56
        %v2917 = vpop.permute.xlu0 %2916
        %2918 = vrot.lane.b32.xlu0 %v2200, 56
        %v2919 = vpop.permute.xlu0 %2918
        %2920 = vrot.lane.b32.xlu0 %v2202, 56
        %v2921 = vpop.permute.xlu0 %2920
        %2922 = vrot.lane.b32.xlu0 %v2205, 56
        %v2923 = vpop.permute.xlu0 %2922
        %2924 = vrot.lane.b32.xlu0 %v2207, 56
        %v2925 = vpop.permute.xlu0 %2924
        %2926 = vrot.lane.b32.xlu0 %v2210, 56
        %v2927 = vpop.permute.xlu0 %2926
        %2928 = vrot.lane.b32.xlu0 %v2212, 56
        %v2929 = vpop.permute.xlu0 %2928
        %2930 = vrot.lane.b32.xlu0 %v2215, 56
        %v2931 = vpop.permute.xlu0 %2930
        %2932 = vrot.lane.b32.xlu0 %v2217, 56
        %v2933 = vpop.permute.xlu0 %2932
        %2934 = vrot.lane.b32.xlu0 %v2220, 56
        %v2935 = vpop.permute.xlu0 %2934
        %2936 = vrot.lane.b32.xlu0 %v2222, 56
        %v2937 = vpop.permute.xlu0 %2936
        %2938 = vrot.lane.b32.xlu0 %v2225, 56
        %v2939 = vpop.permute.xlu0 %2938
        %2940 = vrot.lane.b32.xlu0 %v2227, 56
        %v2941 = vpop.permute.xlu0 %2940
        %2942 = vrot.lane.b32.xlu0 %v2230, 56
        %v2943 = vpop.permute.xlu0 %2942
        %2944 = vrot.lane.b32.xlu0 %v2232, 56
        %v2945 = vpop.permute.xlu0 %2944
        %2946 = vrot.lane.b32.xlu0 %v2235, 56
        %v2947 = vpop.permute.xlu0 %2946
        %2948 = vrot.lane.b32.xlu0 %v2237, 56
        %v2949 = vpop.permute.xlu0 %2948
        %2950 = vrot.lane.b32.xlu0 %v2240, 56
        %v2951 = vpop.permute.xlu0 %2950
        %2952 = vrot.lane.b32.xlu0 %v2242, 56
        %v2953 = vpop.permute.xlu0 %2952
        %2954 = vrot.lane.b32.xlu0 %v2245, 56
        %v2955 = vpop.permute.xlu0 %2954
        %2956 = vrot.lane.b32.xlu0 %v2247, 56
        %v2957 = vpop.permute.xlu0 %2956
        %2958 = vrot.lane.b32.xlu0 %v2327, 56
        %v2959 = vpop.permute.xlu0 %2958
        %2960 = vrot.lane.b32.xlu0 %v2329, 56
        %v2961 = vpop.permute.xlu0 %2960
        %2962 = vrot.lane.b32.xlu0 %v556, 56
        %v2963 = vpop.permute.xlu0 %2962
        %2995 = vrot.lane.b32.xlu0 %v2255, 64
        %v2996 = vpop.permute.xlu0 %2995
        %2997 = vrot.lane.b32.xlu0 %v2257, 64
        %v2998 = vpop.permute.xlu0 %2997
        %2999 = vrot.lane.b32.xlu0 %v2260, 64
        %v3000 = vpop.permute.xlu0 %2999
        %3001 = vrot.lane.b32.xlu0 %v2262, 64
        %v3002 = vpop.permute.xlu0 %3001
        %3003 = vrot.lane.b32.xlu0 %v2265, 64
        %v3004 = vpop.permute.xlu0 %3003
        %3005 = vrot.lane.b32.xlu0 %v2267, 64
        %v3006 = vpop.permute.xlu0 %3005
        %3007 = vrot.lane.b32.xlu0 %v2270, 64
        %v3008 = vpop.permute.xlu0 %3007
        %3009 = vrot.lane.b32.xlu0 %v2272, 64
        %v3010 = vpop.permute.xlu0 %3009
        %3011 = vrot.lane.b32.xlu0 %v2275, 64
        %v3012 = vpop.permute.xlu0 %3011
        %3013 = vrot.lane.b32.xlu0 %v2277, 64
        %v3014 = vpop.permute.xlu0 %3013
        %3015 = vrot.lane.b32.xlu0 %v2280, 64
        %v3016 = vpop.permute.xlu0 %3015
        %3017 = vrot.lane.b32.xlu0 %v2282, 64
        %v3018 = vpop.permute.xlu0 %3017
        %3019 = vrot.lane.b32.xlu0 %v2285, 64
        %v3020 = vpop.permute.xlu0 %3019
        %3021 = vrot.lane.b32.xlu0 %v2287, 64
        %v3022 = vpop.permute.xlu0 %3021
        %3023 = vrot.lane.b32.xlu0 %v2290, 64
        %v3024 = vpop.permute.xlu0 %3023
        %3025 = vrot.lane.b32.xlu0 %v2292, 64
        %v3026 = vpop.permute.xlu0 %3025
        %3027 = vrot.lane.b32.xlu0 %v2295, 64
        %v3028 = vpop.permute.xlu0 %3027
        %3029 = vrot.lane.b32.xlu0 %v2297, 64
        %v3030 = vpop.permute.xlu0 %3029
        %3031 = vrot.lane.b32.xlu0 %v2300, 64
        %v3032 = vpop.permute.xlu0 %3031
        %3033 = vrot.lane.b32.xlu0 %v2302, 64
        %v3034 = vpop.permute.xlu0 %3033
        %3035 = vrot.lane.b32.xlu0 %v2305, 64
        %v3036 = vpop.permute.xlu0 %3035
        %3037 = vrot.lane.b32.xlu0 %v2307, 64
        %v3038 = vpop.permute.xlu0 %3037
        %3039 = vrot.lane.b32.xlu0 %v2310, 64
        %v3040 = vpop.permute.xlu0 %3039
        %3041 = vrot.lane.b32.xlu0 %v2312, 64
        %v3042 = vpop.permute.xlu0 %3041
        %3043 = vrot.lane.b32.xlu0 %v2315, 64
        %v3044 = vpop.permute.xlu0 %3043
        %3045 = vrot.lane.b32.xlu0 %v2317, 64
        %v3046 = vpop.permute.xlu0 %3045
        %3047 = vrot.lane.b32.xlu0 %v2320, 64
        %v3048 = vpop.permute.xlu0 %3047
        %3049 = vrot.lane.b32.xlu0 %v2322, 64
        %v3050 = vpop.permute.xlu0 %3049
        %3051 = vrot.lane.b32.xlu0 %v2332, 64
        %v3052 = vpop.permute.xlu0 %3051
        %3053 = vrot.lane.b32.xlu0 %v2334, 64
        %v3054 = vpop.permute.xlu0 %3053
        %3055 = vrot.lane.b32.xlu0 %v634, 64
        %v3056 = vpop.permute.xlu0 %3055
        %v3088 = vsel %vm1704, 0.0, %v2336
        %v3089 = vsel %vm1704, %v2111, %v2338
        %v3090 = vsel %vm1704, %v2018, %v2340
        %v3091 = vsel %vm1704, %v2112, %v2342
        %v3092 = vsel %vm1704, %v2021, %v2344
        %v3093 = vsel %vm1704, %v2113, %v2346
        %v3094 = vsel %vm1704, %v2024, %v2348
        %v3095 = vsel %vm1704, %v2114, %v2350
        %v3096 = vsel %vm1704, %v2027, %v2352
        %v3097 = vsel %vm1704, %v2115, %v2354
        %v3098 = vsel %vm1704, %v2030, %v2356
        %v3099 = vsel %vm1704, %v2116, %v2358
        %v3100 = vsel %vm1704, %v2033, %v2360
        %v3101 = vsel %vm1704, %v2117, %v2362
        %v3102 = vsel %vm1704, %v2036, %v2364
        %v3103 = vsel %vm1704, %v2118, %v2366
        %v3104 = vsel %vm1704, %v2039, %v2368
        %v3105 = vsel %vm1704, %v2119, %v2370
        %v3106 = vsel %vm1704, %v2042, %v2372
        %v3107 = vsel %vm1704, %v2120, %v2374
        %v3108 = vsel %vm1704, %v2045, %v2376
        %v3109 = vsel %vm1704, %v2121, %v2378
        %v3110 = vsel %vm1704, %v2048, %v2380
        %v3111 = vsel %vm1704, %v2122, %v2382
        %v3112 = vsel %vm1704, %v2051, %v2384
        %v3113 = vsel %vm1704, %v2123, %v2386
        %v3114 = vsel %vm1704, %v2054, %v2388
        %v3115 = vsel %vm1704, %v2124, %v2390
        %v3116 = vsel %vm1704, %v2057, %v2392
        %v3117 = vsel %vm1704, %v2125, %v2394
        %v3118 = vsel %vm1704, %v2060, %v2396
        %vm3119 = vcmask 130048
        %v3120 = vsel %vm3119, %v3088, %v2429
        %v3121 = vsel %vm3119, %v3089, %v2431
        %v3122 = vsel %vm3119, %v3090, %v2433
        %v3123 = vsel %vm3119, %v3091, %v2435
        %v3124 = vsel %vm3119, %v3092, %v2437
        %v3125 = vsel %vm3119, %v3093, %v2439
        %v3126 = vsel %vm3119, %v3094, %v2441
        %v3127 = vsel %vm3119, %v3095, %v2443
        %v3128 = vsel %vm3119, %v3096, %v2445
        %v3129 = vsel %vm3119, %v3097, %v2447
        %v3130 = vsel %vm3119, %v3098, %v2449
        %v3131 = vsel %vm3119, %v3099, %v2451
        %v3132 = vsel %vm3119, %v3100, %v2453
        %v3133 = vsel %vm3119, %v3101, %v2455
        %v3134 = vsel %vm3119, %v3102, %v2457
        %v3135 = vsel %vm3119, %v3103, %v2459
        %v3136 = vsel %vm3119, %v3104, %v2461
        %v3137 = vsel %vm3119, %v3105, %v2463
        %v3138 = vsel %vm3119, %v3106, %v2465
        %v3139 = vsel %vm3119, %v3107, %v2467
        %v3140 = vsel %vm3119, %v3108, %v2469
        %v3141 = vsel %vm3119, %v3109, %v2471
        %v3142 = vsel %vm3119, %v3110, %v2473
        %v3143 = vsel %vm3119, %v3111, %v2475
        %v3144 = vsel %vm3119, %v3112, %v2477
        %v3145 = vsel %vm3119, %v3113, %v2479
        %v3146 = vsel %vm3119, %v3114, %v2481
        %v3147 = vsel %vm3119, %v3115, %v2483
        %v3148 = vsel %vm3119, %v3116, %v2485
        %v3149 = vsel %vm3119, %v3117, %v2487
        %v3150 = vsel %vm3119, %v3118, %v2489
        %vm3151 = vcmask 195584
        %v3152 = vsel %vm3151, %v3120, %v2522
        %v3153 = vsel %vm3151, %v3120, %v2524
        %v3154 = vsel %vm3151, %v3121, %v2526
        %v3155 = vsel %vm3151, %v3122, %v2528
        %v3156 = vsel %vm3151, %v3123, %v2530
        %v3157 = vsel %vm3151, %v3124, %v2532
        %v3158 = vsel %vm3151, %v3125, %v2534
        %v3159 = vsel %vm3151, %v3126, %v2536
        %v3160 = vsel %vm3151, %v3127, %v2538
        %v3161 = vsel %vm3151, %v3128, %v2540
        %v3162 = vsel %vm3151, %v3129, %v2542
        %v3163 = vsel %vm3151, %v3130, %v2544
        %v3164 = vsel %vm3151, %v3131, %v2546
        %v3165 = vsel %vm3151, %v3132, %v2548
        %v3166 = vsel %vm3151, %v3133, %v2550
        %v3167 = vsel %vm3151, %v3134, %v2552
        %v3168 = vsel %vm3151, %v3135, %v2554
        %v3169 = vsel %vm3151, %v3136, %v2556
        %v3170 = vsel %vm3151, %v3137, %v2558
        %v3171 = vsel %vm3151, %v3138, %v2560
        %v3172 = vsel %vm3151, %v3139, %v2562
        %v3173 = vsel %vm3151, %v3140, %v2564
        %v3174 = vsel %vm3151, %v3141, %v2566
        %v3175 = vsel %vm3151, %v3142, %v2568
        %v3176 = vsel %vm3151, %v3143, %v2570
        %v3177 = vsel %vm3151, %v3144, %v2572
        %v3178 = vsel %vm3151, %v3145, %v2574
        %v3179 = vsel %vm3151, %v3146, %v2576
        %v3180 = vsel %vm3151, %v3147, %v2578
        %v3181 = vsel %vm3151, %v3148, %v2580
        %v3182 = vsel %vm3151, %v3149, %v2582
        %v3183 = vsel %vm3151, %v3150, %v2584
        %vm3184 = vcmask 261120
        %v3185 = vsel %vm3184, %v3152, %v2618
        %v3186 = vsel %vm3184, %v3153, %v2620
        %v3187 = vsel %vm3184, %v3154, %v2622
        %v3188 = vsel %vm3184, %v3155, %v2624
        %v3189 = vsel %vm3184, %v3156, %v2626
        %v3190 = vsel %vm3184, %v3157, %v2628
        %v3191 = vsel %vm3184, %v3158, %v2630
        %v3192 = vsel %vm3184, %v3159, %v2632
        %v3193 = vsel %vm3184, %v3160, %v2634
        %v3194 = vsel %vm3184, %v3161, %v2636
        %v3195 = vsel %vm3184, %v3162, %v2638
        %v3196 = vsel %vm3184, %v3163, %v2640
        %v3197 = vsel %vm3184, %v3164, %v2642
        %v3198 = vsel %vm3184, %v3165, %v2644
        %v3199 = vsel %vm3184, %v3166, %v2646
        %v3200 = vsel %vm3184, %v3167, %v2648
        %v3201 = vsel %vm3184, %v3168, %v2650
        %v3202 = vsel %vm3184, %v3169, %v2652
        %v3203 = vsel %vm3184, %v3170, %v2654
        %v3204 = vsel %vm3184, %v3171, %v2656
        %v3205 = vsel %vm3184, %v3172, %v2658
        %v3206 = vsel %vm3184, %v3173, %v2660
        %v3207 = vsel %vm3184, %v3174, %v2662
        %v3208 = vsel %vm3184, %v3175, %v2664
        %v3209 = vsel %vm3184, %v3176, %v2666
        %v3210 = vsel %vm3184, %v3177, %v2668
        %v3211 = vsel %vm3184, %v3178, %v2670
        %v3212 = vsel %vm3184, %v3179, %v2672
        %v3213 = vsel %vm3184, %v3180, %v2674
        %v3214 = vsel %vm3184, %v3181, %v2676
        %v3215 = vsel %vm3184, %v3182, %v2678
        %v3216 = vsel %vm3184, %v3183, %v2680
        %vm3217 = vcmask 326656
        %v3218 = vsel %vm3217, %v3185, %v2714
        %v3219 = vsel %vm3217, %v3186, %v2716
        %v3220 = vsel %vm3217, %v3187, %v2718
        %v3221 = vsel %vm3217, %v3188, %v2720
        %v3222 = vsel %vm3217, %v3189, %v2722
        %v3223 = vsel %vm3217, %v3190, %v2724
        %v3224 = vsel %vm3217, %v3191, %v2726
        %v3225 = vsel %vm3217, %v3192, %v2728
        %v3226 = vsel %vm3217, %v3193, %v2730
        %v3227 = vsel %vm3217, %v3194, %v2732
        %v3228 = vsel %vm3217, %v3195, %v2734
        %v3229 = vsel %vm3217, %v3196, %v2736
        %v3230 = vsel %vm3217, %v3197, %v2738
        %v3231 = vsel %vm3217, %v3198, %v2740
        %v3232 = vsel %vm3217, %v3199, %v2742
        %v3233 = vsel %vm3217, %v3200, %v2744
        %v3234 = vsel %vm3217, %v3201, %v2746
        %v3235 = vsel %vm3217, %v3202, %v2748
        %v3236 = vsel %vm3217, %v3203, %v2750
        %v3237 = vsel %vm3217, %v3204, %v2752
        %v3238 = vsel %vm3217, %v3205, %v2754
        %v3239 = vsel %vm3217, %v3206, %v2756
        %v3240 = vsel %vm3217, %v3207, %v2758
        %v3241 = vsel %vm3217, %v3208, %v2760
        %v3242 = vsel %vm3217, %v3209, %v2762
        %v3243 = vsel %vm3217, %v3210, %v2764
        %v3244 = vsel %vm3217, %v3211, %v2766
        %v3245 = vsel %vm3217, %v3212, %v2768
        %v3246 = vsel %vm3217, %v3213, %v2770
        %v3247 = vsel %vm3217, %v3214, %v2772
        %v3248 = vsel %vm3217, %v3215, %v2774
        %v3249 = vsel %vm3217, %v3216, %v2776
        %vm3250 = vcmask 392192
        %v3251 = vsel %vm3250, %v3218, %v2810
        %v3252 = vsel %vm3250, %v3219, %v2812
        %v3253 = vsel %vm3250, %v3220, %v2814
        %v3254 = vsel %vm3250, %v3221, %v2816
        %v3255 = vsel %vm3250, %v3222, %v2818
        %v3256 = vsel %vm3250, %v3223, %v2820
        %v3257 = vsel %vm3250, %v3224, %v2822
        %v3258 = vsel %vm3250, %v3225, %v2824
        %v3259 = vsel %vm3250, %v3226, %v2826
        %v3260 = vsel %vm3250, %v3227, %v2828
        %v3261 = vsel %vm3250, %v3228, %v2830
        %v3262 = vsel %vm3250, %v3229, %v2832
        %v3263 = vsel %vm3250, %v3230, %v2834
        %v3264 = vsel %vm3250, %v3231, %v2836
        %v3265 = vsel %vm3250, %v3232, %v2838
        %v3266 = vsel %vm3250, %v3233, %v2840
        %v3267 = vsel %vm3250, %v3234, %v2842
        %v3268 = vsel %vm3250, %v3235, %v2844
        %v3269 = vsel %vm3250, %v3236, %v2846
        %v3270 = vsel %vm3250, %v3237, %v2848
        %v3271 = vsel %vm3250, %v3238, %v2850
        %v3272 = vsel %vm3250, %v3239, %v2852
        %v3273 = vsel %vm3250, %v3240, %v2854
        %v3274 = vsel %vm3250, %v3241, %v2856
        %v3275 = vsel %vm3250, %v3242, %v2858
        %v3276 = vsel %vm3250, %v3243, %v2860
        %v3277 = vsel %vm3250, %v3244, %v2862
        %v3278 = vsel %vm3250, %v3245, %v2864
        %v3279 = vsel %vm3250, %v3246, %v2866
        %v3280 = vsel %vm3250, %v3247, %v2868
        %v3281 = vsel %vm3250, %v3248, %v2870
        %v3282 = vsel %vm3250, %v3249, %v2870
        %vm3283 = vcmask 457728
        %v3284 = vsel %vm3283, %v3251, %v2903
        %v3285 = vsel %vm3283, %v3252, %v2905
        %v3286 = vsel %vm3283, %v3253, %v2907
        %v3287 = vsel %vm3283, %v3254, %v2909
        %v3288 = vsel %vm3283, %v3255, %v2911
        %v3289 = vsel %vm3283, %v3256, %v2913
        %v3290 = vsel %vm3283, %v3257, %v2915
        %v3291 = vsel %vm3283, %v3258, %v2917
        %v3292 = vsel %vm3283, %v3259, %v2919
        %v3293 = vsel %vm3283, %v3260, %v2921
        %v3294 = vsel %vm3283, %v3261, %v2923
        %v3295 = vsel %vm3283, %v3262, %v2925
        %v3296 = vsel %vm3283, %v3263, %v2927
        %v3297 = vsel %vm3283, %v3264, %v2929
        %v3298 = vsel %vm3283, %v3265, %v2931
        %v3299 = vsel %vm3283, %v3266, %v2933
        %v3300 = vsel %vm3283, %v3267, %v2935
        %v3301 = vsel %vm3283, %v3268, %v2937
        %v3302 = vsel %vm3283, %v3269, %v2939
        %v3303 = vsel %vm3283, %v3270, %v2941
        %v3304 = vsel %vm3283, %v3271, %v2943
        %v3305 = vsel %vm3283, %v3272, %v2945
        %v3306 = vsel %vm3283, %v3273, %v2947
        %v3307 = vsel %vm3283, %v3274, %v2949
        %v3308 = vsel %vm3283, %v3275, %v2951
        %v3309 = vsel %vm3283, %v3276, %v2953
        %v3310 = vsel %vm3283, %v3277, %v2955
        %v3311 = vsel %vm3283, %v3278, %v2957
        %v3312 = vsel %vm3283, %v3279, %v2959
        %v3313 = vsel %vm3283, %v3280, %v2961
        %v3314 = vsel %vm3283, %v3281, %v2963
        %v3315 = vsel %vm3283, %v3282, %v2963
        %vm3316 = vcmask 523264
        %v3317 = vsel %vm3316, %v3284, %v2996
        %v3318 = vsel %vm3316, %v3285, %v2998
        %v3319 = vsel %vm3316, %v3286, %v3000
        %v3320 = vsel %vm3316, %v3287, %v3002
        %v3321 = vsel %vm3316, %v3288, %v3004
        %v3322 = vsel %vm3316, %v3289, %v3006
        %v3323 = vsel %vm3316, %v3290, %v3008
        %v3324 = vsel %vm3316, %v3291, %v3010
        %v3325 = vsel %vm3316, %v3292, %v3012
        %v3326 = vsel %vm3316, %v3293, %v3014
        %v3327 = vsel %vm3316, %v3294, %v3016
        %v3328 = vsel %vm3316, %v3295, %v3018
        %v3329 = vsel %vm3316, %v3296, %v3020
        %v3330 = vsel %vm3316, %v3297, %v3022
        %v3331 = vsel %vm3316, %v3298, %v3024
        %v3332 = vsel %vm3316, %v3299, %v3026
        %v3333 = vsel %vm3316, %v3300, %v3028
        %v3334 = vsel %vm3316, %v3301, %v3030
        %v3335 = vsel %vm3316, %v3302, %v3032
        %v3336 = vsel %vm3316, %v3303, %v3034
        %v3337 = vsel %vm3316, %v3304, %v3036
        %v3338 = vsel %vm3316, %v3305, %v3038
        %v3339 = vsel %vm3316, %v3306, %v3040
        %v3340 = vsel %vm3316, %v3307, %v3042
        %v3341 = vsel %vm3316, %v3308, %v3044
        %v3342 = vsel %vm3316, %v3309, %v3046
        %v3343 = vsel %vm3316, %v3310, %v3048
        %v3344 = vsel %vm3316, %v3311, %v3050
        %v3345 = vsel %vm3316, %v3312, %v3052
        %v3346 = vsel %vm3316, %v3313, %v3054
        %v3347 = vsel %vm3316, %v3314, %v3056
        %v3348 = vsel %vm3316, %v3315, %v3056
        %v3349 = vpack.c.bf16 %v3318, %v3317
        %v3350 = vpack.c.bf16 %v3320, %v3319
        %v3351 = vpack.c.bf16 %v3322, %v3321
        %v3352 = vpack.c.bf16 %v3324, %v3323
        %v3353 = vpack.c.bf16 %v3326, %v3325
        %v3354 = vpack.c.bf16 %v3328, %v3327
        %v3355 = vpack.c.bf16 %v3330, %v3329
        %v3356 = vpack.c.bf16 %v3332, %v3331
        %v3357 = vpack.c.bf16 %v3334, %v3333
        %v3358 = vpack.c.bf16 %v3336, %v3335
        %v3359 = vpack.c.bf16 %v3338, %v3337
        %v3360 = vpack.c.bf16 %v3340, %v3339
        %v3361 = vpack.c.bf16 %v3342, %v3341
        %v3362 = vpack.c.bf16 %v3344, %v3343
        %v3363 = vpack.c.bf16 %v3346, %v3345
        %v3364 = vpack.c.bf16 %v3348, %v3347
        %v3365 = vld [vmem:[%s3] sm:$0xf]
        %v3366 = vld [vmem:[%s3 + $0x4] sm:$0xf]
        %v3367 = vld [vmem:[%s3 + $0x8] sm:$0xf]
        %v3368 = vld [vmem:[%s3 + $0xc] sm:$0xf]
        %v3369 = vld [vmem:[%s3 + $0x10] sm:$0xf]
        %v3370 = vld [vmem:[%s3 + $0x14] sm:$0xf]
        %v3371 = vld [vmem:[%s3 + $0x18] sm:$0xf]
        %v3372 = vld [vmem:[%s3 + $0x1c] sm:$0xf]
        %v3373 = vld [vmem:[%s3 + $0x20] sm:$0xf]
        %v3374 = vld [vmem:[%s4] sm:$0x1]
        %v3376 = vlaneseq
        %v3377 = vshrl.u32 %v3376, 7
        %v3378 = vsub.s32 0, %v3377
        %v3379 = vrot.slane %v3374, %v3378
        %v3390 = vunpack.c.l.b16 %v3365
        %v3391 = vunpack.c.l.b16 %v3366
        %v3392 = vunpack.c.l.b16 %v3367
        %v3393 = vunpack.c.l.b16 %v3368
        %v3394 = vunpack.c.l.b16 %v3369
        %v3395 = vunpack.c.l.b16 %v3370
        %v3396 = vunpack.c.l.b16 %v3371
        %v3397 = vunpack.c.l.b16 %v3372
        %v3398 = vunpack.c.l.b16 %v3373
        %v3399 = vpack.c.b16 %v3391, %v3390
        %v3400 = vpack.c.b16 %v3393, %v3392
        %v3401 = vpack.c.b16 %v3395, %v3394
        %v3402 = vpack.c.b16 %v3397, %v3396
        %v3403 = vpack.c.b16 %v3398, %v3398
        %vm3408 = vcmask 588800
        %v3410 = vsel %vm3408, %v3349, 0
        %v3413 = vsel %vm3408, %v3350, 0
        %v3416 = vsel %vm3408, %v3351, 0
        %v3419 = vsel %vm3408, %v3352, 0
        %v3422 = vsel %vm3408, %v3353, 0
        %v3425 = vsel %vm3408, %v3354, 0
        %v3428 = vsel %vm3408, %v3355, 0
        %v3431 = vsel %vm3408, %v3356, 0
        %v3434 = vsel %vm3408, %v3357, 0
        %v3437 = vsel %vm3408, %v3358, 0
        %v3440 = vsel %vm3408, %v3359, 0
        %v3443 = vsel %vm3408, %v3360, 0
        %v3446 = vsel %vm3408, %v3361, 0
        %v3449 = vsel %vm3408, %v3362, 0
        %v3452 = vsel %vm3408, %v3363, 0
        %v3455 = vsel %vm3408, %v3364, 0
        %v3458 = vsel %vm1816, %v3403, 0
        %3460 = vmatprep.subr.bf16.mxu0 0
        %3461 = vmatpush1.bf16.msra.mxu0 0
        %3462 = vmatprep.subr.bf16.mxu0 0
        %3463 = vmatpush1.bf16.msra.mxu0 0
        %3464 = vmatprep.subr.bf16.mxu0 0
        %3465 = vmatpush1.bf16.msra.mxu0 0
        %3466 = vmatprep.subr.bf16.mxu0 0
        %3467 = vmatpush1.bf16.msra.mxu0 %v3458
        %3468 = vmatprep.subr.bf16.mxu0 0
        %3469 = vmatpush1.bf16.msra.mxu0 %v3402
        %3470 = vmatprep.subr.bf16.mxu0 0
        %3471 = vmatpush1.bf16.msra.mxu0 %v3401
        %3472 = vmatprep.subr.bf16.mxu0 0
        %3473 = vmatpush1.bf16.msra.mxu0 %v3400
        %3474 = vmatprep.subr.bf16.mxu0 0
        %3475 = vmatpush1.bf16.msra.mxu0 %v3399
        %3476 = vmatprep.subr.bf16.mxu0 0
        %3477 = vmatpush2.bf16.msra.mxu0 0
        %3478 = vmatprep.subr.bf16.mxu0 0
        %3479 = vmatpush2.bf16.msra.mxu0 0
        %3480 = vmatprep.subr.bf16.mxu0 0
        %3481 = vmatpush2.bf16.msra.mxu0 0
        %3482 = vmatprep.subr.bf16.mxu0 0
        %3483 = vmatpush2.bf16.msra.mxu0 0
        %3484 = vmatprep.subr.bf16.mxu0 0
        %3485 = vmatpush2.bf16.msra.mxu0 0
        %3486 = vmatprep.subr.bf16.mxu0 0
        %3487 = vmatpush2.bf16.msra.mxu0 0
        %3488 = vmatprep.subr.bf16.mxu0 0
        %3489 = vmatpush2.bf16.msra.mxu0 0
        %3490 = vmatprep.subr.bf16.mxu0 0
        %3491 = vmatpush2.bf16.msra.mxu0 0
        %3492 = vmatprep.mubr.bf16.mxu0 0
        %3493 = vmatmul.mubr.bf16.gmra.mxu0 %v3410
        %v3494 = vpop.f32.mrf.mxu0
        %v3495 = vadd.f32 %v3379, %v3494
        %v3496 = vpop.f32.mrf.mxu0
        %v3497 = vpop.f32.mrf.mxu0
        %v3498 = vadd.f32 %v3379, %v3497
        %v3499 = vpop.f32.mrf.mxu0
        %3500 = vmatprep.mubr.bf16.mxu0 0
        %3501 = vmatmul.mubr.bf16.gmra.mxu0 %v3413
        %v3502 = vpop.f32.mrf.mxu0
        %v3503 = vadd.f32 %v3379, %v3502
        %v3504 = vpop.f32.mrf.mxu0
        %v3505 = vpop.f32.mrf.mxu0
        %v3506 = vadd.f32 %v3379, %v3505
        %v3507 = vpop.f32.mrf.mxu0
        %3508 = vmatprep.mubr.bf16.mxu0 0
        %3509 = vmatmul.mubr.bf16.gmra.mxu0 %v3416
        %v3510 = vpop.f32.mrf.mxu0
        %v3511 = vadd.f32 %v3379, %v3510
        %v3512 = vpop.f32.mrf.mxu0
        %v3513 = vpop.f32.mrf.mxu0
        %v3514 = vadd.f32 %v3379, %v3513
        %v3515 = vpop.f32.mrf.mxu0
        %3516 = vmatprep.mubr.bf16.mxu0 0
        %3517 = vmatmul.mubr.bf16.gmra.mxu0 %v3419
        %v3518 = vpop.f32.mrf.mxu0
        %v3519 = vadd.f32 %v3379, %v3518
        %v3520 = vpop.f32.mrf.mxu0
        %v3521 = vpop.f32.mrf.mxu0
        %v3522 = vadd.f32 %v3379, %v3521
        %v3523 = vpop.f32.mrf.mxu0
        %3524 = vmatprep.mubr.bf16.mxu0 0
        %3525 = vmatmul.mubr.bf16.gmra.mxu0 %v3422
        %v3526 = vpop.f32.mrf.mxu0
        %v3527 = vadd.f32 %v3379, %v3526
        %v3528 = vpop.f32.mrf.mxu0
        %v3529 = vpop.f32.mrf.mxu0
        %v3530 = vadd.f32 %v3379, %v3529
        %v3531 = vpop.f32.mrf.mxu0
        %3532 = vmatprep.mubr.bf16.mxu0 0
        %3533 = vmatmul.mubr.bf16.gmra.mxu0 %v3425
        %v3534 = vpop.f32.mrf.mxu0
        %v3535 = vadd.f32 %v3379, %v3534
        %v3536 = vpop.f32.mrf.mxu0
        %v3537 = vpop.f32.mrf.mxu0
        %v3538 = vadd.f32 %v3379, %v3537
        %v3539 = vpop.f32.mrf.mxu0
        %3540 = vmatprep.mubr.bf16.mxu0 0
        %3541 = vmatmul.mubr.bf16.gmra.mxu0 %v3428
        %v3542 = vpop.f32.mrf.mxu0
        %v3543 = vadd.f32 %v3379, %v3542
        %v3544 = vpop.f32.mrf.mxu0
        %v3545 = vpop.f32.mrf.mxu0
        %v3546 = vadd.f32 %v3379, %v3545
        %v3547 = vpop.f32.mrf.mxu0
        %3548 = vmatprep.mubr.bf16.mxu0 0
        %3549 = vmatmul.mubr.bf16.gmra.mxu0 %v3431
        %v3550 = vpop.f32.mrf.mxu0
        %v3551 = vadd.f32 %v3379, %v3550
        %v3552 = vpop.f32.mrf.mxu0
        %v3553 = vpop.f32.mrf.mxu0
        %v3554 = vadd.f32 %v3379, %v3553
        %v3555 = vpop.f32.mrf.mxu0
        %3556 = vmatprep.mubr.bf16.mxu0 0
        %3557 = vmatmul.mubr.bf16.gmra.mxu0 %v3434
        %v3558 = vpop.f32.mrf.mxu0
        %v3559 = vadd.f32 %v3379, %v3558
        %v3560 = vpop.f32.mrf.mxu0
        %v3561 = vpop.f32.mrf.mxu0
        %v3562 = vadd.f32 %v3379, %v3561
        %v3563 = vpop.f32.mrf.mxu0
        %3564 = vmatprep.mubr.bf16.mxu0 0
        %3565 = vmatmul.mubr.bf16.gmra.mxu0 %v3437
        %v3566 = vpop.f32.mrf.mxu0
        %v3567 = vadd.f32 %v3379, %v3566
        %v3568 = vpop.f32.mrf.mxu0
        %v3569 = vpop.f32.mrf.mxu0
        %v3570 = vadd.f32 %v3379, %v3569
        %v3571 = vpop.f32.mrf.mxu0
        %3572 = vmatprep.mubr.bf16.mxu0 0
        %3573 = vmatmul.mubr.bf16.gmra.mxu0 %v3440
        %v3574 = vpop.f32.mrf.mxu0
        %v3575 = vadd.f32 %v3379, %v3574
        %v3576 = vpop.f32.mrf.mxu0
        %v3577 = vpop.f32.mrf.mxu0
        %v3578 = vadd.f32 %v3379, %v3577
        %v3579 = vpop.f32.mrf.mxu0
        %3580 = vmatprep.mubr.bf16.mxu0 0
        %3581 = vmatmul.mubr.bf16.gmra.mxu0 %v3443
        %v3582 = vpop.f32.mrf.mxu0
        %v3583 = vadd.f32 %v3379, %v3582
        %v3584 = vpop.f32.mrf.mxu0
        %v3585 = vpop.f32.mrf.mxu0
        %v3586 = vadd.f32 %v3379, %v3585
        %v3587 = vpop.f32.mrf.mxu0
        %3588 = vmatprep.mubr.bf16.mxu0 0
        %3589 = vmatmul.mubr.bf16.gmra.mxu0 %v3446
        %v3590 = vpop.f32.mrf.mxu0
        %v3591 = vadd.f32 %v3379, %v3590
        %v3592 = vpop.f32.mrf.mxu0
        %v3593 = vpop.f32.mrf.mxu0
        %v3594 = vadd.f32 %v3379, %v3593
        %v3595 = vpop.f32.mrf.mxu0
        %3596 = vmatprep.mubr.bf16.mxu0 0
        %3597 = vmatmul.mubr.bf16.gmra.mxu0 %v3449
        %v3598 = vpop.f32.mrf.mxu0
        %v3599 = vadd.f32 %v3379, %v3598
        %v3600 = vpop.f32.mrf.mxu0
        %v3601 = vpop.f32.mrf.mxu0
        %v3602 = vadd.f32 %v3379, %v3601
        %v3603 = vpop.f32.mrf.mxu0
        %3604 = vmatprep.mubr.bf16.mxu0 0
        %3605 = vmatmul.mubr.bf16.gmra.mxu0 %v3452
        %v3606 = vpop.f32.mrf.mxu0
        %v3607 = vadd.f32 %v3379, %v3606
        %v3608 = vpop.f32.mrf.mxu0
        %v3609 = vpop.f32.mrf.mxu0
        %v3610 = vadd.f32 %v3379, %v3609
        %v3611 = vpop.f32.mrf.mxu0
        %3612 = vmatprep.mubr.bf16.mxu0 0
        %3613 = vmatmul.mubr.bf16.gmra.mxu0 %v3455
        %v3614 = vpop.f32.mrf.mxu0
        %v3615 = vadd.f32 %v3379, %v3614
        %v3616 = vpop.f32.mrf.mxu0
        %v3617 = vpop.f32.mrf.mxu0
        %v3618 = vadd.f32 %v3379, %v3617
        %v3619 = vpop.f32.mrf.mxu0
        %3620 = vdwg.mxu0
        %v3621 = vmax.f32 %v3495, 0.0
        %v3622 = vmax.f32 %v3498, 0.0
        %v3623 = vmax.f32 %v3503, 0.0
        %v3624 = vmax.f32 %v3506, 0.0
        %v3625 = vmax.f32 %v3511, 0.0
        %v3626 = vmax.f32 %v3514, 0.0
        %v3627 = vmax.f32 %v3519, 0.0
        %v3628 = vmax.f32 %v3522, 0.0
        %v3629 = vmax.f32 %v3527, 0.0
        %v3630 = vmax.f32 %v3530, 0.0
        %v3631 = vmax.f32 %v3535, 0.0
        %v3632 = vmax.f32 %v3538, 0.0
        %v3633 = vmax.f32 %v3543, 0.0
        %v3634 = vmax.f32 %v3546, 0.0
        %v3635 = vmax.f32 %v3551, 0.0
        %v3636 = vmax.f32 %v3554, 0.0
        %v3637 = vmax.f32 %v3559, 0.0
        %v3638 = vmax.f32 %v3562, 0.0
        %v3639 = vmax.f32 %v3567, 0.0
        %v3640 = vmax.f32 %v3570, 0.0
        %v3641 = vmax.f32 %v3575, 0.0
        %v3642 = vmax.f32 %v3578, 0.0
        %v3643 = vmax.f32 %v3583, 0.0
        %v3644 = vmax.f32 %v3586, 0.0
        %v3645 = vmax.f32 %v3591, 0.0
        %v3646 = vmax.f32 %v3594, 0.0
        %v3647 = vmax.f32 %v3599, 0.0
        %v3648 = vmax.f32 %v3602, 0.0
        %v3649 = vmax.f32 %v3607, 0.0
        %v3650 = vmax.f32 %v3610, 0.0
        %v3651 = vmax.f32 %v3615, 0.0
        %v3652 = vmax.f32 %v3618, 0.0
        %v3653 = vadd.f32 %v3621, %v3622
        %v3654 = vadd.f32 %v3653, %v3623
        %v3655 = vadd.f32 %v3654, %v3624
        %v3656 = vadd.f32 %v3655, %v3625
        %v3657 = vadd.f32 %v3656, %v3626
        %v3658 = vadd.f32 %v3657, %v3627
        %v3659 = vadd.f32 %v3658, %v3628
        %v3660 = vadd.f32 %v3659, %v3629
        %v3661 = vadd.f32 %v3660, %v3630
        %v3662 = vadd.f32 %v3661, %v3631
        %v3663 = vadd.f32 %v3662, %v3632
        %v3664 = vadd.f32 %v3663, %v3633
        %v3665 = vadd.f32 %v3664, %v3634
        %v3666 = vadd.f32 %v3665, %v3635
        %v3667 = vadd.f32 %v3666, %v3636
        %v3668 = vadd.f32 %v3667, %v3637
        %v3669 = vadd.f32 %v3668, %v3638
        %v3670 = vadd.f32 %v3669, %v3639
        %v3671 = vadd.f32 %v3670, %v3640
        %v3672 = vadd.f32 %v3671, %v3641
        %v3673 = vadd.f32 %v3672, %v3642
        %v3674 = vadd.f32 %v3673, %v3643
        %v3675 = vadd.f32 %v3674, %v3644
        %v3676 = vadd.f32 %v3675, %v3645
        %v3677 = vadd.f32 %v3676, %v3646
        %v3678 = vadd.f32 %v3677, %v3647
        %v3679 = vadd.f32 %v3678, %v3648
        %v3680 = vadd.f32 %v3679, %v3649
        %v3681 = vadd.f32 %v3680, %v3650
        %v3682 = vadd.f32 %v3681, %v3651
        %v3683 = vadd.f32 %v3682, %v3652
        %v3684 = vrot.slane %v3683, 4
        %v3685 = vadd.f32 %v3683, %v3684
        %v3686 = vrot.slane %v3685, 2
        %v3687 = vadd.f32 %v3685, %v3686
        %v3688 = vrot.slane %v3687, 1
        %v3689 = vadd.f32 %v3687, %v3688
        %v3690 = vld [vmem:[%s5] sm:$0xff]
        %v3691 = vld [vmem:[%s5 + $0x8] sm:$0xff]
        %v3692 = vld [vmem:[%s5 + $0x10] sm:$0xff]
        %v3693 = vld [vmem:[%s5 + $0x18] sm:$0xff]
        %v3694 = vld [vmem:[%s5 + $0x20] sm:$0xff]
        %v3695 = vld [vmem:[%s5 + $0x28] sm:$0xff]
        %v3696 = vld [vmem:[%s5 + $0x30] sm:$0xff]
        %v3697 = vld [vmem:[%s5 + $0x38] sm:$0xff]
        %v3698 = vld [vmem:[%s5 + $0x40] sm:$0xff]
        %v3699 = vld [vmem:[%s5 + $0x48] sm:$0xff]
        %v3700 = vld [vmem:[%s5 + $0x50] sm:$0xff]
        %v3701 = vld [vmem:[%s5 + $0x58] sm:$0xff]
        %v3702 = vld [vmem:[%s5 + $0x60] sm:$0xff]
        %v3703 = vld [vmem:[%s5 + $0x68] sm:$0xff]
        %v3704 = vld [vmem:[%s5 + $0x70] sm:$0xff]
        %v3705 = vld [vmem:[%s5 + $0x78] sm:$0xff]
        %v3706 = vld [vmem:[%s6] sm:$0x1]
        %3707 = vmatprep.subr.mxu0 0.0
        %3708 = vmatpush1.msra.mxu0 %v3705
        %3709 = vmatprep.subr.mxu0 0.0
        %3710 = vmatpush1.msra.mxu0 %v3704
        %3711 = vmatprep.subr.mxu0 0.0
        %3712 = vmatpush1.msra.mxu0 %v3703
        %3713 = vmatprep.subr.mxu0 0.0
        %3714 = vmatpush1.msra.mxu0 %v3702
        %3715 = vmatprep.subr.mxu0 0.0
        %3716 = vmatpush1.msra.mxu0 %v3701
        %3717 = vmatprep.subr.mxu0 0.0
        %3718 = vmatpush1.msra.mxu0 %v3700
        %3719 = vmatprep.subr.mxu0 0.0
        %3720 = vmatpush1.msra.mxu0 %v3699
        %3721 = vmatprep.subr.mxu0 0.0
        %3722 = vmatpush1.msra.mxu0 %v3698
        %3723 = vmatprep.subr.mxu0 0.0
        %3724 = vmatpush1.msra.mxu0 %v3697
        %3725 = vmatprep.subr.mxu0 0.0
        %3726 = vmatpush1.msra.mxu0 %v3696
        %3727 = vmatprep.subr.mxu0 0.0
        %3728 = vmatpush1.msra.mxu0 %v3695
        %3729 = vmatprep.subr.mxu0 0.0
        %3730 = vmatpush1.msra.mxu0 %v3694
        %3731 = vmatprep.subr.mxu0 0.0
        %3732 = vmatpush1.msra.mxu0 %v3693
        %3733 = vmatprep.subr.mxu0 0.0
        %3734 = vmatpush1.msra.mxu0 %v3692
        %3735 = vmatprep.subr.mxu0 0.0
        %3736 = vmatpush1.msra.mxu0 %v3691
        %3737 = vmatprep.subr.mxu0 0.0
        %3738 = vmatpush1.msra.mxu0 %v3690
        %3739 = vmatprep.subr.mxu0 0.0
        %3740 = vmatpush2.msra.mxu0 0.0
        %3741 = vmatprep.subr.mxu0 0.0
        %3742 = vmatpush2.msra.mxu0 0.0
        %3743 = vmatprep.subr.mxu0 0.0
        %3744 = vmatpush2.msra.mxu0 0.0
        %3745 = vmatprep.subr.mxu0 0.0
        %3746 = vmatpush2.msra.mxu0 0.0
        %3747 = vmatprep.subr.mxu0 0.0
        %3748 = vmatpush2.msra.mxu0 0.0
        %3749 = vmatprep.subr.mxu0 0.0
        %3750 = vmatpush2.msra.mxu0 0.0
        %3751 = vmatprep.subr.mxu0 0.0
        %3752 = vmatpush2.msra.mxu0 0.0
        %3753 = vmatprep.subr.mxu0 0.0
        %3754 = vmatpush2.msra.mxu0 0.0
        %3755 = vmatprep.subr.mxu0 0.0
        %3756 = vmatpush2.msra.mxu0 0.0
        %3757 = vmatprep.subr.mxu0 0.0
        %3758 = vmatpush2.msra.mxu0 0.0
        %3759 = vmatprep.subr.mxu0 0.0
        %3760 = vmatpush2.msra.mxu0 0.0
        %3761 = vmatprep.subr.mxu0 0.0
        %3762 = vmatpush2.msra.mxu0 0.0
        %3763 = vmatprep.subr.mxu0 0.0
        %3764 = vmatpush2.msra.mxu0 0.0
        %3765 = vmatprep.subr.mxu0 0.0
        %3766 = vmatpush2.msra.mxu0 0.0
        %3767 = vmatprep.subr.mxu0 0.0
        %3768 = vmatpush2.msra.mxu0 0.0
        %3769 = vmatprep.subr.mxu0 0.0
        %3770 = vmatpush2.msra.mxu0 0.0
        %3771 = vmatprep.mubr.f32.mxu0 0.0
        %3772 = vmatmul.mubr.f32.gmra.mxu0 %v3689
        %v3773 = vpop.f32.mrf.mxu0
        %v3774 = vadd.f32 %v3706, %v3773
        %v3775 = vpop.f32.mrf.mxu0
        %3776 = vdwg.mxu0
        %vm3777 = vcmp.gt.f32.partialorder %v3774, 0.0
        %v3778 = vmul.f32 %v3774, 0.01
        %v3779 = vsel %vm3777, %v3774, %v3778
        %v3780 = vld [vmem:[%s7] sm:$0xff]
        %v3781 = vld [vmem:[%s7 + $0x8] sm:$0xff]
        %v3782 = vld [vmem:[%s7 + $0x10] sm:$0xff]
        %v3783 = vld [vmem:[%s7 + $0x18] sm:$0xff]
        %v3784 = vld [vmem:[%s7 + $0x20] sm:$0xff]
        %v3785 = vld [vmem:[%s7 + $0x28] sm:$0xff]
        %v3786 = vld [vmem:[%s7 + $0x30] sm:$0xff]
        %v3787 = vld [vmem:[%s7 + $0x38] sm:$0xff]
        %v3788 = vld [vmem:[%s7 + $0x40] sm:$0xff]
        %v3789 = vld [vmem:[%s7 + $0x48] sm:$0xff]
        %v3790 = vld [vmem:[%s7 + $0x50] sm:$0xff]
        %v3791 = vld [vmem:[%s7 + $0x58] sm:$0xff]
        %v3792 = vld [vmem:[%s7 + $0x60] sm:$0xff]
        %v3793 = vld [vmem:[%s7 + $0x68] sm:$0xff]
        %v3794 = vld [vmem:[%s7 + $0x70] sm:$0xff]
        %v3795 = vld [vmem:[%s7 + $0x78] sm:$0xff]
        %v3796 = vld [vmem:[%s8] sm:$0x1]
        %3797 = vmatprep.subr.mxu0 0.0
        %3798 = vmatpush1.msra.mxu0 %v3795
        %3799 = vmatprep.subr.mxu0 0.0
        %3800 = vmatpush1.msra.mxu0 %v3794
        %3801 = vmatprep.subr.mxu0 0.0
        %3802 = vmatpush1.msra.mxu0 %v3793
        %3803 = vmatprep.subr.mxu0 0.0
        %3804 = vmatpush1.msra.mxu0 %v3792
        %3805 = vmatprep.subr.mxu0 0.0
        %3806 = vmatpush1.msra.mxu0 %v3791
        %3807 = vmatprep.subr.mxu0 0.0
        %3808 = vmatpush1.msra.mxu0 %v3790
        %3809 = vmatprep.subr.mxu0 0.0
        %3810 = vmatpush1.msra.mxu0 %v3789
        %3811 = vmatprep.subr.mxu0 0.0
        %3812 = vmatpush1.msra.mxu0 %v3788
        %3813 = vmatprep.subr.mxu0 0.0
        %3814 = vmatpush1.msra.mxu0 %v3787
        %3815 = vmatprep.subr.mxu0 0.0
        %3816 = vmatpush1.msra.mxu0 %v3786
        %3817 = vmatprep.subr.mxu0 0.0
        %3818 = vmatpush1.msra.mxu0 %v3785
        %3819 = vmatprep.subr.mxu0 0.0
        %3820 = vmatpush1.msra.mxu0 %v3784
        %3821 = vmatprep.subr.mxu0 0.0
        %3822 = vmatpush1.msra.mxu0 %v3783
        %3823 = vmatprep.subr.mxu0 0.0
        %3824 = vmatpush1.msra.mxu0 %v3782
        %3825 = vmatprep.subr.mxu0 0.0
        %3826 = vmatpush1.msra.mxu0 %v3781
        %3827 = vmatprep.subr.mxu0 0.0
        %3828 = vmatpush1.msra.mxu0 %v3780
        %3829 = vmatprep.subr.mxu0 0.0
        %3830 = vmatpush2.msra.mxu0 0.0
        %3831 = vmatprep.subr.mxu0 0.0
        %3832 = vmatpush2.msra.mxu0 0.0
        %3833 = vmatprep.subr.mxu0 0.0
        %3834 = vmatpush2.msra.mxu0 0.0
        %3835 = vmatprep.subr.mxu0 0.0
        %3836 = vmatpush2.msra.mxu0 0.0
        %3837 = vmatprep.subr.mxu0 0.0
        %3838 = vmatpush2.msra.mxu0 0.0
        %3839 = vmatprep.subr.mxu0 0.0
        %3840 = vmatpush2.msra.mxu0 0.0
        %3841 = vmatprep.subr.mxu0 0.0
        %3842 = vmatpush2.msra.mxu0 0.0
        %3843 = vmatprep.subr.mxu0 0.0
        %3844 = vmatpush2.msra.mxu0 0.0
        %3845 = vmatprep.subr.mxu0 0.0
        %3846 = vmatpush2.msra.mxu0 0.0
        %3847 = vmatprep.subr.mxu0 0.0
        %3848 = vmatpush2.msra.mxu0 0.0
        %3849 = vmatprep.subr.mxu0 0.0
        %3850 = vmatpush2.msra.mxu0 0.0
        %3851 = vmatprep.subr.mxu0 0.0
        %3852 = vmatpush2.msra.mxu0 0.0
        %3853 = vmatprep.subr.mxu0 0.0
        %3854 = vmatpush2.msra.mxu0 0.0
        %3855 = vmatprep.subr.mxu0 0.0
        %3856 = vmatpush2.msra.mxu0 0.0
        %3857 = vmatprep.subr.mxu0 0.0
        %3858 = vmatpush2.msra.mxu0 0.0
        %3859 = vmatprep.subr.mxu0 0.0
        %3860 = vmatpush2.msra.mxu0 0.0
        %3861 = vmatprep.mubr.f32.mxu0 0.0
        %3862 = vmatmul.mubr.f32.gmra.mxu0 %v3779
        %v3863 = vpop.f32.mrf.mxu0
        %v3864 = vadd.f32 %v3796, %v3863
        %v3865 = vpop.f32.mrf.mxu0
        %3866 = vdwg.mxu0
        %3867 = vst [vmem:[%s324] sm:$0x1] %v3864
        %s3868 = sand.u32 %s225, 1
        %s3869 = scalar_lea.sflag [#allocation3], %s3868
        %s3870 = sand.u32 %s225, 1
        %s3871 = scalar_lea.vmem [#allocation2], %s3870
        // Predicated region
        $region57: #{_lambda_.1} parent=55 // pred_check
          %p3872 = pneg %p235
        $region58: #{_lambda_.1} parent=55 // pred_check_branch
          %3874 = sbr.rel (%p3872) target = $region60
        $region59: #{_lambda_.1} parent=55 // pred_region
          %s3876 = ssub.s32 16, 16
          %3877 = vsyncadd %s3869, %s3876
          %s3878 = smul.addr %s23, 16
          %s3879 = scalar_lea.hbm %s9, %s3878
          %s3881 = sshll.u32 %s3871, 4
          %s3882 = int_to_ptr.vmem [resolvable:$true] %s3881
          %3884 = dma.vmem_to_hbm [thread:$0]  %s3882, 16, %s3879, %s3869
        $region60: #{_lambda_.1} parent=55 // pred_fallthru
          _
      $region56: #{_lambda_.1} parent=5 // pred_fallthru
        _
      %p3885 = scmp.le.s32.totalorder 2, %s18
      // Predicated region
      $region61: #{_lambda_.1} parent=5 // pred_check
        %p3886 = pneg %p3885
      $region62: #{_lambda_.1} parent=5 // pred_check_branch
        %3888 = sbr.rel (%p3886) target = $region64
      $region63: #{_lambda_.1} parent=5 // pred_region
        %s3889 = ssub.s32 %s18, 2
        // Predicated region
        $region65: #{_lambda_.1} parent=63 // pred_check
          %p3890 = pneg %p241
        $region66: #{_lambda_.1} parent=63 // pred_check_branch
          %3892 = sbr.rel (%p3890) target = $region68
        $region67: #{_lambda_.1} parent=63 // pred_region
          %s3893 = sand.u32 %s226, 1
          %s3894 = scalar_lea.sflag [#allocation3], %s3893
          %s3895 = sand.u32 %s226, 1
          %s3896 = scalar_lea.vmem [#allocation2], %s3895
          %3897 = dma.done %s3894, 16
        $region68: #{_lambda_.1} parent=63 // pred_fallthru
          _
      $region64: #{_lambda_.1} parent=5 // pred_fallthru
        _
    $region6: #{_lambda_.1} parent=1 // loop_footer
      %s22 = sadd.s32 1, %s18
    $region7: #{_lambda_.1} parent=1 // loop_footer_branch
      %17 = sbr.rel target = $region3
    $region8: #{_lambda_.1} parent=1 // loop_exit
      _
    %3898 = vsyncpa [#allocation3], 1
    %s3899 = scalar_lea.sflag [#allocation3], 1
    %3900 = vsyncpa %s3899, 1

</llo_original>
